<compile_context>
chip_gen: v5e
topology: v5e:2x2
jax: 0.10.0
libtpu: 0.0.40
codegen_flags: <defaults>
</compile_context>

<pallas_src>
import functools

import jax
import jax.numpy as jnp
import numpy as np
from jax import lax
from jax.experimental import pallas as pl
from jax.experimental.pallas import tpu as pltpu


# ----------------------------- Pallas kernels ------------------------------

def _ultra_conv_kernel(x_ref, w0_ref, w1_ref, w2_ref, wp_ref, sc_ref, sh_ref,
                       z_ref, psum_ref, pssq_ref, ypad_ref, *,
                       apply_input_act):
    """Fused ultra_conv block for one batch element (channels-last).

    x_ref   : (1, H, W, Cin)      input tile
    w0_ref  : (Cin, t)            conv0 (1x1) weight, stored (in, out)
    w1_ref  : (3, t)              depthwise (3,1) taps, stored (k, channel)
    w2_ref  : (3, t)              depthwise (1,3) taps, stored (k, channel)
    wp_ref  : (t, Cout)           pointwise (1x1) weight, stored (in, out)
    sc_ref  : (1, Cin)            previous-block BN scale  (used iff apply_input_act)
    sh_ref  : (1, Cin)            previous-block BN shift  (used iff apply_input_act)
    z_ref   : (1, H, W, Cout)     pre-BN conv output
    psum_ref: (1, 1, Cout)        partial per-channel sum of z   (for BN stats)
    pssq_ref: (1, 1, Cout)        partial per-channel sum of z^2 (for BN stats)
    ypad_ref: VMEM (H+2, W+2, t)  zero-padded depthwise input scratch
    """
    H = x_ref.shape[1]
    W = x_ref.shape[2]
    cin = x_ref.shape[3]
    t = w0_ref.shape[1]

    x = x_ref[0]                                          # (H, W, Cin)
    if apply_input_act:
        # previous block's BatchNorm (precomputed affine) + ReLU, fused into
        # this block's input path -> saves a full HBM round trip.
        x = jnp.maximum(x * sc_ref[...] + sh_ref[...], 0.0)

    # conv0: 1x1, Cin -> t.  Channel counts are tiny (t = C * 0.25), so use a
    # VPU broadcast-MAC instead of an under-filled MXU matmul.
    w0 = w0_ref[...]                                      # (Cin, t)
    y = x[:, :, 0:1] * w0[0:1, :]                         # (H, W, t)
    for c in range(1, cin):
        y = y + x[:, :, c:c + 1] * w0[c:c + 1, :]

    # zero-padded copy of y (halo of 1 in H and W) in VMEM scratch.
    ypad_ref[...] = jnp.zeros_like(ypad_ref)
    ypad_ref[pl.ds(1, H), pl.ds(1, W), :] = y
    yp = ypad_ref[...]                                    # (H+2, W+2, t)

    # conv1: depthwise (3,1), padding (1,0)  -- valid over H.
    w1 = w1_ref[...]                                      # (3, t)
    v = (w1[0:1, :] * yp[0:H, :, :]
         + w1[1:2, :] * yp[1:H + 1, :, :]
         + w1[2:3, :] * yp[2:H + 2, :, :])                # (H, W+2, t)

    # conv2: depthwise (1,3), padding (0,1)  -- valid over W.
    w2 = w2_ref[...]                                      # (3, t)
    o = (w2[0:1, :] * v[:, 0:W, :]
         + w2[1:2, :] * v[:, 1:W + 1, :]
         + w2[2:3, :] * v[:, 2:W + 2, :])                 # (H, W, t)

    # pointwise: 1x1, t -> Cout (VPU broadcast-MAC, t is tiny).
    wp = wp_ref[...]                                      # (t, Cout)
    z = o[:, :, 0:1] * wp[0:1, :]                         # (H, W, Cout)
    for c in range(1, t):
        z = z + o[:, :, c:c + 1] * wp[c:c + 1, :]

    z_ref[0] = z
    # per-grid-step partial BatchNorm statistics (reduced over H, W); the
    # cross-batch reduction happens outside so the grid can stay "parallel".
    psum_ref[...] = jnp.sum(z, axis=(0, 1), keepdims=True)
    pssq_ref[...] = jnp.sum(z * z, axis=(0, 1), keepdims=True)


def _bn_relu_kernel(z_ref, sc_ref, sh_ref, o_ref):
    # lane-dense elementwise normalize + ReLU on a (TILE_M, W*Cout) view.
    o_ref[...] = jnp.maximum(z_ref[...] * sc_ref[...] + sh_ref[...], 0.0)


# --------------------------- pallas_call wrappers ---------------------------

def ultra_conv_block(x_nhwc, w0, w1, w2, wp, in_scale, in_shift, *,
                     apply_input_act):
    """Fused ultra_conv; returns (z, partial_sum, partial_sumsq)."""
    N, H, W, cin = x_nhwc.shape
    t = w0.shape[1]
    cout = wp.shape[1]
    kernel = functools.partial(_ultra_conv_kernel,
                               apply_input_act=apply_input_act)
    return pl.pallas_call(
        kernel,
        out_shape=(jax.ShapeDtypeStruct((N, H, W, cout), jnp.float32),
                   jax.ShapeDtypeStruct((N, 1, cout), jnp.float32),
                   jax.ShapeDtypeStruct((N, 1, cout), jnp.float32)),
        grid=(N,),
        in_specs=[
            pl.BlockSpec((1, H, W, cin), lambda n: (n, 0, 0, 0)),
            pl.BlockSpec((cin, t), lambda n: (0, 0)),
            pl.BlockSpec((3, t), lambda n: (0, 0)),
            pl.BlockSpec((3, t), lambda n: (0, 0)),
            pl.BlockSpec((t, cout), lambda n: (0, 0)),
            pl.BlockSpec((1, cin), lambda n: (0, 0)),
            pl.BlockSpec((1, cin), lambda n: (0, 0)),
        ],
        out_specs=(
            pl.BlockSpec((1, H, W, cout), lambda n: (n, 0, 0, 0)),
            pl.BlockSpec((1, 1, cout), lambda n: (n, 0, 0)),
            pl.BlockSpec((1, 1, cout), lambda n: (n, 0, 0)),
        ),
        scratch_shapes=[pltpu.VMEM((H + 2, W + 2, t), jnp.float32)],
        compiler_params=pltpu.CompilerParams(
            dimension_semantics=("parallel",)),
    )(x_nhwc, w0, w1, w2, wp, in_scale, in_shift)


def _pick_row_tile(m):
    for cand in (1024, 512, 256, 128, 64, 32, 16, 8):
        if cand <= m and m % cand == 0:
            return cand
    return m


def bn_relu_apply(z2d, scale_row, shift_row):
    """Elementwise BN-affine + ReLU on a (M, L) lane-dense view, tiled over M."""
    M, L = z2d.shape
    tm = _pick_row_tile(M)
    return pl.pallas_call(
        _bn_relu_kernel,
        out_shape=jax.ShapeDtypeStruct((M, L), jnp.float32),
        grid=(M // tm,),
        in_specs=[pl.BlockSpec((tm, L), lambda i: (i, 0)),
                  pl.BlockSpec((1, L), lambda i: (0, 0)),
                  pl.BlockSpec((1, L), lambda i: (0, 0))],
        out_specs=pl.BlockSpec((tm, L), lambda i: (i, 0)),
        compiler_params=pltpu.CompilerParams(
            dimension_semantics=("parallel",)),
    )(z2d, scale_row, shift_row)


# ------------------------------ model forward -------------------------------

def _bn_affine(psum, pssq, gamma, beta, count, eps=1e-5):
    """Turn partial sums into per-channel BN (scale, shift): bn(z)=z*scale+shift."""
    s = jnp.sum(psum, axis=(0, 1))                         # (Cout,)
    ss = jnp.sum(pssq, axis=(0, 1))                        # (Cout,)
    mean = s / count
    var = jnp.maximum(ss / count - mean * mean, 0.0)       # biased variance
    scale = gamma * lax.rsqrt(var + eps)
    shift = beta - mean * scale
    return scale, shift


@jax.jit
def double_conv_forward(x_nchw, p):
    N, cin, H, W = x_nchw.shape
    count = float(N * H * W)
    x = jnp.transpose(x_nchw, (0, 2, 3, 1))                # NCHW -> NHWC

    # block 1: ultra_conv(in_ch -> out_ch); BN stats accumulated in-kernel.
    dummy_sc = jnp.ones((1, cin), jnp.float32)
    dummy_sh = jnp.zeros((1, cin), jnp.float32)
    z1, ps1, pq1 = ultra_conv_block(x, p['w0_1'], p['w1_1'], p['w2_1'],
                                    p['wp_1'], dummy_sc, dummy_sh,
                                    apply_input_act=False)
    sc1, sh1 = _bn_affine(ps1, pq1, p['g1'], p['b1'], count)

    # block 2: BN1+ReLU fused into the input path of the second fused kernel.
    z2, ps2, pq2 = ultra_conv_block(z1, p['w0_2'], p['w1_2'], p['w2_2'],
                                    p['wp_2'], sc1[None, :], sh1[None, :],
                                    apply_input_act=True)
    sc2, sh2 = _bn_affine(ps2, pq2, p['g2'], p['b2'], count)

    # final BN2 + ReLU: lane-dense (N*H, W*Cout) elementwise pass.
    cout = p['wp_2'].shape[1]
    z2f = z2.reshape(N * H, W * cout)
    out = bn_relu_apply(z2f,
                        jnp.tile(sc2, W)[None, :],
                        jnp.tile(sh2, W)[None, :])
    return out.reshape(N, H, W, cout).transpose(0, 3, 1, 2)   # back to NCHW


# ------------------------------- parameters --------------------------------

def init_params(key, in_ch, out_ch):
    t1 = int(in_ch * 0.25)
    t2 = int(out_ch * 0.25)
    ks = jax.random.split(key, 12)

    def rn(k, shape, scale=0.3):
        return scale * jax.random.normal(k, shape, jnp.float32)

    return dict(
        # ultra_conv #1 (in_ch -> out_ch, tmp = t1)
        w0_1=rn(ks[0], (in_ch, t1)),      # conv0 weight[o,i,0,0] stored (i,o)
        w1_1=rn(ks[1], (3, t1)),          # conv1 weight[c,0,k,0] stored (k,c)
        w2_1=rn(ks[2], (3, t1)),          # conv2 weight[c,0,0,k] stored (k,c)
        wp_1=rn(ks[3], (t1, out_ch)),     # pointwise weight stored (i,o)
        g1=1.0 + 0.1 * jax.random.normal(ks[4], (out_ch,), jnp.float32),
        b1=0.1 * jax.random.normal(ks[5], (out_ch,), jnp.float32),
        # ultra_conv #2 (out_ch -> out_ch, tmp = t2)
        w0_2=rn(ks[6], (out_ch, t2)),
        w1_2=rn(ks[7], (3, t2)),
        w2_2=rn(ks[8], (3, t2)),
        wp_2=rn(ks[9], (t2, out_ch)),
        g2=1.0 + 0.1 * jax.random.normal(ks[10], (out_ch,), jnp.float32),
        b2=0.1 * jax.random.normal(ks[11], (out_ch,), jnp.float32),
    )


# ---------------------------- pure-JAX reference ----------------------------

def _ref_block(x, w0, w1, w2, wp, gamma, beta):
    N, Cin, H, W = x.shape
    hi = lax.Precision.HIGHEST
    y = jnp.einsum('nchw,ct->nthw', x, w0, precision=hi)
    yp = jnp.pad(y, ((0, 0), (0, 0), (1, 1), (0, 0)))
    wv = w1[:, None, :, None, None]
    v = wv[0] * yp[:, :, 0:H, :] + wv[1] * yp[:, :, 1:H + 1, :] + wv[2] * yp[:, :, 2:H + 2, :]
    vp = jnp.pad(v, ((0, 0), (0, 0), (0, 0), (1, 1)))
    wh = w2[:, None, :, None, None]
    hcv = wh[0] * vp[..., 0:W] + wh[1] * vp[..., 1:W + 1] + wh[2] * vp[..., 2:W + 2]
    z = jnp.einsum('nthw,to->nohw', hcv, wp, precision=hi)
    mean = z.mean(axis=(0, 2, 3), keepdims=True)
    var = ((z - mean) ** 2).mean(axis=(0, 2, 3), keepdims=True)
    zn = (z - mean) * lax.rsqrt(var + 1e-5)
    zn = zn * gamma[None, :, None, None] + beta[None, :, None, None]
    return jnp.maximum(zn, 0.0)


def double_conv_reference(x, p):
    h = _ref_block(x, p['w0_1'], p['w1_1'], p['w2_1'], p['wp_1'], p['g1'], p['b1'])
    h = _ref_block(h, p['w0_2'], p['w1_2'], p['w2_2'], p['wp_2'], p['g2'], p['b2'])
    return h


# ----------------------------------- main -----------------------------------

if __name__ == "__main__":
    key = jax.random.PRNGKey(0)
    k_x, k_p = jax.random.split(key)

    N, in_ch, out_ch, H, W = 2, 4, 8, 16, 16
    x = jax.random.normal(k_x, (N, in_ch, H, W), jnp.float32)
    params = init_params(k_p, in_ch, out_ch)

    out = jax.block_until_ready(double_conv_forward(x, params))
    assert out.shape == (N, out_ch, H, W), out.shape

    ref = jax.block_until_ready(double_conv_reference(x, params))
    if not np.allclose(np.asarray(out), np.asarray(ref), rtol=1e-2, atol=1e-2):
        raise AssertionError("Pallas output does not match pure-JAX reference")

    print("KERNEL_OK")
</pallas_src>

<mosaic_0001>
module attributes {stable_mosaic.version = 11 : i64} {
  func.func @_ultra_conv_kernel(%arg0: i32, %arg1: memref<1x16x16x8xf32, #tpu.memory_space<vmem>>, %arg2: memref<8x2xf32, #tpu.memory_space<vmem>>, %arg3: memref<3x2xf32, #tpu.memory_space<vmem>>, %arg4: memref<3x2xf32, #tpu.memory_space<vmem>>, %arg5: memref<2x8xf32, #tpu.memory_space<vmem>>, %arg6: memref<1x8xf32, #tpu.memory_space<vmem>>, %arg7: memref<1x8xf32, #tpu.memory_space<vmem>>, %arg8: memref<1x16x16x8xf32, #tpu.memory_space<vmem>>, %arg9: memref<1x1x8xf32, #tpu.memory_space<vmem>>, %arg10: memref<1x1x8xf32, #tpu.memory_space<vmem>>, %arg11: memref<18x18x2xf32, #tpu.memory_space<vmem>>) attributes {dimension_semantics = [#tpu.dimension_semantics<parallel>], iteration_bounds = array<i64: 2>, scalar_prefetch = 0 : i64, scratch_operands = 1 : i64, tpu.core_type = #tpu.core_type<tc>, window_params = [{transform_indices = @transform_0, window_bounds = array<i64: 1, 16, 16, 8>}, {pipeline_mode = #tpu.pipeline_mode<synchronous>, transform_indices = @transform_1, window_bounds = array<i64: 8, 2>}, {pipeline_mode = #tpu.pipeline_mode<synchronous>, transform_indices = @transform_2, window_bounds = array<i64: 3, 2>}, {pipeline_mode = #tpu.pipeline_mode<synchronous>, transform_indices = @transform_3, window_bounds = array<i64: 3, 2>}, {pipeline_mode = #tpu.pipeline_mode<synchronous>, transform_indices = @transform_4, window_bounds = array<i64: 2, 8>}, {pipeline_mode = #tpu.pipeline_mode<synchronous>, transform_indices = @transform_5, window_bounds = array<i64: 1, 8>}, {pipeline_mode = #tpu.pipeline_mode<synchronous>, transform_indices = @transform_6, window_bounds = array<i64: 1, 8>}, {transform_indices = @transform_7, window_bounds = array<i64: 1, 16, 16, 8>}, {transform_indices = @transform_8, window_bounds = array<i64: 1, 1, 8>}, {transform_indices = @transform_9, window_bounds = array<i64: 1, 1, 8>}]} {
    %c0 = arith.constant 0 : index
    %c0_0 = arith.constant 0 : index
    %c0_1 = arith.constant 0 : index
    %c0_2 = arith.constant 0 : index
    %0 = vector.load %arg1[%c0, %c0_0, %c0_1, %c0_2] : memref<1x16x16x8xf32, #tpu.memory_space<vmem>>, vector<1x16x16x8xf32>
    %1 = vector.shape_cast %0 : vector<1x16x16x8xf32> to vector<16x16x8xf32>
    %c0_3 = arith.constant 0 : index
    %c0_4 = arith.constant 0 : index
    %2 = vector.load %arg6[%c0_3, %c0_4] : memref<1x8xf32, #tpu.memory_space<vmem>>, vector<1x8xf32>
    %3 = vector.shape_cast %2 : vector<1x8xf32> to vector<1x1x8xf32>
    %4 = vector.broadcast %3 : vector<1x1x8xf32> to vector<16x16x8xf32>
    %5 = arith.mulf %1, %4 : vector<16x16x8xf32>
    %c0_5 = arith.constant 0 : index
    %c0_6 = arith.constant 0 : index
    %6 = vector.load %arg7[%c0_5, %c0_6] : memref<1x8xf32, #tpu.memory_space<vmem>>, vector<1x8xf32>
    %7 = vector.shape_cast %6 : vector<1x8xf32> to vector<1x1x8xf32>
    %8 = vector.broadcast %7 : vector<1x1x8xf32> to vector<16x16x8xf32>
    %9 = arith.addf %5, %8 : vector<16x16x8xf32>
    %cst = arith.constant 0.000000e+00 : f32
    %10 = vector.broadcast %cst : f32 to vector<16x16x8xf32>
    %11 = arith.maximumf %9, %10 : vector<16x16x8xf32>
    %c0_7 = arith.constant 0 : index
    %c0_8 = arith.constant 0 : index
    %12 = vector.load %arg2[%c0_7, %c0_8] : memref<8x2xf32, #tpu.memory_space<vmem>>, vector<8x2xf32>
    %13 = vector.extract_strided_slice %11 {offsets = [0, 0, 0], sizes = [16, 16, 1], strides = [1, 1, 1]} : vector<16x16x8xf32> to vector<16x16x1xf32>
    %14 = vector.extract_strided_slice %12 {offsets = [0, 0], sizes = [1, 2], strides = [1, 1]} : vector<8x2xf32> to vector<1x2xf32>
    %15 = vector.shape_cast %14 : vector<1x2xf32> to vector<1x1x2xf32>
    %16 = vector.broadcast %13 : vector<16x16x1xf32> to vector<16x16x2xf32>
    %17 = vector.broadcast %15 : vector<1x1x2xf32> to vector<16x16x2xf32>
    %18 = arith.mulf %16, %17 : vector<16x16x2xf32>
    %19 = vector.extract_strided_slice %11 {offsets = [0, 0, 1], sizes = [16, 16, 1], strides = [1, 1, 1]} : vector<16x16x8xf32> to vector<16x16x1xf32>
    %20 = vector.extract_strided_slice %12 {offsets = [1, 0], sizes = [1, 2], strides = [1, 1]} : vector<8x2xf32> to vector<1x2xf32>
    %21 = vector.shape_cast %20 : vector<1x2xf32> to vector<1x1x2xf32>
    %22 = vector.broadcast %19 : vector<16x16x1xf32> to vector<16x16x2xf32>
    %23 = vector.broadcast %21 : vector<1x1x2xf32> to vector<16x16x2xf32>
    %24 = arith.mulf %22, %23 : vector<16x16x2xf32>
    %25 = arith.addf %18, %24 : vector<16x16x2xf32>
    %26 = vector.extract_strided_slice %11 {offsets = [0, 0, 2], sizes = [16, 16, 1], strides = [1, 1, 1]} : vector<16x16x8xf32> to vector<16x16x1xf32>
    %27 = vector.extract_strided_slice %12 {offsets = [2, 0], sizes = [1, 2], strides = [1, 1]} : vector<8x2xf32> to vector<1x2xf32>
    %28 = vector.shape_cast %27 : vector<1x2xf32> to vector<1x1x2xf32>
    %29 = vector.broadcast %26 : vector<16x16x1xf32> to vector<16x16x2xf32>
    %30 = vector.broadcast %28 : vector<1x1x2xf32> to vector<16x16x2xf32>
    %31 = arith.mulf %29, %30 : vector<16x16x2xf32>
    %32 = arith.addf %25, %31 : vector<16x16x2xf32>
    %33 = vector.extract_strided_slice %11 {offsets = [0, 0, 3], sizes = [16, 16, 1], strides = [1, 1, 1]} : vector<16x16x8xf32> to vector<16x16x1xf32>
    %34 = vector.extract_strided_slice %12 {offsets = [3, 0], sizes = [1, 2], strides = [1, 1]} : vector<8x2xf32> to vector<1x2xf32>
    %35 = vector.shape_cast %34 : vector<1x2xf32> to vector<1x1x2xf32>
    %36 = vector.broadcast %33 : vector<16x16x1xf32> to vector<16x16x2xf32>
    %37 = vector.broadcast %35 : vector<1x1x2xf32> to vector<16x16x2xf32>
    %38 = arith.mulf %36, %37 : vector<16x16x2xf32>
    %39 = arith.addf %32, %38 : vector<16x16x2xf32>
    %40 = vector.extract_strided_slice %11 {offsets = [0, 0, 4], sizes = [16, 16, 1], strides = [1, 1, 1]} : vector<16x16x8xf32> to vector<16x16x1xf32>
    %41 = vector.extract_strided_slice %12 {offsets = [4, 0], sizes = [1, 2], strides = [1, 1]} : vector<8x2xf32> to vector<1x2xf32>
    %42 = vector.shape_cast %41 : vector<1x2xf32> to vector<1x1x2xf32>
    %43 = vector.broadcast %40 : vector<16x16x1xf32> to vector<16x16x2xf32>
    %44 = vector.broadcast %42 : vector<1x1x2xf32> to vector<16x16x2xf32>
    %45 = arith.mulf %43, %44 : vector<16x16x2xf32>
    %46 = arith.addf %39, %45 : vector<16x16x2xf32>
    %47 = vector.extract_strided_slice %11 {offsets = [0, 0, 5], sizes = [16, 16, 1], strides = [1, 1, 1]} : vector<16x16x8xf32> to vector<16x16x1xf32>
    %48 = vector.extract_strided_slice %12 {offsets = [5, 0], sizes = [1, 2], strides = [1, 1]} : vector<8x2xf32> to vector<1x2xf32>
    %49 = vector.shape_cast %48 : vector<1x2xf32> to vector<1x1x2xf32>
    %50 = vector.broadcast %47 : vector<16x16x1xf32> to vector<16x16x2xf32>
    %51 = vector.broadcast %49 : vector<1x1x2xf32> to vector<16x16x2xf32>
    %52 = arith.mulf %50, %51 : vector<16x16x2xf32>
    %53 = arith.addf %46, %52 : vector<16x16x2xf32>
    %54 = vector.extract_strided_slice %11 {offsets = [0, 0, 6], sizes = [16, 16, 1], strides = [1, 1, 1]} : vector<16x16x8xf32> to vector<16x16x1xf32>
    %55 = vector.extract_strided_slice %12 {offsets = [6, 0], sizes = [1, 2], strides = [1, 1]} : vector<8x2xf32> to vector<1x2xf32>
    %56 = vector.shape_cast %55 : vector<1x2xf32> to vector<1x1x2xf32>
    %57 = vector.broadcast %54 : vector<16x16x1xf32> to vector<16x16x2xf32>
    %58 = vector.broadcast %56 : vector<1x1x2xf32> to vector<16x16x2xf32>
    %59 = arith.mulf %57, %58 : vector<16x16x2xf32>
    %60 = arith.addf %53, %59 : vector<16x16x2xf32>
    %61 = vector.extract_strided_slice %11 {offsets = [0, 0, 7], sizes = [16, 16, 1], strides = [1, 1, 1]} : vector<16x16x8xf32> to vector<16x16x1xf32>
    %62 = vector.extract_strided_slice %12 {offsets = [7, 0], sizes = [1, 2], strides = [1, 1]} : vector<8x2xf32> to vector<1x2xf32>
    %63 = vector.shape_cast %62 : vector<1x2xf32> to vector<1x1x2xf32>
    %64 = vector.broadcast %61 : vector<16x16x1xf32> to vector<16x16x2xf32>
    %65 = vector.broadcast %63 : vector<1x1x2xf32> to vector<16x16x2xf32>
    %66 = arith.mulf %64, %65 : vector<16x16x2xf32>
    %67 = arith.addf %60, %66 : vector<16x16x2xf32>
    %cst_9 = arith.constant 0.000000e+00 : f32
    %68 = vector.broadcast %cst_9 : f32 to vector<18x18x2xf32>
    %c0_10 = arith.constant 0 : index
    %c0_11 = arith.constant 0 : index
    %c0_12 = arith.constant 0 : index
    %69 = vector.load %arg11[%c0_10, %c0_11, %c0_12] : memref<18x18x2xf32, #tpu.memory_space<vmem>>, vector<18x18x2xf32>
    tpu.vector_store %arg11[%c0_10, %c0_11, %c0_12], %68 {strides = array<i32>} : memref<18x18x2xf32, #tpu.memory_space<vmem>>, vector<18x18x2xf32>,
    %c1 = arith.constant 1 : index
    %c1_13 = arith.constant 1 : index
    %c0_14 = arith.constant 0 : index
    %70 = vector.load %arg11[%c1, %c1_13, %c0_14] : memref<18x18x2xf32, #tpu.memory_space<vmem>>, vector<16x16x2xf32>
    tpu.vector_store %arg11[%c1, %c1_13, %c0_14], %67 {strides = array<i32>} : memref<18x18x2xf32, #tpu.memory_space<vmem>>, vector<16x16x2xf32>,
    %c0_15 = arith.constant 0 : index
    %c0_16 = arith.constant 0 : index
    %c0_17 = arith.constant 0 : index
    %71 = vector.load %arg11[%c0_15, %c0_16, %c0_17] : memref<18x18x2xf32, #tpu.memory_space<vmem>>, vector<18x18x2xf32>
    %c0_18 = arith.constant 0 : index
    %c0_19 = arith.constant 0 : index
    %72 = vector.load %arg3[%c0_18, %c0_19] : memref<3x2xf32, #tpu.memory_space<vmem>>, vector<3x2xf32>
    %73 = vector.extract_strided_slice %72 {offsets = [0, 0], sizes = [1, 2], strides = [1, 1]} : vector<3x2xf32> to vector<1x2xf32>
    %74 = vector.extract_strided_slice %71 {offsets = [0, 0, 0], sizes = [16, 18, 2], strides = [1, 1, 1]} : vector<18x18x2xf32> to vector<16x18x2xf32>
    %75 = vector.shape_cast %73 : vector<1x2xf32> to vector<1x1x2xf32>
    %76 = vector.broadcast %75 : vector<1x1x2xf32> to vector<16x18x2xf32>
    %77 = arith.mulf %76, %74 : vector<16x18x2xf32>
    %78 = vector.extract_strided_slice %72 {offsets = [1, 0], sizes = [1, 2], strides = [1, 1]} : vector<3x2xf32> to vector<1x2xf32>
    %79 = vector.extract_strided_slice %71 {offsets = [1, 0, 0], sizes = [16, 18, 2], strides = [1, 1, 1]} : vector<18x18x2xf32> to vector<16x18x2xf32>
    %80 = vector.shape_cast %78 : vector<1x2xf32> to vector<1x1x2xf32>
    %81 = vector.broadcast %80 : vector<1x1x2xf32> to vector<16x18x2xf32>
    %82 = arith.mulf %81, %79 : vector<16x18x2xf32>
    %83 = arith.addf %77, %82 : vector<16x18x2xf32>
    %84 = vector.extract_strided_slice %72 {offsets = [2, 0], sizes = [1, 2], strides = [1, 1]} : vector<3x2xf32> to vector<1x2xf32>
    %85 = vector.extract_strided_slice %71 {offsets = [2, 0, 0], sizes = [16, 18, 2], strides = [1, 1, 1]} : vector<18x18x2xf32> to vector<16x18x2xf32>
    %86 = vector.shape_cast %84 : vector<1x2xf32> to vector<1x1x2xf32>
    %87 = vector.broadcast %86 : vector<1x1x2xf32> to vector<16x18x2xf32>
    %88 = arith.mulf %87, %85 : vector<16x18x2xf32>
    %89 = arith.addf %83, %88 : vector<16x18x2xf32>
    %c0_20 = arith.constant 0 : index
    %c0_21 = arith.constant 0 : index
    %90 = vector.load %arg4[%c0_20, %c0_21] : memref<3x2xf32, #tpu.memory_space<vmem>>, vector<3x2xf32>
    %91 = vector.extract_strided_slice %90 {offsets = [0, 0], sizes = [1, 2], strides = [1, 1]} : vector<3x2xf32> to vector<1x2xf32>
    %92 = vector.extract_strided_slice %89 {offsets = [0, 0, 0], sizes = [16, 16, 2], strides = [1, 1, 1]} : vector<16x18x2xf32> to vector<16x16x2xf32>
    %93 = vector.shape_cast %91 : vector<1x2xf32> to vector<1x1x2xf32>
    %94 = vector.broadcast %93 : vector<1x1x2xf32> to vector<16x16x2xf32>
    %95 = arith.mulf %94, %92 : vector<16x16x2xf32>
    %96 = vector.extract_strided_slice %90 {offsets = [1, 0], sizes = [1, 2], strides = [1, 1]} : vector<3x2xf32> to vector<1x2xf32>
    %97 = vector.extract_strided_slice %89 {offsets = [0, 1, 0], sizes = [16, 16, 2], strides = [1, 1, 1]} : vector<16x18x2xf32> to vector<16x16x2xf32>
    %98 = vector.shape_cast %96 : vector<1x2xf32> to vector<1x1x2xf32>
    %99 = vector.broadcast %98 : vector<1x1x2xf32> to vector<16x16x2xf32>
    %100 = arith.mulf %99, %97 : vector<16x16x2xf32>
    %101 = arith.addf %95, %100 : vector<16x16x2xf32>
    %102 = vector.extract_strided_slice %90 {offsets = [2, 0], sizes = [1, 2], strides = [1, 1]} : vector<3x2xf32> to vector<1x2xf32>
    %103 = vector.extract_strided_slice %89 {offsets = [0, 2, 0], sizes = [16, 16, 2], strides = [1, 1, 1]} : vector<16x18x2xf32> to vector<16x16x2xf32>
    %104 = vector.shape_cast %102 : vector<1x2xf32> to vector<1x1x2xf32>
    %105 = vector.broadcast %104 : vector<1x1x2xf32> to vector<16x16x2xf32>
    %106 = arith.mulf %105, %103 : vector<16x16x2xf32>
    %107 = arith.addf %101, %106 : vector<16x16x2xf32>
    %c0_22 = arith.constant 0 : index
    %c0_23 = arith.constant 0 : index
    %108 = vector.load %arg5[%c0_22, %c0_23] : memref<2x8xf32, #tpu.memory_space<vmem>>, vector<2x8xf32>
    %109 = vector.extract_strided_slice %107 {offsets = [0, 0, 0], sizes = [16, 16, 1], strides = [1, 1, 1]} : vector<16x16x2xf32> to vector<16x16x1xf32>
    %110 = vector.extract_strided_slice %108 {offsets = [0, 0], sizes = [1, 8], strides = [1, 1]} : vector<2x8xf32> to vector<1x8xf32>
    %111 = vector.shape_cast %110 : vector<1x8xf32> to vector<1x1x8xf32>
    %112 = vector.broadcast %109 : vector<16x16x1xf32> to vector<16x16x8xf32>
    %113 = vector.broadcast %111 : vector<1x1x8xf32> to vector<16x16x8xf32>
    %114 = arith.mulf %112, %113 : vector<16x16x8xf32>
    %115 = vector.extract_strided_slice %107 {offsets = [0, 0, 1], sizes = [16, 16, 1], strides = [1, 1, 1]} : vector<16x16x2xf32> to vector<16x16x1xf32>
    %116 = vector.extract_strided_slice %108 {offsets = [1, 0], sizes = [1, 8], strides = [1, 1]} : vector<2x8xf32> to vector<1x8xf32>
    %117 = vector.shape_cast %116 : vector<1x8xf32> to vector<1x1x8xf32>
    %118 = vector.broadcast %115 : vector<16x16x1xf32> to vector<16x16x8xf32>
    %119 = vector.broadcast %117 : vector<1x1x8xf32> to vector<16x16x8xf32>
    %120 = arith.mulf %118, %119 : vector<16x16x8xf32>
    %121 = arith.addf %114, %120 : vector<16x16x8xf32>
    %c0_24 = arith.constant 0 : index
    %c0_25 = arith.constant 0 : index
    %c0_26 = arith.constant 0 : index
    %c0_27 = arith.constant 0 : index
    %122 = vector.load %arg8[%c0_24, %c0_25, %c0_26, %c0_27] : memref<1x16x16x8xf32, #tpu.memory_space<vmem>>, vector<1x16x16x8xf32>
    %123 = vector.shape_cast %122 : vector<1x16x16x8xf32> to vector<16x16x8xf32>
    %124 = vector.shape_cast %121 : vector<16x16x8xf32> to vector<1x16x16x8xf32>
    tpu.vector_store %arg8[%c0_24, %c0_25, %c0_26, %c0_27], %124 {strides = array<i32>} : memref<1x16x16x8xf32, #tpu.memory_space<vmem>>, vector<1x16x16x8xf32>,
    %cst_28 = arith.constant dense<0.000000e+00> : vector<8xf32>
    %125 = vector.multi_reduction <add>, %121, %cst_28 [0, 1] : vector<16x16x8xf32> to vector<8xf32>
    %126 = vector.shape_cast %125 : vector<8xf32> to vector<1x1x8xf32>
    %c0_29 = arith.constant 0 : index
    %c0_30 = arith.constant 0 : index
    %c0_31 = arith.constant 0 : index
    %127 = vector.load %arg9[%c0_29, %c0_30, %c0_31] : memref<1x1x8xf32, #tpu.memory_space<vmem>>, vector<1x1x8xf32>
    tpu.vector_store %arg9[%c0_29, %c0_30, %c0_31], %126 {strides = array<i32>} : memref<1x1x8xf32, #tpu.memory_space<vmem>>, vector<1x1x8xf32>,
    %128 = arith.mulf %121, %121 : vector<16x16x8xf32>
    %cst_32 = arith.constant dense<0.000000e+00> : vector<8xf32>
    %129 = vector.multi_reduction <add>, %128, %cst_32 [0, 1] : vector<16x16x8xf32> to vector<8xf32>
    %130 = vector.shape_cast %129 : vector<8xf32> to vector<1x1x8xf32>
    %c0_33 = arith.constant 0 : index
    %c0_34 = arith.constant 0 : index
    %c0_35 = arith.constant 0 : index
    %131 = vector.load %arg10[%c0_33, %c0_34, %c0_35] : memref<1x1x8xf32, #tpu.memory_space<vmem>>, vector<1x1x8xf32>
    tpu.vector_store %arg10[%c0_33, %c0_34, %c0_35], %130 {strides = array<i32>} : memref<1x1x8xf32, #tpu.memory_space<vmem>>, vector<1x1x8xf32>,
    return
  }
  func.func @transform_0(%arg0: i32) -> (i32, i32, i32, i32) {
    %c0_i32 = arith.constant 0 : i32
    %c0_i32_0 = arith.constant 0 : i32
    %c0_i32_1 = arith.constant 0 : i32
    %c0_i32_2 = arith.constant 0 : i32
    return %arg0, %c0_i32, %c0_i32_0, %c0_i32_1 : i32, i32, i32, i32
  }
  func.func @transform_1(%arg0: i32) -> (i32, i32) {
    %c0_i32 = arith.constant 0 : i32
    %c0_i32_0 = arith.constant 0 : i32
    %c0_i32_1 = arith.constant 0 : i32
    return %c0_i32, %c0_i32_0 : i32, i32
  }
  func.func @transform_2(%arg0: i32) -> (i32, i32) {
    %c0_i32 = arith.constant 0 : i32
    %c0_i32_0 = arith.constant 0 : i32
    %c0_i32_1 = arith.constant 0 : i32
    return %c0_i32, %c0_i32_0 : i32, i32
  }
  func.func @transform_3(%arg0: i32) -> (i32, i32) {
    %c0_i32 = arith.constant 0 : i32
    %c0_i32_0 = arith.constant 0 : i32
    %c0_i32_1 = arith.constant 0 : i32
    return %c0_i32, %c0_i32_0 : i32, i32
  }
  func.func @transform_4(%arg0: i32) -> (i32, i32) {
    %c0_i32 = arith.constant 0 : i32
    %c0_i32_0 = arith.constant 0 : i32
    %c0_i32_1 = arith.constant 0 : i32
    return %c0_i32, %c0_i32_0 : i32, i32
  }
  func.func @transform_5(%arg0: i32) -> (i32, i32) {
    %c0_i32 = arith.constant 0 : i32
    %c0_i32_0 = arith.constant 0 : i32
    %c0_i32_1 = arith.constant 0 : i32
    return %c0_i32, %c0_i32_0 : i32, i32
  }
  func.func @transform_6(%arg0: i32) -> (i32, i32) {
    %c0_i32 = arith.constant 0 : i32
    %c0_i32_0 = arith.constant 0 : i32
    %c0_i32_1 = arith.constant 0 : i32
    return %c0_i32, %c0_i32_0 : i32, i32
  }
  func.func @transform_7(%arg0: i32) -> (i32, i32, i32, i32) {
    %c0_i32 = arith.constant 0 : i32
    %c0_i32_0 = arith.constant 0 : i32
    %c0_i32_1 = arith.constant 0 : i32
    %c0_i32_2 = arith.constant 0 : i32
    return %arg0, %c0_i32, %c0_i32_0, %c0_i32_1 : i32, i32, i32, i32
  }
  func.func @transform_8(%arg0: i32) -> (i32, i32, i32) {
    %c0_i32 = arith.constant 0 : i32
    %c0_i32_0 = arith.constant 0 : i32
    %c0_i32_1 = arith.constant 0 : i32
    return %arg0, %c0_i32, %c0_i32_0 : i32, i32, i32
  }
  func.func @transform_9(%arg0: i32) -> (i32, i32, i32) {
    %c0_i32 = arith.constant 0 : i32
    %c0_i32_0 = arith.constant 0 : i32
    %c0_i32_1 = arith.constant 0 : i32
    return %arg0, %c0_i32, %c0_i32_0 : i32, i32, i32
  }
}

module attributes {stable_mosaic.version = 11 : i64} {
  func.func @_ultra_conv_kernel(%arg0: i32, %arg1: memref<1x16x16x4xf32, #tpu.memory_space<vmem>>, %arg2: memref<4x1xf32, #tpu.memory_space<vmem>>, %arg3: memref<3x1xf32, #tpu.memory_space<vmem>>, %arg4: memref<3x1xf32, #tpu.memory_space<vmem>>, %arg5: memref<1x8xf32, #tpu.memory_space<vmem>>, %arg6: memref<1x4xf32, #tpu.memory_space<vmem>>, %arg7: memref<1x4xf32, #tpu.memory_space<vmem>>, %arg8: memref<1x16x16x8xf32, #tpu.memory_space<vmem>>, %arg9: memref<1x1x8xf32, #tpu.memory_space<vmem>>, %arg10: memref<1x1x8xf32, #tpu.memory_space<vmem>>, %arg11: memref<18x18x1xf32, #tpu.memory_space<vmem>>) attributes {dimension_semantics = [#tpu.dimension_semantics<parallel>], iteration_bounds = array<i64: 2>, scalar_prefetch = 0 : i64, scratch_operands = 1 : i64, tpu.core_type = #tpu.core_type<tc>, window_params = [{transform_indices = @transform_0, window_bounds = array<i64: 1, 16, 16, 4>}, {pipeline_mode = #tpu.pipeline_mode<synchronous>, transform_indices = @transform_1, window_bounds = array<i64: 4, 1>}, {pipeline_mode = #tpu.pipeline_mode<synchronous>, transform_indices = @transform_2, window_bounds = array<i64: 3, 1>}, {pipeline_mode = #tpu.pipeline_mode<synchronous>, transform_indices = @transform_3, window_bounds = array<i64: 3, 1>}, {pipeline_mode = #tpu.pipeline_mode<synchronous>, transform_indices = @transform_4, window_bounds = array<i64: 1, 8>}, {pipeline_mode = #tpu.pipeline_mode<synchronous>, transform_indices = @transform_5, window_bounds = array<i64: 1, 4>}, {pipeline_mode = #tpu.pipeline_mode<synchronous>, transform_indices = @transform_6, window_bounds = array<i64: 1, 4>}, {transform_indices = @transform_7, window_bounds = array<i64: 1, 16, 16, 8>}, {transform_indices = @transform_8, window_bounds = array<i64: 1, 1, 8>}, {transform_indices = @transform_9, window_bounds = array<i64: 1, 1, 8>}]} {
    %c0 = arith.constant 0 : index
    %c0_0 = arith.constant 0 : index
    %c0_1 = arith.constant 0 : index
    %c0_2 = arith.constant 0 : index
    %0 = vector.load %arg1[%c0, %c0_0, %c0_1, %c0_2] : memref<1x16x16x4xf32, #tpu.memory_space<vmem>>, vector<1x16x16x4xf32>
    %1 = vector.shape_cast %0 : vector<1x16x16x4xf32> to vector<16x16x4xf32>
    %c0_3 = arith.constant 0 : index
    %c0_4 = arith.constant 0 : index
    %2 = vector.load %arg2[%c0_3, %c0_4] : memref<4x1xf32, #tpu.memory_space<vmem>>, vector<4x1xf32>
    %3 = vector.extract_strided_slice %1 {offsets = [0, 0, 0], sizes = [16, 16, 1], strides = [1, 1, 1]} : vector<16x16x4xf32> to vector<16x16x1xf32>
    %4 = vector.extract_strided_slice %2 {offsets = [0, 0], sizes = [1, 1], strides = [1, 1]} : vector<4x1xf32> to vector<1x1xf32>
    %5 = vector.shape_cast %4 : vector<1x1xf32> to vector<1x1x1xf32>
    %6 = vector.broadcast %5 : vector<1x1x1xf32> to vector<16x16x1xf32>
    %7 = arith.mulf %3, %6 : vector<16x16x1xf32>
    %8 = vector.extract_strided_slice %1 {offsets = [0, 0, 1], sizes = [16, 16, 1], strides = [1, 1, 1]} : vector<16x16x4xf32> to vector<16x16x1xf32>
    %9 = vector.extract_strided_slice %2 {offsets = [1, 0], sizes = [1, 1], strides = [1, 1]} : vector<4x1xf32> to vector<1x1xf32>
    %10 = vector.shape_cast %9 : vector<1x1xf32> to vector<1x1x1xf32>
    %11 = vector.broadcast %10 : vector<1x1x1xf32> to vector<16x16x1xf32>
    %12 = arith.mulf %8, %11 : vector<16x16x1xf32>
    %13 = arith.addf %7, %12 : vector<16x16x1xf32>
    %14 = vector.extract_strided_slice %1 {offsets = [0, 0, 2], sizes = [16, 16, 1], strides = [1, 1, 1]} : vector<16x16x4xf32> to vector<16x16x1xf32>
    %15 = vector.extract_strided_slice %2 {offsets = [2, 0], sizes = [1, 1], strides = [1, 1]} : vector<4x1xf32> to vector<1x1xf32>
    %16 = vector.shape_cast %15 : vector<1x1xf32> to vector<1x1x1xf32>
    %17 = vector.broadcast %16 : vector<1x1x1xf32> to vector<16x16x1xf32>
    %18 = arith.mulf %14, %17 : vector<16x16x1xf32>
    %19 = arith.addf %13, %18 : vector<16x16x1xf32>
    %20 = vector.extract_strided_slice %1 {offsets = [0, 0, 3], sizes = [16, 16, 1], strides = [1, 1, 1]} : vector<16x16x4xf32> to vector<16x16x1xf32>
    %21 = vector.extract_strided_slice %2 {offsets = [3, 0], sizes = [1, 1], strides = [1, 1]} : vector<4x1xf32> to vector<1x1xf32>
    %22 = vector.shape_cast %21 : vector<1x1xf32> to vector<1x1x1xf32>
    %23 = vector.broadcast %22 : vector<1x1x1xf32> to vector<16x16x1xf32>
    %24 = arith.mulf %20, %23 : vector<16x16x1xf32>
    %25 = arith.addf %19, %24 : vector<16x16x1xf32>
    %cst = arith.constant 0.000000e+00 : f32
    %26 = vector.broadcast %cst : f32 to vector<18x18x1xf32>
    %c0_5 = arith.constant 0 : index
    %c0_6 = arith.constant 0 : index
    %c0_7 = arith.constant 0 : index
    %27 = vector.load %arg11[%c0_5, %c0_6, %c0_7] : memref<18x18x1xf32, #tpu.memory_space<vmem>>, vector<18x18x1xf32>
    tpu.vector_store %arg11[%c0_5, %c0_6, %c0_7], %26 {strides = array<i32>} : memref<18x18x1xf32, #tpu.memory_space<vmem>>, vector<18x18x1xf32>,
    %c1 = arith.constant 1 : index
    %c1_8 = arith.constant 1 : index
    %c0_9 = arith.constant 0 : index
    %28 = vector.load %arg11[%c1, %c1_8, %c0_9] : memref<18x18x1xf32, #tpu.memory_space<vmem>>, vector<16x16x1xf32>
    tpu.vector_store %arg11[%c1, %c1_8, %c0_9], %25 {strides = array<i32>} : memref<18x18x1xf32, #tpu.memory_space<vmem>>, vector<16x16x1xf32>,
    %c0_10 = arith.constant 0 : index
    %c0_11 = arith.constant 0 : index
    %c0_12 = arith.constant 0 : index
    %29 = vector.load %arg11[%c0_10, %c0_11, %c0_12] : memref<18x18x1xf32, #tpu.memory_space<vmem>>, vector<18x18x1xf32>
    %c0_13 = arith.constant 0 : index
    %c0_14 = arith.constant 0 : index
    %30 = vector.load %arg3[%c0_13, %c0_14] : memref<3x1xf32, #tpu.memory_space<vmem>>, vector<3x1xf32>
    %31 = vector.extract_strided_slice %30 {offsets = [0, 0], sizes = [1, 1], strides = [1, 1]} : vector<3x1xf32> to vector<1x1xf32>
    %32 = vector.extract_strided_slice %29 {offsets = [0, 0, 0], sizes = [16, 18, 1], strides = [1, 1, 1]} : vector<18x18x1xf32> to vector<16x18x1xf32>
    %33 = vector.shape_cast %31 : vector<1x1xf32> to vector<1x1x1xf32>
    %34 = vector.broadcast %33 : vector<1x1x1xf32> to vector<16x18x1xf32>
    %35 = arith.mulf %34, %32 : vector<16x18x1xf32>
    %36 = vector.extract_strided_slice %30 {offsets = [1, 0], sizes = [1, 1], strides = [1, 1]} : vector<3x1xf32> to vector<1x1xf32>
    %37 = vector.extract_strided_slice %29 {offsets = [1, 0, 0], sizes = [16, 18, 1], strides = [1, 1, 1]} : vector<18x18x1xf32> to vector<16x18x1xf32>
    %38 = vector.shape_cast %36 : vector<1x1xf32> to vector<1x1x1xf32>
    %39 = vector.broadcast %38 : vector<1x1x1xf32> to vector<16x18x1xf32>
    %40 = arith.mulf %39, %37 : vector<16x18x1xf32>
    %41 = arith.addf %35, %40 : vector<16x18x1xf32>
    %42 = vector.extract_strided_slice %30 {offsets = [2, 0], sizes = [1, 1], strides = [1, 1]} : vector<3x1xf32> to vector<1x1xf32>
    %43 = vector.extract_strided_slice %29 {offsets = [2, 0, 0], sizes = [16, 18, 1], strides = [1, 1, 1]} : vector<18x18x1xf32> to vector<16x18x1xf32>
    %44 = vector.shape_cast %42 : vector<1x1xf32> to vector<1x1x1xf32>
    %45 = vector.broadcast %44 : vector<1x1x1xf32> to vector<16x18x1xf32>
    %46 = arith.mulf %45, %43 : vector<16x18x1xf32>
    %47 = arith.addf %41, %46 : vector<16x18x1xf32>
    %c0_15 = arith.constant 0 : index
    %c0_16 = arith.constant 0 : index
    %48 = vector.load %arg4[%c0_15, %c0_16] : memref<3x1xf32, #tpu.memory_space<vmem>>, vector<3x1xf32>
    %49 = vector.extract_strided_slice %48 {offsets = [0, 0], sizes = [1, 1], strides = [1, 1]} : vector<3x1xf32> to vector<1x1xf32>
    %50 = vector.extract_strided_slice %47 {offsets = [0, 0, 0], sizes = [16, 16, 1], strides = [1, 1, 1]} : vector<16x18x1xf32> to vector<16x16x1xf32>
    %51 = vector.shape_cast %49 : vector<1x1xf32> to vector<1x1x1xf32>
    %52 = vector.broadcast %51 : vector<1x1x1xf32> to vector<16x16x1xf32>
    %53 = arith.mulf %52, %50 : vector<16x16x1xf32>
    %54 = vector.extract_strided_slice %48 {offsets = [1, 0], sizes = [1, 1], strides = [1, 1]} : vector<3x1xf32> to vector<1x1xf32>
    %55 = vector.extract_strided_slice %47 {offsets = [0, 1, 0], sizes = [16, 16, 1], strides = [1, 1, 1]} : vector<16x18x1xf32> to vector<16x16x1xf32>
    %56 = vector.shape_cast %54 : vector<1x1xf32> to vector<1x1x1xf32>
    %57 = vector.broadcast %56 : vector<1x1x1xf32> to vector<16x16x1xf32>
    %58 = arith.mulf %57, %55 : vector<16x16x1xf32>
    %59 = arith.addf %53, %58 : vector<16x16x1xf32>
    %60 = vector.extract_strided_slice %48 {offsets = [2, 0], sizes = [1, 1], strides = [1, 1]} : vector<3x1xf32> to vector<1x1xf32>
    %61 = vector.extract_strided_slice %47 {offsets = [0, 2, 0], sizes = [16, 16, 1], strides = [1, 1, 1]} : vector<16x18x1xf32> to vector<16x16x1xf32>
    %62 = vector.shape_cast %60 : vector<1x1xf32> to vector<1x1x1xf32>
    %63 = vector.broadcast %62 : vector<1x1x1xf32> to vector<16x16x1xf32>
    %64 = arith.mulf %63, %61 : vector<16x16x1xf32>
    %65 = arith.addf %59, %64 : vector<16x16x1xf32>
    %c0_17 = arith.constant 0 : index
    %c0_18 = arith.constant 0 : index
    %66 = vector.load %arg5[%c0_17, %c0_18] : memref<1x8xf32, #tpu.memory_space<vmem>>, vector<1x8xf32>
    %67 = vector.shape_cast %66 : vector<1x8xf32> to vector<1x1x8xf32>
    %68 = vector.broadcast %65 : vector<16x16x1xf32> to vector<16x16x8xf32>
    %69 = vector.broadcast %67 : vector<1x1x8xf32> to vector<16x16x8xf32>
    %70 = arith.mulf %68, %69 : vector<16x16x8xf32>
    %c0_19 = arith.constant 0 : index
    %c0_20 = arith.constant 0 : index
    %c0_21 = arith.constant 0 : index
    %c0_22 = arith.constant 0 : index
    %71 = vector.load %arg8[%c0_19, %c0_20, %c0_21, %c0_22] : memref<1x16x16x8xf32, #tpu.memory_space<vmem>>, vector<1x16x16x8xf32>
    %72 = vector.shape_cast %71 : vector<1x16x16x8xf32> to vector<16x16x8xf32>
    %73 = vector.shape_cast %70 : vector<16x16x8xf32> to vector<1x16x16x8xf32>
    tpu.vector_store %arg8[%c0_19, %c0_20, %c0_21, %c0_22], %73 {strides = array<i32>} : memref<1x16x16x8xf32, #tpu.memory_space<vmem>>, vector<1x16x16x8xf32>,
    %cst_23 = arith.constant dense<0.000000e+00> : vector<8xf32>
    %74 = vector.multi_reduction <add>, %70, %cst_23 [0, 1] : vector<16x16x8xf32> to vector<8xf32>
    %75 = vector.shape_cast %74 : vector<8xf32> to vector<1x1x8xf32>
    %c0_24 = arith.constant 0 : index
    %c0_25 = arith.constant 0 : index
    %c0_26 = arith.constant 0 : index
    %76 = vector.load %arg9[%c0_24, %c0_25, %c0_26] : memref<1x1x8xf32, #tpu.memory_space<vmem>>, vector<1x1x8xf32>
    tpu.vector_store %arg9[%c0_24, %c0_25, %c0_26], %75 {strides = array<i32>} : memref<1x1x8xf32, #tpu.memory_space<vmem>>, vector<1x1x8xf32>,
    %77 = arith.mulf %70, %70 : vector<16x16x8xf32>
    %cst_27 = arith.constant dense<0.000000e+00> : vector<8xf32>
    %78 = vector.multi_reduction <add>, %77, %cst_27 [0, 1] : vector<16x16x8xf32> to vector<8xf32>
    %79 = vector.shape_cast %78 : vector<8xf32> to vector<1x1x8xf32>
    %c0_28 = arith.constant 0 : index
    %c0_29 = arith.constant 0 : index
    %c0_30 = arith.constant 0 : index
    %80 = vector.load %arg10[%c0_28, %c0_29, %c0_30] : memref<1x1x8xf32, #tpu.memory_space<vmem>>, vector<1x1x8xf32>
    tpu.vector_store %arg10[%c0_28, %c0_29, %c0_30], %79 {strides = array<i32>} : memref<1x1x8xf32, #tpu.memory_space<vmem>>, vector<1x1x8xf32>,
    return
  }
  func.func @transform_0(%arg0: i32) -> (i32, i32, i32, i32) {
    %c0_i32 = arith.constant 0 : i32
    %c0_i32_0 = arith.constant 0 : i32
    %c0_i32_1 = arith.constant 0 : i32
    %c0_i32_2 = arith.constant 0 : i32
    return %arg0, %c0_i32, %c0_i32_0, %c0_i32_1 : i32, i32, i32, i32
  }
  func.func @transform_1(%arg0: i32) -> (i32, i32) {
    %c0_i32 = arith.constant 0 : i32
    %c0_i32_0 = arith.constant 0 : i32
    %c0_i32_1 = arith.constant 0 : i32
    return %c0_i32, %c0_i32_0 : i32, i32
  }
  func.func @transform_2(%arg0: i32) -> (i32, i32) {
    %c0_i32 = arith.constant 0 : i32
    %c0_i32_0 = arith.constant 0 : i32
    %c0_i32_1 = arith.constant 0 : i32
    return %c0_i32, %c0_i32_0 : i32, i32
  }
  func.func @transform_3(%arg0: i32) -> (i32, i32) {
    %c0_i32 = arith.constant 0 : i32
    %c0_i32_0 = arith.constant 0 : i32
    %c0_i32_1 = arith.constant 0 : i32
    return %c0_i32, %c0_i32_0 : i32, i32
  }
  func.func @transform_4(%arg0: i32) -> (i32, i32) {
    %c0_i32 = arith.constant 0 : i32
    %c0_i32_0 = arith.constant 0 : i32
    %c0_i32_1 = arith.constant 0 : i32
    return %c0_i32, %c0_i32_0 : i32, i32
  }
  func.func @transform_5(%arg0: i32) -> (i32, i32) {
    %c0_i32 = arith.constant 0 : i32
    %c0_i32_0 = arith.constant 0 : i32
    %c0_i32_1 = arith.constant 0 : i32
    return %c0_i32, %c0_i32_0 : i32, i32
  }
  func.func @transform_6(%arg0: i32) -> (i32, i32) {
    %c0_i32 = arith.constant 0 : i32
    %c0_i32_0 = arith.constant 0 : i32
    %c0_i32_1 = arith.constant 0 : i32
    return %c0_i32, %c0_i32_0 : i32, i32
  }
  func.func @transform_7(%arg0: i32) -> (i32, i32, i32, i32) {
    %c0_i32 = arith.constant 0 : i32
    %c0_i32_0 = arith.constant 0 : i32
    %c0_i32_1 = arith.constant 0 : i32
    %c0_i32_2 = arith.constant 0 : i32
    return %arg0, %c0_i32, %c0_i32_0, %c0_i32_1 : i32, i32, i32, i32
  }
  func.func @transform_8(%arg0: i32) -> (i32, i32, i32) {
    %c0_i32 = arith.constant 0 : i32
    %c0_i32_0 = arith.constant 0 : i32
    %c0_i32_1 = arith.constant 0 : i32
    return %arg0, %c0_i32, %c0_i32_0 : i32, i32, i32
  }
  func.func @transform_9(%arg0: i32) -> (i32, i32, i32) {
    %c0_i32 = arith.constant 0 : i32
    %c0_i32_0 = arith.constant 0 : i32
    %c0_i32_1 = arith.constant 0 : i32
    return %arg0, %c0_i32, %c0_i32_0 : i32, i32, i32
  }
}

module attributes {stable_mosaic.version = 11 : i64} {
  func.func @_bn_relu_kernel(%arg0: i32, %arg1: memref<32x128xf32, #tpu.memory_space<vmem>>, %arg2: memref<1x128xf32, #tpu.memory_space<vmem>>, %arg3: memref<1x128xf32, #tpu.memory_space<vmem>>, %arg4: memref<32x128xf32, #tpu.memory_space<vmem>>) attributes {dimension_semantics = [#tpu.dimension_semantics<parallel>], iteration_bounds = array<i64: 1>, scalar_prefetch = 0 : i64, scratch_operands = 0 : i64, tpu.core_type = #tpu.core_type<tc>, window_params = [{transform_indices = @transform_0, window_bounds = array<i64: 32, 128>}, {pipeline_mode = #tpu.pipeline_mode<synchronous>, transform_indices = @transform_1, window_bounds = array<i64: 1, 128>}, {pipeline_mode = #tpu.pipeline_mode<synchronous>, transform_indices = @transform_2, window_bounds = array<i64: 1, 128>}, {transform_indices = @transform_3, window_bounds = array<i64: 32, 128>}]} {
    %c0 = arith.constant 0 : index
    %c0_0 = arith.constant 0 : index
    %0 = vector.load %arg1[%c0, %c0_0] : memref<32x128xf32, #tpu.memory_space<vmem>>, vector<32x128xf32>
    %c0_1 = arith.constant 0 : index
    %c0_2 = arith.constant 0 : index
    %1 = vector.load %arg2[%c0_1, %c0_2] : memref<1x128xf32, #tpu.memory_space<vmem>>, vector<1x128xf32>
    %2 = vector.broadcast %1 : vector<1x128xf32> to vector<32x128xf32>
    %3 = arith.mulf %0, %2 : vector<32x128xf32>
    %c0_3 = arith.constant 0 : index
    %c0_4 = arith.constant 0 : index
    %4 = vector.load %arg3[%c0_3, %c0_4] : memref<1x128xf32, #tpu.memory_space<vmem>>, vector<1x128xf32>
    %5 = vector.broadcast %4 : vector<1x128xf32> to vector<32x128xf32>
    %6 = arith.addf %3, %5 : vector<32x128xf32>
    %cst = arith.constant 0.000000e+00 : f32
    %7 = vector.broadcast %cst : f32 to vector<32x128xf32>
    %8 = arith.maximumf %6, %7 : vector<32x128xf32>
    %c0_5 = arith.constant 0 : index
    %c0_6 = arith.constant 0 : index
    %9 = vector.load %arg4[%c0_5, %c0_6] : memref<32x128xf32, #tpu.memory_space<vmem>>, vector<32x128xf32>
    tpu.vector_store %arg4[%c0_5, %c0_6], %8 {strides = array<i32>} : memref<32x128xf32, #tpu.memory_space<vmem>>, vector<32x128xf32>,
    return
  }
  func.func @transform_0(%arg0: i32) -> (i32, i32) {
    %c0_i32 = arith.constant 0 : i32
    %c0_i32_0 = arith.constant 0 : i32
    return %arg0, %c0_i32 : i32, i32
  }
  func.func @transform_1(%arg0: i32) -> (i32, i32) {
    %c0_i32 = arith.constant 0 : i32
    %c0_i32_0 = arith.constant 0 : i32
    %c0_i32_1 = arith.constant 0 : i32
    return %c0_i32, %c0_i32_0 : i32, i32
  }
  func.func @transform_2(%arg0: i32) -> (i32, i32) {
    %c0_i32 = arith.constant 0 : i32
    %c0_i32_0 = arith.constant 0 : i32
    %c0_i32_1 = arith.constant 0 : i32
    return %c0_i32, %c0_i32_0 : i32, i32
  }
  func.func @transform_3(%arg0: i32) -> (i32, i32) {
    %c0_i32 = arith.constant 0 : i32
    %c0_i32_0 = arith.constant 0 : i32
    return %arg0, %c0_i32 : i32, i32
  }
}

</mosaic_0001>

<llo_original>
// kernel: tile.13
$region0: #{tile.13}
  #allocation0 [shape = 's32[1]{0}', space=sflag, size = 0x4, scoped, tag = 'scoped memory for tile.13']
  %s0 = inlined_call_operand.vmem [shape: f32[8], index: 0, kind: input, shape index: {}]
  %s1 = inlined_call_operand.vmem [shape: f32[16,8], index: 1, kind: output, shape index: {}]
  // Predicated region
  $region2: #{tile.13} parent=0 // pred_check
    _
  $region3: #{tile.13} parent=0 // pred_check_branch
    %3 = sbr.rel (0) target = $region5
  $region4: #{tile.13} parent=0 // pred_region
    _
  $region5: #{tile.13} parent=0 // pred_fallthru
    _
  %v4 = vld [vmem:[%s0] ss:$0 sm:$0xff]
  %5 = vst [vmem:[%s1] sm:$0xff] %v4
  %s6 = scalar_lea.vmem %s1, 8
  %7 = vst [vmem:[%s6] sm:$0xff] %v4

// kernel: tile.14
$region0: #{tile.14}
  %s0 = inlined_call_operand.vmem [shape: f32[16,8], index: 0, kind: input, shape index: {}]
  %s1 = inlined_call_operand.vmem [shape: f32[1,128], index: 1, kind: output, shape index: {}]
  $region1: #{tile.14} parent=0
    #allocation0 [shape = 'u8[4096]{0}', space=vmem, size = 0x1000, scoped, tag = 'scoped mem for output reshape']
    %v2 = vld [vmem:[%s0] sm:$0x1]
    %vm3 = vcmask 64512
    %4 = vst.msk [vmem:[#allocation0] sm:$0x1] %vm3, %v2
    %s5 = scalar_lea.vmem %s0, 15
    %v6 = vld [vmem:[%s5] sm:$0x1]
    %7 = vrot.lane.b32.xlu0 %v6, 120
    %v8 = vpop.permute.xlu0 %7
    %vm9 = vcmask 1048512
    %10 = vst.msk [vmem:[#allocation0] sm:$0x1] %vm9, %v8
    %s11 = scalar_lea.vmem %s0, 14
    %v12 = vld [vmem:[%s11] sm:$0x1]
    %13 = vrot.lane.b32.xlu0 %v12, 112
    %v14 = vpop.permute.xlu0 %13
    %vm15 = vcmask 982912
    %16 = vst.msk [vmem:[#allocation0] sm:$0x1] %vm15, %v14
    %s17 = scalar_lea.vmem %s0, 13
    %v18 = vld [vmem:[%s17] sm:$0x1]
    %19 = vrot.lane.b32.xlu0 %v18, 104
    %v20 = vpop.permute.xlu0 %19
    %vm21 = vcmask 917312
    %22 = vst.msk [vmem:[#allocation0] sm:$0x1] %vm21, %v20
    %s23 = scalar_lea.vmem %s0, 12
    %v24 = vld [vmem:[%s23] sm:$0x1]
    %25 = vrot.lane.b32.xlu0 %v24, 96
    %v26 = vpop.permute.xlu0 %25
    %vm27 = vcmask 851712
    %28 = vst.msk [vmem:[#allocation0] sm:$0x1] %vm27, %v26
    %s29 = scalar_lea.vmem %s0, 11
    %v30 = vld [vmem:[%s29] sm:$0x1]
    %31 = vrot.lane.b32.xlu0 %v30, 88
    %v32 = vpop.permute.xlu0 %31
    %vm33 = vcmask 786112
    %34 = vst.msk [vmem:[#allocation0] sm:$0x1] %vm33, %v32
    %s35 = scalar_lea.vmem %s0, 10
    %v36 = vld [vmem:[%s35] sm:$0x1]
    %37 = vrot.lane.b32.xlu0 %v36, 80
    %v38 = vpop.permute.xlu0 %37
    %vm39 = vcmask 720512
    %40 = vst.msk [vmem:[#allocation0] sm:$0x1] %vm39, %v38
    %s41 = scalar_lea.vmem %s0, 9
    %v42 = vld [vmem:[%s41] sm:$0x1]
    %43 = vrot.lane.b32.xlu0 %v42, 72
    %v44 = vpop.permute.xlu0 %43
    %vm45 = vcmask 654912
    %46 = vst.msk [vmem:[#allocation0] sm:$0x1] %vm45, %v44
    %s47 = scalar_lea.vmem %s0, 8
    %v48 = vld [vmem:[%s47] sm:$0x1]
    %49 = vrot.lane.b32.xlu0 %v48, 64
    %v50 = vpop.permute.xlu0 %49
    %vm51 = vcmask 589312
    %52 = vst.msk [vmem:[#allocation0] sm:$0x1] %vm51, %v50
    %s53 = scalar_lea.vmem %s0, 7
    %v54 = vld [vmem:[%s53] sm:$0x1]
    %55 = vrot.lane.b32.xlu0 %v54, 56
    %v56 = vpop.permute.xlu0 %55
    %vm57 = vcmask 523712
    %58 = vst.msk [vmem:[#allocation0] sm:$0x1] %vm57, %v56
    %s59 = scalar_lea.vmem %s0, 6
    %v60 = vld [vmem:[%s59] sm:$0x1]
    %61 = vrot.lane.b32.xlu0 %v60, 48
    %v62 = vpop.permute.xlu0 %61
    %vm63 = vcmask 458112
    %64 = vst.msk [vmem:[#allocation0] sm:$0x1] %vm63, %v62
    %s65 = scalar_lea.vmem %s0, 5
    %v66 = vld [vmem:[%s65] sm:$0x1]
    %67 = vrot.lane.b32.xlu0 %v66, 40
    %v68 = vpop.permute.xlu0 %67
    %vm69 = vcmask 392512
    %70 = vst.msk [vmem:[#allocation0] sm:$0x1] %vm69, %v68
    %s71 = scalar_lea.vmem %s0, 4
    %v72 = vld [vmem:[%s71] sm:$0x1]
    %73 = vrot.lane.b32.xlu0 %v72, 32
    %v74 = vpop.permute.xlu0 %73
    %vm75 = vcmask 326912
    %76 = vst.msk [vmem:[#allocation0] sm:$0x1] %vm75, %v74
    %s77 = scalar_lea.vmem %s0, 3
    %v78 = vld [vmem:[%s77] sm:$0x1]
    %79 = vrot.lane.b32.xlu0 %v78, 24
    %v80 = vpop.permute.xlu0 %79
    %vm81 = vcmask 261312
    %82 = vst.msk [vmem:[#allocation0] sm:$0x1] %vm81, %v80
    %s83 = scalar_lea.vmem %s0, 2
    %v84 = vld [vmem:[%s83] sm:$0x1]
    %85 = vrot.lane.b32.xlu0 %v84, 16
    %v86 = vpop.permute.xlu0 %85
    %vm87 = vcmask 195712
    %88 = vst.msk [vmem:[#allocation0] sm:$0x1] %vm87, %v86
    %s89 = scalar_lea.vmem %s0, 1
    %v90 = vld [vmem:[%s89] sm:$0x1]
    %91 = vrot.lane.b32.xlu0 %v90, 8
    %v92 = vpop.permute.xlu0 %91
    %vm93 = vcmask 130112
    %94 = vst.msk [vmem:[#allocation0] sm:$0x1] %vm93, %v92
    %s96 = ssub.s32 2, 1
    %v97 = vld [vmem:[#allocation0] sm:%s96]
    %s99 = ssub.s32 2, 1
    %100 = vst [vmem:[%s1] sm:%s99] %v97

// kernel: double_conv_forward.5
$region0: #{double_conv_forward.5}
  #allocation0 [shape = 'u32[]', space=smem, size = 0x4, offset = 0x4, fixed_abs, tag = 'smem constant byte address 0x4 - core index']
  #allocation1 [shape = 'u32[72,128]{1,0:T(1,128)}', space=vmem, size = 0x9000, scoped, tag = 'internal scratch']
  %s0 = inlined_call_operand.vmem [shape: f32[32,128], index: 0, kind: input, shape index: {}]
  %s1 = inlined_call_operand.vmem [shape: f32[1,128], index: 1, kind: input, shape index: {}]
  %s2 = inlined_call_operand.vmem [shape: f32[1,128], index: 2, kind: input, shape index: {}]
  %s3 = inlined_call_operand.vmem [shape: f32[32,128], index: 3, kind: output, shape index: {}]
  %s4 = sld [smem:[#allocation0]]
  $region22: #{double_conv_forward.5} parent=0
    _
  %s6 = ssub.s32 1, %s4
  %s7 = scalar_select 0, %s6, %s4
  // Predicated region
  $region2: #{double_conv_forward.5} parent=0 // pred_check
    _
  $region3: #{double_conv_forward.5} parent=0 // pred_check_branch
    %9 = sbr.rel (0) target = $region5
  $region4: #{double_conv_forward.5} parent=0 // pred_region
    _
  $region5: #{double_conv_forward.5} parent=0 // pred_fallthru
    _
  // Predicated region
  $region6: #{double_conv_forward.5} parent=0 // pred_check
    _
  $region7: #{double_conv_forward.5} parent=0 // pred_check_branch
    %11 = sbr.rel (0) target = $region9
  $region8: #{double_conv_forward.5} parent=0 // pred_region
    _
  $region9: #{double_conv_forward.5} parent=0 // pred_fallthru
    _
  // Predicated region
  $region10: #{double_conv_forward.5} parent=0 // pred_check
    _
  $region11: #{double_conv_forward.5} parent=0 // pred_check_branch
    %13 = sbr.rel (0) target = $region13
  $region12: #{double_conv_forward.5} parent=0 // pred_region
    _
  $region13: #{double_conv_forward.5} parent=0 // pred_fallthru
    _
  %v14 = vld [vmem:[%s0] sm:$0xff]
  %v15 = vld [vmem:[%s0 + $0x8] sm:$0xff]
  %v16 = vld [vmem:[%s0 + $0x10] sm:$0xff]
  %v17 = vld [vmem:[%s0 + $0x18] sm:$0xff]
  %v18 = vld [vmem:[%s1] sm:$0x1]
  %v20 = vperm.slane %v18, 0
  %v22 = vmul.f32 %v14, %v20
  %v23 = vmul.f32 %v15, %v20
  %v24 = vmul.f32 %v16, %v20
  %v25 = vmul.f32 %v17, %v20
  %v26 = vld [vmem:[%s2] sm:$0x1]
  %v28 = vperm.slane %v26, 0
  %v30 = vadd.f32 %v22, %v28
  %v31 = vadd.f32 %v23, %v28
  %v32 = vadd.f32 %v24, %v28
  %v33 = vadd.f32 %v25, %v28
  %v34 = vmax.f32 %v30, 0.0
  %v35 = vmax.f32 %v31, 0.0
  %v36 = vmax.f32 %v32, 0.0
  %v37 = vmax.f32 %v33, 0.0
  %38 = vst [vmem:[%s3] sm:$0xff] %v34
  %39 = vst [vmem:[%s3 + $0x8] sm:$0xff] %v35
  %40 = vst [vmem:[%s3 + $0x10] sm:$0xff] %v36
  %41 = vst [vmem:[%s3 + $0x18] sm:$0xff] %v37
  // Predicated region
  $region14: #{double_conv_forward.5} parent=0 // pred_check
    _
  $region15: #{double_conv_forward.5} parent=0 // pred_check_branch
    %43 = sbr.rel (0) target = $region17
  $region16: #{double_conv_forward.5} parent=0 // pred_region
    _
  $region17: #{double_conv_forward.5} parent=0 // pred_fallthru
    _
  // Predicated region
  $region18: #{double_conv_forward.5} parent=0 // pred_check
    _
  $region19: #{double_conv_forward.5} parent=0 // pred_check_branch
    %45 = sbr.rel (0) target = $region21
  $region20: #{double_conv_forward.5} parent=0 // pred_region
    _
  $region21: #{double_conv_forward.5} parent=0 // pred_fallthru
    _

// kernel: double_conv_forward.3
$region0: #{double_conv_forward.3}
  #allocation0 [shape = 'u32[]', space=smem, size = 0x4, offset = 0x4, fixed_abs, tag = 'smem constant byte address 0x4 - core index']
  #allocation1 [shape = 'u32[72,128]{1,0:T(1,128)}', space=vmem, size = 0x9000, scoped, tag = 'internal scratch']
  #allocation2 [shape = 'f32[18,18,1]{2,1,0:T(8,128)}', space=vmem, size = 0x36000, scoped, tag = 'scratch operand']
  %s0 = inlined_call_operand.vmem [shape: f32[2,16,16,4], index: 0, kind: input, shape index: {}]
  %s1 = inlined_call_operand.vmem [shape: f32[4,1], index: 1, kind: input, shape index: {}]
  %s2 = inlined_call_operand.vmem [shape: f32[3,1], index: 2, kind: input, shape index: {}]
  %s3 = inlined_call_operand.vmem [shape: f32[3,1], index: 3, kind: input, shape index: {}]
  %s4 = inlined_call_operand.vmem [shape: f32[1,8], index: 4, kind: input, shape index: {}]
  %s5 = inlined_call_operand.vmem [shape: f32[1,4], index: 5, kind: input, shape index: {}]
  %s6 = inlined_call_operand.vmem [shape: f32[1,4], index: 6, kind: input, shape index: {}]
  %s7 = inlined_call_operand.vmem [shape: f32[2,16,16,8], index: 7, kind: output, shape index: {0}]
  %s8 = inlined_call_operand.vmem [shape: f32[2,1,8], index: 8, kind: output, shape index: {1}]
  %s9 = inlined_call_operand.vmem [shape: f32[2,1,8], index: 9, kind: output, shape index: {2}]
  %10 = xla_tuple %s7, %s8, %s9
  %s11 = sld [smem:[#allocation0]]
  $region77: #{double_conv_forward.3} parent=0
    _
  %s13 = ssub.s32 1, %s11
  %s14 = scalar_select 0, %s13, %s11
  loop: start=0, step=1, limit=4
  $region2: #{double_conv_forward.3} parent=0 // loop_pre_header
    _
  $region3: #{double_conv_forward.3} parent=0 // loop_header
    %s16 = sphi 0, %s20
    %p17 = scmp.ge.s32.totalorder %s16, 4
    %s26 = sphi 0, %s28
    %s29 = sphi 0, %s26
    %s30 = sphi 0, %s29
    %s46 = sphi 0, %s30
    %s50 = sphi 0, %s50
    %s52 = sphi 0, %s50
    %s53 = sphi 0, %s52
    %s67 = sphi 0, %s53
    %s71 = sphi 0, %s71
    %s73 = sphi 0, %s71
    %s74 = sphi 0, %s73
    %s88 = sphi 0, %s74
    %s92 = sphi 0, %s92
    %s94 = sphi 0, %s92
    %s95 = sphi 0, %s94
    %s109 = sphi 0, %s95
    %s113 = sphi 0, %s113
    %s115 = sphi 0, %s113
    %s116 = sphi 0, %s115
    %s130 = sphi 0, %s116
    %s134 = sphi 0, %s134
    %s136 = sphi 0, %s134
    %s137 = sphi 0, %s136
    %s151 = sphi 0, %s137
    %s155 = sphi 0, %s155
    %s157 = sphi 0, %s155
    %s158 = sphi 0, %s157
    %s172 = sphi 0, %s158
    %s178 = sphi 0, %s180
    %s181 = sphi 0, %s178
    %s182 = sphi 0, %s181
    %s198 = sphi 0, %s182
    %s204 = sphi 0, %s206
    %s207 = sphi 0, %s204
    %s208 = sphi 0, %s207
    %s224 = sphi 0, %s208
    %s230 = sphi 0, %s232
    %s233 = sphi 0, %s230
    %s234 = sphi 0, %s233
    %s250 = sphi 0, %s234
  $region4: #{double_conv_forward.3} parent=0 // loop_header_branch
    %19 = sbr.rel (%p17) target = $region8
  $region5: #{double_conv_forward.3} parent=0 // loop_body
    %s21 = ssub.s32 %s16, 1
    %s22 = ssub.s32 %s16, 2
    %s23 = sadd.s32 %s16, 1
    %s24 = ssub.s32 %s16, %s23
    %p25 = scmp.eq.s32.totalorder %s24, 0
    %s27 = sadd.s32 %s26, 1
    %s28 = scalar_select %p25, %s26, %s27
    %p31 = pneg %p25
    %p32 = scmp.eq.s32.totalorder %s16, 1
    %p33 = por %p31, %p32
    %p34 = scmp.ne.s32.totalorder %s26, %s29
    %p35 = scmp.eq.s32.totalorder %s16, 0
    %p36 = por %p34, %p35
    %p37 = scmp.ne.s32.totalorder %s26, %s29
    %p38 = scmp.eq.s32.totalorder %s21, 1
    %p39 = por %p37, %p38
    %p40 = scmp.ne.s32.totalorder %s29, %s30
    %p41 = scmp.eq.s32.totalorder %s21, 0
    %p42 = por %p40, %p41
    %p43 = scmp.ne.s32.totalorder %s29, %s30
    %p44 = scmp.eq.s32.totalorder %s22, 1
    %p45 = por %p43, %p44
    %p47 = scmp.ne.s32.totalorder %s30, %s46
    %p48 = scmp.eq.s32.totalorder %s22, 0
    %p49 = por %p47, %p48
    %s51 = sadd.s32 %s50, 1
    %p54 = scmp.eq.s32.totalorder %s16, 1
    %p55 = scmp.ne.s32.totalorder %s50, %s52
    %p56 = scmp.eq.s32.totalorder %s16, 0
    %p57 = por %p55, %p56
    %p58 = scmp.ne.s32.totalorder %s50, %s52
    %p59 = scmp.eq.s32.totalorder %s21, 1
    %p60 = por %p58, %p59
    %p61 = scmp.ne.s32.totalorder %s52, %s53
    %p62 = scmp.eq.s32.totalorder %s21, 0
    %p63 = por %p61, %p62
    %p64 = scmp.ne.s32.totalorder %s52, %s53
    %p65 = scmp.eq.s32.totalorder %s22, 1
    %p66 = por %p64, %p65
    %p68 = scmp.ne.s32.totalorder %s53, %s67
    %p69 = scmp.eq.s32.totalorder %s22, 0
    %p70 = por %p68, %p69
    %s72 = sadd.s32 %s71, 1
    %p75 = scmp.eq.s32.totalorder %s16, 1
    %p76 = scmp.ne.s32.totalorder %s71, %s73
    %p77 = scmp.eq.s32.totalorder %s16, 0
    %p78 = por %p76, %p77
    %p79 = scmp.ne.s32.totalorder %s71, %s73
    %p80 = scmp.eq.s32.totalorder %s21, 1
    %p81 = por %p79, %p80
    %p82 = scmp.ne.s32.totalorder %s73, %s74
    %p83 = scmp.eq.s32.totalorder %s21, 0
    %p84 = por %p82, %p83
    %p85 = scmp.ne.s32.totalorder %s73, %s74
    %p86 = scmp.eq.s32.totalorder %s22, 1
    %p87 = por %p85, %p86
    %p89 = scmp.ne.s32.totalorder %s74, %s88
    %p90 = scmp.eq.s32.totalorder %s22, 0
    %p91 = por %p89, %p90
    %s93 = sadd.s32 %s92, 1
    %p96 = scmp.eq.s32.totalorder %s16, 1
    %p97 = scmp.ne.s32.totalorder %s92, %s94
    %p98 = scmp.eq.s32.totalorder %s16, 0
    %p99 = por %p97, %p98
    %p100 = scmp.ne.s32.totalorder %s92, %s94
    %p101 = scmp.eq.s32.totalorder %s21, 1
    %p102 = por %p100, %p101
    %p103 = scmp.ne.s32.totalorder %s94, %s95
    %p104 = scmp.eq.s32.totalorder %s21, 0
    %p105 = por %p103, %p104
    %p106 = scmp.ne.s32.totalorder %s94, %s95
    %p107 = scmp.eq.s32.totalorder %s22, 1
    %p108 = por %p106, %p107
    %p110 = scmp.ne.s32.totalorder %s95, %s109
    %p111 = scmp.eq.s32.totalorder %s22, 0
    %p112 = por %p110, %p111
    %s114 = sadd.s32 %s113, 1
    %p117 = scmp.eq.s32.totalorder %s16, 1
    %p118 = scmp.ne.s32.totalorder %s113, %s115
    %p119 = scmp.eq.s32.totalorder %s16, 0
    %p120 = por %p118, %p119
    %p121 = scmp.ne.s32.totalorder %s113, %s115
    %p122 = scmp.eq.s32.totalorder %s21, 1
    %p123 = por %p121, %p122
    %p124 = scmp.ne.s32.totalorder %s115, %s116
    %p125 = scmp.eq.s32.totalorder %s21, 0
    %p126 = por %p124, %p125
    %p127 = scmp.ne.s32.totalorder %s115, %s116
    %p128 = scmp.eq.s32.totalorder %s22, 1
    %p129 = por %p127, %p128
    %p131 = scmp.ne.s32.totalorder %s116, %s130
    %p132 = scmp.eq.s32.totalorder %s22, 0
    %p133 = por %p131, %p132
    %s135 = sadd.s32 %s134, 1
    %p138 = scmp.eq.s32.totalorder %s16, 1
    %p139 = scmp.ne.s32.totalorder %s134, %s136
    %p140 = scmp.eq.s32.totalorder %s16, 0
    %p141 = por %p139, %p140
    %p142 = scmp.ne.s32.totalorder %s134, %s136
    %p143 = scmp.eq.s32.totalorder %s21, 1
    %p144 = por %p142, %p143
    %p145 = scmp.ne.s32.totalorder %s136, %s137
    %p146 = scmp.eq.s32.totalorder %s21, 0
    %p147 = por %p145, %p146
    %p148 = scmp.ne.s32.totalorder %s136, %s137
    %p149 = scmp.eq.s32.totalorder %s22, 1
    %p150 = por %p148, %p149
    %p152 = scmp.ne.s32.totalorder %s137, %s151
    %p153 = scmp.eq.s32.totalorder %s22, 0
    %p154 = por %p152, %p153
    %s156 = sadd.s32 %s155, 1
    %p159 = scmp.eq.s32.totalorder %s16, 1
    %p160 = scmp.ne.s32.totalorder %s155, %s157
    %p161 = scmp.eq.s32.totalorder %s16, 0
    %p162 = por %p160, %p161
    %p163 = scmp.ne.s32.totalorder %s155, %s157
    %p164 = scmp.eq.s32.totalorder %s21, 1
    %p165 = por %p163, %p164
    %p166 = scmp.ne.s32.totalorder %s157, %s158
    %p167 = scmp.eq.s32.totalorder %s21, 0
    %p168 = por %p166, %p167
    %p169 = scmp.ne.s32.totalorder %s157, %s158
    %p170 = scmp.eq.s32.totalorder %s22, 1
    %p171 = por %p169, %p170
    %p173 = scmp.ne.s32.totalorder %s158, %s172
    %p174 = scmp.eq.s32.totalorder %s22, 0
    %p175 = por %p173, %p174
    %s176 = ssub.s32 %s16, %s23
    %p177 = scmp.eq.s32.totalorder %s176, 0
    %s179 = sadd.s32 %s178, 1
    %s180 = scalar_select %p177, %s178, %s179
    %p183 = pneg %p177
    %p184 = scmp.eq.s32.totalorder %s16, 1
    %p185 = por %p183, %p184
    %p186 = scmp.ne.s32.totalorder %s178, %s181
    %p187 = scmp.eq.s32.totalorder %s16, 0
    %p188 = por %p186, %p187
    %p189 = scmp.ne.s32.totalorder %s178, %s181
    %p190 = scmp.eq.s32.totalorder %s21, 1
    %p191 = por %p189, %p190
    %p192 = scmp.ne.s32.totalorder %s181, %s182
    %p193 = scmp.eq.s32.totalorder %s21, 0
    %p194 = por %p192, %p193
    %p195 = scmp.ne.s32.totalorder %s181, %s182
    %p196 = scmp.eq.s32.totalorder %s22, 1
    %p197 = por %p195, %p196
    %p199 = scmp.ne.s32.totalorder %s182, %s198
    %p200 = scmp.eq.s32.totalorder %s22, 0
    %p201 = por %p199, %p200
    %s202 = ssub.s32 %s16, %s23
    %p203 = scmp.eq.s32.totalorder %s202, 0
    %s205 = sadd.s32 %s204, 1
    %s206 = scalar_select %p203, %s204, %s205
    %p209 = pneg %p203
    %p210 = scmp.eq.s32.totalorder %s16, 1
    %p211 = por %p209, %p210
    %p212 = scmp.ne.s32.totalorder %s204, %s207
    %p213 = scmp.eq.s32.totalorder %s16, 0
    %p214 = por %p212, %p213
    %p215 = scmp.ne.s32.totalorder %s204, %s207
    %p216 = scmp.eq.s32.totalorder %s21, 1
    %p217 = por %p215, %p216
    %p218 = scmp.ne.s32.totalorder %s207, %s208
    %p219 = scmp.eq.s32.totalorder %s21, 0
    %p220 = por %p218, %p219
    %p221 = scmp.ne.s32.totalorder %s207, %s208
    %p222 = scmp.eq.s32.totalorder %s22, 1
    %p223 = por %p221, %p222
    %p225 = scmp.ne.s32.totalorder %s208, %s224
    %p226 = scmp.eq.s32.totalorder %s22, 0
    %p227 = por %p225, %p226
    %s228 = ssub.s32 %s16, %s23
    %p229 = scmp.eq.s32.totalorder %s228, 0
    %s231 = sadd.s32 %s230, 1
    %s232 = scalar_select %p229, %s230, %s231
    %p235 = pneg %p229
    %p236 = scmp.eq.s32.totalorder %s16, 1
    %p237 = por %p235, %p236
    %p238 = scmp.ne.s32.totalorder %s230, %s233
    %p239 = scmp.eq.s32.totalorder %s16, 0
    %p240 = por %p238, %p239
    %p241 = scmp.ne.s32.totalorder %s230, %s233
    %p242 = scmp.eq.s32.totalorder %s21, 1
    %p243 = por %p241, %p242
    %p244 = scmp.ne.s32.totalorder %s233, %s234
    %p245 = scmp.eq.s32.totalorder %s21, 0
    %p246 = por %p244, %p245
    %p247 = scmp.ne.s32.totalorder %s233, %s234
    %p248 = scmp.eq.s32.totalorder %s22, 1
    %p249 = por %p247, %p248
    %p251 = scmp.ne.s32.totalorder %s234, %s250
    %p252 = scmp.eq.s32.totalorder %s22, 0
    %p253 = por %p251, %p252
    %p254 = scmp.le.s32.totalorder 1, %s16
    %p255 = scmp.lt.s32.totalorder %s16, 3
    %p256 = pnand %p254, %p255
    %p257 = pneg %p256
    // Predicated region
    $region9: #{double_conv_forward.3} parent=5 // pred_check
      _
    $region10: #{double_conv_forward.3} parent=5 // pred_check_branch
      %259 = sbr.rel (%p256) target = $region12
    $region11: #{double_conv_forward.3} parent=5 // pred_region
      %s260 = ssub.s32 %s16, 1
      // Predicated region
      $region13: #{double_conv_forward.3} parent=11 // pred_check
        %p261 = pneg %p63
      $region14: #{double_conv_forward.3} parent=11 // pred_check_branch
        %263 = sbr.rel (%p261) target = $region16
      $region15: #{double_conv_forward.3} parent=11 // pred_region
        _
      $region16: #{double_conv_forward.3} parent=11 // pred_fallthru
        _
      // Predicated region
      $region17: #{double_conv_forward.3} parent=11 // pred_check
        %p264 = pneg %p84
      $region18: #{double_conv_forward.3} parent=11 // pred_check_branch
        %266 = sbr.rel (%p264) target = $region20
      $region19: #{double_conv_forward.3} parent=11 // pred_region
        _
      $region20: #{double_conv_forward.3} parent=11 // pred_fallthru
        _
      // Predicated region
      $region21: #{double_conv_forward.3} parent=11 // pred_check
        %p267 = pneg %p105
      $region22: #{double_conv_forward.3} parent=11 // pred_check_branch
        %269 = sbr.rel (%p267) target = $region24
      $region23: #{double_conv_forward.3} parent=11 // pred_region
        _
      $region24: #{double_conv_forward.3} parent=11 // pred_fallthru
        _
      // Predicated region
      $region25: #{double_conv_forward.3} parent=11 // pred_check
        %p270 = pneg %p126
      $region26: #{double_conv_forward.3} parent=11 // pred_check_branch
        %272 = sbr.rel (%p270) target = $region28
      $region27: #{double_conv_forward.3} parent=11 // pred_region
        _
      $region28: #{double_conv_forward.3} parent=11 // pred_fallthru
        _
      // Predicated region
      $region29: #{double_conv_forward.3} parent=11 // pred_check
        %p273 = pneg %p147
      $region30: #{double_conv_forward.3} parent=11 // pred_check_branch
        %275 = sbr.rel (%p273) target = $region32
      $region31: #{double_conv_forward.3} parent=11 // pred_region
        _
      $region32: #{double_conv_forward.3} parent=11 // pred_fallthru
        _
      // Predicated region
      $region33: #{double_conv_forward.3} parent=11 // pred_check
        %p276 = pneg %p168
      $region34: #{double_conv_forward.3} parent=11 // pred_check_branch
        %278 = sbr.rel (%p276) target = $region36
      $region35: #{double_conv_forward.3} parent=11 // pred_region
        _
      $region36: #{double_conv_forward.3} parent=11 // pred_fallthru
        _
    $region12: #{double_conv_forward.3} parent=5 // pred_fallthru
      _
    %p279 = scmp.lt.s32.totalorder %s16, 2
    // Predicated region
    $region37: #{double_conv_forward.3} parent=5 // pred_check
      %p280 = pneg %p279
    $region38: #{double_conv_forward.3} parent=5 // pred_check_branch
      %282 = sbr.rel (%p280) target = $region40
    $region39: #{double_conv_forward.3} parent=5 // pred_region
      // Predicated region
      $region41: #{double_conv_forward.3} parent=39 // pred_check
        %p283 = pneg %p36
      $region42: #{double_conv_forward.3} parent=39 // pred_check_branch
        %285 = sbr.rel (%p283) target = $region44
      $region43: #{double_conv_forward.3} parent=39 // pred_region
        %p286 = scmp.lt.s32.totalorder %s16, 1
        %s287 = scalar_select %p286, %s16, 1
        %s288 = smul.addr %s287, 32
        %s289 = smul.addr %s288, 8
        %s290 = scalar_lea.vmem %s0, %s289
      $region44: #{double_conv_forward.3} parent=39 // pred_fallthru
        _
    $region40: #{double_conv_forward.3} parent=5 // pred_fallthru
      _
    %p291 = scmp.le.s32.totalorder 1, %s16
    %p292 = scmp.lt.s32.totalorder %s16, 3
    %p293 = pnand %p291, %p292
    %p294 = pneg %p293
    // Predicated region
    $region45: #{double_conv_forward.3} parent=5 // pred_check
      _
    $region46: #{double_conv_forward.3} parent=5 // pred_check_branch
      %296 = sbr.rel (%p293) target = $region48
    $region47: #{double_conv_forward.3} parent=5 // pred_region
      %s297 = ssub.s32 %s16, 1
      %p298 = scmp.lt.s32.totalorder %s21, 1
      %s299 = scalar_select %p298, %s21, 1
      %s300 = smul.addr %s299, 32
      %s301 = smul.addr %s300, 8
      %s302 = scalar_lea.vmem %s0, %s301
      %p303 = pneg %p42
      %p304 = pneg %p39
      %p305 = pneg %p63
      %p306 = pneg %p60
      %p307 = pneg %p84
      %p308 = pneg %p81
      %p309 = pneg %p105
      %p310 = pneg %p102
      %p311 = pneg %p126
      %p312 = pneg %p123
      %p313 = pneg %p147
      %p314 = pneg %p144
      %p315 = pneg %p168
      %p316 = pneg %p165
      %p317 = pneg %p194
      %p318 = pneg %p191
      %p319 = scmp.lt.s32.totalorder %s21, 1
      %s320 = scalar_select %p319, %s21, 1
      %s321 = smul.addr %s320, 32
      %s322 = smul.addr %s321, 8
      %s323 = scalar_lea.vmem %s7, %s322
      %p324 = pneg %p220
      %p325 = pneg %p217
      %p326 = scmp.lt.s32.totalorder %s21, 1
      %s327 = scalar_select %p326, %s21, 1
      %s328 = scalar_lea.vmem %s8, %s327
      %p329 = pneg %p246
      %p330 = pneg %p243
      %p331 = scmp.lt.s32.totalorder %s21, 1
      %s332 = scalar_select %p331, %s21, 1
      %s333 = scalar_lea.vmem %s9, %s332
      %p334 = scmp.lt.s32.totalorder %s21, 1
      %s335 = scalar_select %p334, %s21, 1
      %s336 = smul.addr %s335, 32
      %s337 = smul.addr %s336, 8
      %s338 = scalar_lea.vmem %s0, %s337
      %p339 = scmp.lt.s32.totalorder %s21, 1
      %s340 = scalar_select %p339, %s21, 1
      %s341 = smul.addr %s340, 32
      %s342 = smul.addr %s341, 8
      %s343 = scalar_lea.vmem %s7, %s342
      %p344 = scmp.lt.s32.totalorder %s21, 1
      %s345 = scalar_select %p344, %s21, 1
      %s346 = scalar_lea.vmem %s8, %s345
      %p347 = scmp.lt.s32.totalorder %s21, 1
      %s348 = scalar_select %p347, %s21, 1
      %s349 = scalar_lea.vmem %s9, %s348
      %v350 = vld [vmem:[%s338] sm:$0xff]
      %v351 = vld [vmem:[%s338 + $0x8] sm:$0xff]
      %v352 = vld [vmem:[%s338 + $0x10] sm:$0xff]
      %v353 = vld [vmem:[%s338 + $0x18] sm:$0xff]
      %v354 = vld [vmem:[%s338 + $0x20] sm:$0xff]
      %v355 = vld [vmem:[%s338 + $0x28] sm:$0xff]
      %v356 = vld [vmem:[%s338 + $0x30] sm:$0xff]
      %v357 = vld [vmem:[%s338 + $0x38] sm:$0xff]
      %v358 = vld [vmem:[%s338 + $0x40] sm:$0xff]
      %v359 = vld [vmem:[%s338 + $0x48] sm:$0xff]
      %v360 = vld [vmem:[%s338 + $0x50] sm:$0xff]
      %v361 = vld [vmem:[%s338 + $0x58] sm:$0xff]
      %v362 = vld [vmem:[%s338 + $0x60] sm:$0xff]
      %v363 = vld [vmem:[%s338 + $0x68] sm:$0xff]
      %v364 = vld [vmem:[%s338 + $0x70] sm:$0xff]
      %v365 = vld [vmem:[%s338 + $0x78] sm:$0xff]
      %v366 = vld [vmem:[%s338 + $0x80] sm:$0xff]
      %v367 = vld [vmem:[%s338 + $0x88] sm:$0xff]
      %v368 = vld [vmem:[%s338 + $0x90] sm:$0xff]
      %v369 = vld [vmem:[%s338 + $0x98] sm:$0xff]
      %v370 = vld [vmem:[%s338 + $0xa0] sm:$0xff]
      %v371 = vld [vmem:[%s338 + $0xa8] sm:$0xff]
      %v372 = vld [vmem:[%s338 + $0xb0] sm:$0xff]
      %v373 = vld [vmem:[%s338 + $0xb8] sm:$0xff]
      %v374 = vld [vmem:[%s338 + $0xc0] sm:$0xff]
      %v375 = vld [vmem:[%s338 + $0xc8] sm:$0xff]
      %v376 = vld [vmem:[%s338 + $0xd0] sm:$0xff]
      %v377 = vld [vmem:[%s338 + $0xd8] sm:$0xff]
      %v378 = vld [vmem:[%s338 + $0xe0] sm:$0xff]
      %v379 = vld [vmem:[%s338 + $0xe8] sm:$0xff]
      %v380 = vld [vmem:[%s338 + $0xf0] sm:$0xff]
      %v381 = vld [vmem:[%s338 + $0xf8] sm:$0xff]
      %v382 = vld [vmem:[%s1] sm:$0xf]
      %v383 = vperm.slane %v382, 0
      %v384 = vmul.f32 %v350, %v383
      %v385 = vmul.f32 %v351, %v383
      %v386 = vmul.f32 %v352, %v383
      %v387 = vmul.f32 %v353, %v383
      %v388 = vmul.f32 %v354, %v383
      %v389 = vmul.f32 %v355, %v383
      %v390 = vmul.f32 %v356, %v383
      %v391 = vmul.f32 %v357, %v383
      %v392 = vmul.f32 %v358, %v383
      %v393 = vmul.f32 %v359, %v383
      %v394 = vmul.f32 %v360, %v383
      %v395 = vmul.f32 %v361, %v383
      %v396 = vmul.f32 %v362, %v383
      %v397 = vmul.f32 %v363, %v383
      %v398 = vmul.f32 %v364, %v383
      %v399 = vmul.f32 %v365, %v383
      %v400 = vmul.f32 %v366, %v383
      %v401 = vmul.f32 %v367, %v383
      %v402 = vmul.f32 %v368, %v383
      %v403 = vmul.f32 %v369, %v383
      %v404 = vmul.f32 %v370, %v383
      %v405 = vmul.f32 %v371, %v383
      %v406 = vmul.f32 %v372, %v383
      %v407 = vmul.f32 %v373, %v383
      %v408 = vmul.f32 %v374, %v383
      %v409 = vmul.f32 %v375, %v383
      %v410 = vmul.f32 %v376, %v383
      %v411 = vmul.f32 %v377, %v383
      %v412 = vmul.f32 %v378, %v383
      %v413 = vmul.f32 %v379, %v383
      %v414 = vmul.f32 %v380, %v383
      %v415 = vmul.f32 %v381, %v383
      %v416 = vperm.slane %v382, 1
      %418 = vrot.lane.b32.xlu0 %v416, 1
      %v419 = vpop.permute.xlu0 %418
      %v421 = vmul.f32 %v350, %v419
      %v422 = vmul.f32 %v351, %v419
      %v423 = vmul.f32 %v352, %v419
      %v424 = vmul.f32 %v353, %v419
      %v425 = vmul.f32 %v354, %v419
      %v426 = vmul.f32 %v355, %v419
      %v427 = vmul.f32 %v356, %v419
      %v428 = vmul.f32 %v357, %v419
      %v429 = vmul.f32 %v358, %v419
      %v430 = vmul.f32 %v359, %v419
      %v431 = vmul.f32 %v360, %v419
      %v432 = vmul.f32 %v361, %v419
      %v433 = vmul.f32 %v362, %v419
      %v434 = vmul.f32 %v363, %v419
      %v435 = vmul.f32 %v364, %v419
      %v436 = vmul.f32 %v365, %v419
      %v437 = vmul.f32 %v366, %v419
      %v438 = vmul.f32 %v367, %v419
      %v439 = vmul.f32 %v368, %v419
      %v440 = vmul.f32 %v369, %v419
      %v441 = vmul.f32 %v370, %v419
      %v442 = vmul.f32 %v371, %v419
      %v443 = vmul.f32 %v372, %v419
      %v444 = vmul.f32 %v373, %v419
      %v445 = vmul.f32 %v374, %v419
      %v446 = vmul.f32 %v375, %v419
      %v447 = vmul.f32 %v376, %v419
      %v448 = vmul.f32 %v377, %v419
      %v449 = vmul.f32 %v378, %v419
      %v450 = vmul.f32 %v379, %v419
      %v451 = vmul.f32 %v380, %v419
      %v452 = vmul.f32 %v381, %v419
      %485 = vrot.lane.b32.xlu0 %v421, 127
      %v486 = vpop.permute.xlu0 %485
      %487 = vrot.lane.b32.xlu0 %v422, 127
      %v488 = vpop.permute.xlu0 %487
      %489 = vrot.lane.b32.xlu0 %v423, 127
      %v490 = vpop.permute.xlu0 %489
      %491 = vrot.lane.b32.xlu0 %v424, 127
      %v492 = vpop.permute.xlu0 %491
      %493 = vrot.lane.b32.xlu0 %v425, 127
      %v494 = vpop.permute.xlu0 %493
      %495 = vrot.lane.b32.xlu0 %v426, 127
      %v496 = vpop.permute.xlu0 %495
      %497 = vrot.lane.b32.xlu0 %v427, 127
      %v498 = vpop.permute.xlu0 %497
      %499 = vrot.lane.b32.xlu0 %v428, 127
      %v500 = vpop.permute.xlu0 %499
      %501 = vrot.lane.b32.xlu0 %v429, 127
      %v502 = vpop.permute.xlu0 %501
      %503 = vrot.lane.b32.xlu0 %v430, 127
      %v504 = vpop.permute.xlu0 %503
      %505 = vrot.lane.b32.xlu0 %v431, 127
      %v506 = vpop.permute.xlu0 %505
      %507 = vrot.lane.b32.xlu0 %v432, 127
      %v508 = vpop.permute.xlu0 %507
      %509 = vrot.lane.b32.xlu0 %v433, 127
      %v510 = vpop.permute.xlu0 %509
      %511 = vrot.lane.b32.xlu0 %v434, 127
      %v512 = vpop.permute.xlu0 %511
      %513 = vrot.lane.b32.xlu0 %v435, 127
      %v514 = vpop.permute.xlu0 %513
      %515 = vrot.lane.b32.xlu0 %v436, 127
      %v516 = vpop.permute.xlu0 %515
      %517 = vrot.lane.b32.xlu0 %v437, 127
      %v518 = vpop.permute.xlu0 %517
      %519 = vrot.lane.b32.xlu0 %v438, 127
      %v520 = vpop.permute.xlu0 %519
      %521 = vrot.lane.b32.xlu0 %v439, 127
      %v522 = vpop.permute.xlu0 %521
      %523 = vrot.lane.b32.xlu0 %v440, 127
      %v524 = vpop.permute.xlu0 %523
      %525 = vrot.lane.b32.xlu0 %v441, 127
      %v526 = vpop.permute.xlu0 %525
      %527 = vrot.lane.b32.xlu0 %v442, 127
      %v528 = vpop.permute.xlu0 %527
      %529 = vrot.lane.b32.xlu0 %v443, 127
      %v530 = vpop.permute.xlu0 %529
      %531 = vrot.lane.b32.xlu0 %v444, 127
      %v532 = vpop.permute.xlu0 %531
      %533 = vrot.lane.b32.xlu0 %v445, 127
      %v534 = vpop.permute.xlu0 %533
      %535 = vrot.lane.b32.xlu0 %v446, 127
      %v536 = vpop.permute.xlu0 %535
      %537 = vrot.lane.b32.xlu0 %v447, 127
      %v538 = vpop.permute.xlu0 %537
      %539 = vrot.lane.b32.xlu0 %v448, 127
      %v540 = vpop.permute.xlu0 %539
      %541 = vrot.lane.b32.xlu0 %v449, 127
      %v542 = vpop.permute.xlu0 %541
      %543 = vrot.lane.b32.xlu0 %v450, 127
      %v544 = vpop.permute.xlu0 %543
      %545 = vrot.lane.b32.xlu0 %v451, 127
      %v546 = vpop.permute.xlu0 %545
      %547 = vrot.lane.b32.xlu0 %v452, 127
      %v548 = vpop.permute.xlu0 %547
      %v581 = vadd.f32 %v384, %v486
      %v582 = vadd.f32 %v385, %v488
      %v583 = vadd.f32 %v386, %v490
      %v584 = vadd.f32 %v387, %v492
      %v585 = vadd.f32 %v388, %v494
      %v586 = vadd.f32 %v389, %v496
      %v587 = vadd.f32 %v390, %v498
      %v588 = vadd.f32 %v391, %v500
      %v589 = vadd.f32 %v392, %v502
      %v590 = vadd.f32 %v393, %v504
      %v591 = vadd.f32 %v394, %v506
      %v592 = vadd.f32 %v395, %v508
      %v593 = vadd.f32 %v396, %v510
      %v594 = vadd.f32 %v397, %v512
      %v595 = vadd.f32 %v398, %v514
      %v596 = vadd.f32 %v399, %v516
      %v597 = vadd.f32 %v400, %v518
      %v598 = vadd.f32 %v401, %v520
      %v599 = vadd.f32 %v402, %v522
      %v600 = vadd.f32 %v403, %v524
      %v601 = vadd.f32 %v404, %v526
      %v602 = vadd.f32 %v405, %v528
      %v603 = vadd.f32 %v406, %v530
      %v604 = vadd.f32 %v407, %v532
      %v605 = vadd.f32 %v408, %v534
      %v606 = vadd.f32 %v409, %v536
      %v607 = vadd.f32 %v410, %v538
      %v608 = vadd.f32 %v411, %v540
      %v609 = vadd.f32 %v412, %v542
      %v610 = vadd.f32 %v413, %v544
      %v611 = vadd.f32 %v414, %v546
      %v612 = vadd.f32 %v415, %v548
      %v613 = vperm.slane %v382, 2
      %615 = vrot.lane.b32.xlu0 %v613, 2
      %v616 = vpop.permute.xlu0 %615
      %v618 = vmul.f32 %v350, %v616
      %v619 = vmul.f32 %v351, %v616
      %v620 = vmul.f32 %v352, %v616
      %v621 = vmul.f32 %v353, %v616
      %v622 = vmul.f32 %v354, %v616
      %v623 = vmul.f32 %v355, %v616
      %v624 = vmul.f32 %v356, %v616
      %v625 = vmul.f32 %v357, %v616
      %v626 = vmul.f32 %v358, %v616
      %v627 = vmul.f32 %v359, %v616
      %v628 = vmul.f32 %v360, %v616
      %v629 = vmul.f32 %v361, %v616
      %v630 = vmul.f32 %v362, %v616
      %v631 = vmul.f32 %v363, %v616
      %v632 = vmul.f32 %v364, %v616
      %v633 = vmul.f32 %v365, %v616
      %v634 = vmul.f32 %v366, %v616
      %v635 = vmul.f32 %v367, %v616
      %v636 = vmul.f32 %v368, %v616
      %v637 = vmul.f32 %v369, %v616
      %v638 = vmul.f32 %v370, %v616
      %v639 = vmul.f32 %v371, %v616
      %v640 = vmul.f32 %v372, %v616
      %v641 = vmul.f32 %v373, %v616
      %v642 = vmul.f32 %v374, %v616
      %v643 = vmul.f32 %v375, %v616
      %v644 = vmul.f32 %v376, %v616
      %v645 = vmul.f32 %v377, %v616
      %v646 = vmul.f32 %v378, %v616
      %v647 = vmul.f32 %v379, %v616
      %v648 = vmul.f32 %v380, %v616
      %v649 = vmul.f32 %v381, %v616
      %682 = vrot.lane.b32.xlu0 %v618, 126
      %v683 = vpop.permute.xlu0 %682
      %684 = vrot.lane.b32.xlu0 %v619, 126
      %v685 = vpop.permute.xlu0 %684
      %686 = vrot.lane.b32.xlu0 %v620, 126
      %v687 = vpop.permute.xlu0 %686
      %688 = vrot.lane.b32.xlu0 %v621, 126
      %v689 = vpop.permute.xlu0 %688
      %690 = vrot.lane.b32.xlu0 %v622, 126
      %v691 = vpop.permute.xlu0 %690
      %692 = vrot.lane.b32.xlu0 %v623, 126
      %v693 = vpop.permute.xlu0 %692
      %694 = vrot.lane.b32.xlu0 %v624, 126
      %v695 = vpop.permute.xlu0 %694
      %696 = vrot.lane.b32.xlu0 %v625, 126
      %v697 = vpop.permute.xlu0 %696
      %698 = vrot.lane.b32.xlu0 %v626, 126
      %v699 = vpop.permute.xlu0 %698
      %700 = vrot.lane.b32.xlu0 %v627, 126
      %v701 = vpop.permute.xlu0 %700
      %702 = vrot.lane.b32.xlu0 %v628, 126
      %v703 = vpop.permute.xlu0 %702
      %704 = vrot.lane.b32.xlu0 %v629, 126
      %v705 = vpop.permute.xlu0 %704
      %706 = vrot.lane.b32.xlu0 %v630, 126
      %v707 = vpop.permute.xlu0 %706
      %708 = vrot.lane.b32.xlu0 %v631, 126
      %v709 = vpop.permute.xlu0 %708
      %710 = vrot.lane.b32.xlu0 %v632, 126
      %v711 = vpop.permute.xlu0 %710
      %712 = vrot.lane.b32.xlu0 %v633, 126
      %v713 = vpop.permute.xlu0 %712
      %714 = vrot.lane.b32.xlu0 %v634, 126
      %v715 = vpop.permute.xlu0 %714
      %716 = vrot.lane.b32.xlu0 %v635, 126
      %v717 = vpop.permute.xlu0 %716
      %718 = vrot.lane.b32.xlu0 %v636, 126
      %v719 = vpop.permute.xlu0 %718
      %720 = vrot.lane.b32.xlu0 %v637, 126
      %v721 = vpop.permute.xlu0 %720
      %722 = vrot.lane.b32.xlu0 %v638, 126
      %v723 = vpop.permute.xlu0 %722
      %724 = vrot.lane.b32.xlu0 %v639, 126
      %v725 = vpop.permute.xlu0 %724
      %726 = vrot.lane.b32.xlu0 %v640, 126
      %v727 = vpop.permute.xlu0 %726
      %728 = vrot.lane.b32.xlu0 %v641, 126
      %v729 = vpop.permute.xlu0 %728
      %730 = vrot.lane.b32.xlu0 %v642, 126
      %v731 = vpop.permute.xlu0 %730
      %732 = vrot.lane.b32.xlu0 %v643, 126
      %v733 = vpop.permute.xlu0 %732
      %734 = vrot.lane.b32.xlu0 %v644, 126
      %v735 = vpop.permute.xlu0 %734
      %736 = vrot.lane.b32.xlu0 %v645, 126
      %v737 = vpop.permute.xlu0 %736
      %738 = vrot.lane.b32.xlu0 %v646, 126
      %v739 = vpop.permute.xlu0 %738
      %740 = vrot.lane.b32.xlu0 %v647, 126
      %v741 = vpop.permute.xlu0 %740
      %742 = vrot.lane.b32.xlu0 %v648, 126
      %v743 = vpop.permute.xlu0 %742
      %744 = vrot.lane.b32.xlu0 %v649, 126
      %v745 = vpop.permute.xlu0 %744
      %v778 = vadd.f32 %v581, %v683
      %v779 = vadd.f32 %v582, %v685
      %v780 = vadd.f32 %v583, %v687
      %v781 = vadd.f32 %v584, %v689
      %v782 = vadd.f32 %v585, %v691
      %v783 = vadd.f32 %v586, %v693
      %v784 = vadd.f32 %v587, %v695
      %v785 = vadd.f32 %v588, %v697
      %v786 = vadd.f32 %v589, %v699
      %v787 = vadd.f32 %v590, %v701
      %v788 = vadd.f32 %v591, %v703
      %v789 = vadd.f32 %v592, %v705
      %v790 = vadd.f32 %v593, %v707
      %v791 = vadd.f32 %v594, %v709
      %v792 = vadd.f32 %v595, %v711
      %v793 = vadd.f32 %v596, %v713
      %v794 = vadd.f32 %v597, %v715
      %v795 = vadd.f32 %v598, %v717
      %v796 = vadd.f32 %v599, %v719
      %v797 = vadd.f32 %v600, %v721
      %v798 = vadd.f32 %v601, %v723
      %v799 = vadd.f32 %v602, %v725
      %v800 = vadd.f32 %v603, %v727
      %v801 = vadd.f32 %v604, %v729
      %v802 = vadd.f32 %v605, %v731
      %v803 = vadd.f32 %v606, %v733
      %v804 = vadd.f32 %v607, %v735
      %v805 = vadd.f32 %v608, %v737
      %v806 = vadd.f32 %v609, %v739
      %v807 = vadd.f32 %v610, %v741
      %v808 = vadd.f32 %v611, %v743
      %v809 = vadd.f32 %v612, %v745
      %v810 = vperm.slane %v382, 3
      %812 = vrot.lane.b32.xlu0 %v810, 3
      %v813 = vpop.permute.xlu0 %812
      %v815 = vmul.f32 %v350, %v813
      %v816 = vmul.f32 %v351, %v813
      %v817 = vmul.f32 %v352, %v813
      %v818 = vmul.f32 %v353, %v813
      %v819 = vmul.f32 %v354, %v813
      %v820 = vmul.f32 %v355, %v813
      %v821 = vmul.f32 %v356, %v813
      %v822 = vmul.f32 %v357, %v813
      %v823 = vmul.f32 %v358, %v813
      %v824 = vmul.f32 %v359, %v813
      %v825 = vmul.f32 %v360, %v813
      %v826 = vmul.f32 %v361, %v813
      %v827 = vmul.f32 %v362, %v813
      %v828 = vmul.f32 %v363, %v813
      %v829 = vmul.f32 %v364, %v813
      %v830 = vmul.f32 %v365, %v813
      %v831 = vmul.f32 %v366, %v813
      %v832 = vmul.f32 %v367, %v813
      %v833 = vmul.f32 %v368, %v813
      %v834 = vmul.f32 %v369, %v813
      %v835 = vmul.f32 %v370, %v813
      %v836 = vmul.f32 %v371, %v813
      %v837 = vmul.f32 %v372, %v813
      %v838 = vmul.f32 %v373, %v813
      %v839 = vmul.f32 %v374, %v813
      %v840 = vmul.f32 %v375, %v813
      %v841 = vmul.f32 %v376, %v813
      %v842 = vmul.f32 %v377, %v813
      %v843 = vmul.f32 %v378, %v813
      %v844 = vmul.f32 %v379, %v813
      %v845 = vmul.f32 %v380, %v813
      %v846 = vmul.f32 %v381, %v813
      %879 = vrot.lane.b32.xlu0 %v815, 125
      %v880 = vpop.permute.xlu0 %879
      %881 = vrot.lane.b32.xlu0 %v816, 125
      %v882 = vpop.permute.xlu0 %881
      %883 = vrot.lane.b32.xlu0 %v817, 125
      %v884 = vpop.permute.xlu0 %883
      %885 = vrot.lane.b32.xlu0 %v818, 125
      %v886 = vpop.permute.xlu0 %885
      %887 = vrot.lane.b32.xlu0 %v819, 125
      %v888 = vpop.permute.xlu0 %887
      %889 = vrot.lane.b32.xlu0 %v820, 125
      %v890 = vpop.permute.xlu0 %889
      %891 = vrot.lane.b32.xlu0 %v821, 125
      %v892 = vpop.permute.xlu0 %891
      %893 = vrot.lane.b32.xlu0 %v822, 125
      %v894 = vpop.permute.xlu0 %893
      %895 = vrot.lane.b32.xlu0 %v823, 125
      %v896 = vpop.permute.xlu0 %895
      %897 = vrot.lane.b32.xlu0 %v824, 125
      %v898 = vpop.permute.xlu0 %897
      %899 = vrot.lane.b32.xlu0 %v825, 125
      %v900 = vpop.permute.xlu0 %899
      %901 = vrot.lane.b32.xlu0 %v826, 125
      %v902 = vpop.permute.xlu0 %901
      %903 = vrot.lane.b32.xlu0 %v827, 125
      %v904 = vpop.permute.xlu0 %903
      %905 = vrot.lane.b32.xlu0 %v828, 125
      %v906 = vpop.permute.xlu0 %905
      %907 = vrot.lane.b32.xlu0 %v829, 125
      %v908 = vpop.permute.xlu0 %907
      %909 = vrot.lane.b32.xlu0 %v830, 125
      %v910 = vpop.permute.xlu0 %909
      %911 = vrot.lane.b32.xlu0 %v831, 125
      %v912 = vpop.permute.xlu0 %911
      %913 = vrot.lane.b32.xlu0 %v832, 125
      %v914 = vpop.permute.xlu0 %913
      %915 = vrot.lane.b32.xlu0 %v833, 125
      %v916 = vpop.permute.xlu0 %915
      %917 = vrot.lane.b32.xlu0 %v834, 125
      %v918 = vpop.permute.xlu0 %917
      %919 = vrot.lane.b32.xlu0 %v835, 125
      %v920 = vpop.permute.xlu0 %919
      %921 = vrot.lane.b32.xlu0 %v836, 125
      %v922 = vpop.permute.xlu0 %921
      %923 = vrot.lane.b32.xlu0 %v837, 125
      %v924 = vpop.permute.xlu0 %923
      %925 = vrot.lane.b32.xlu0 %v838, 125
      %v926 = vpop.permute.xlu0 %925
      %927 = vrot.lane.b32.xlu0 %v839, 125
      %v928 = vpop.permute.xlu0 %927
      %929 = vrot.lane.b32.xlu0 %v840, 125
      %v930 = vpop.permute.xlu0 %929
      %931 = vrot.lane.b32.xlu0 %v841, 125
      %v932 = vpop.permute.xlu0 %931
      %933 = vrot.lane.b32.xlu0 %v842, 125
      %v934 = vpop.permute.xlu0 %933
      %935 = vrot.lane.b32.xlu0 %v843, 125
      %v936 = vpop.permute.xlu0 %935
      %937 = vrot.lane.b32.xlu0 %v844, 125
      %v938 = vpop.permute.xlu0 %937
      %939 = vrot.lane.b32.xlu0 %v845, 125
      %v940 = vpop.permute.xlu0 %939
      %941 = vrot.lane.b32.xlu0 %v846, 125
      %v942 = vpop.permute.xlu0 %941
      %v975 = vadd.f32 %v778, %v880
      %v976 = vadd.f32 %v779, %v882
      %v977 = vadd.f32 %v780, %v884
      %v978 = vadd.f32 %v781, %v886
      %v979 = vadd.f32 %v782, %v888
      %v980 = vadd.f32 %v783, %v890
      %v981 = vadd.f32 %v784, %v892
      %v982 = vadd.f32 %v785, %v894
      %v983 = vadd.f32 %v786, %v896
      %v984 = vadd.f32 %v787, %v898
      %v985 = vadd.f32 %v788, %v900
      %v986 = vadd.f32 %v789, %v902
      %v987 = vadd.f32 %v790, %v904
      %v988 = vadd.f32 %v791, %v906
      %v989 = vadd.f32 %v792, %v908
      %v990 = vadd.f32 %v793, %v910
      %v991 = vadd.f32 %v794, %v912
      %v992 = vadd.f32 %v795, %v914
      %v993 = vadd.f32 %v796, %v916
      %v994 = vadd.f32 %v797, %v918
      %v995 = vadd.f32 %v798, %v920
      %v996 = vadd.f32 %v799, %v922
      %v997 = vadd.f32 %v800, %v924
      %v998 = vadd.f32 %v801, %v926
      %v999 = vadd.f32 %v802, %v928
      %v1000 = vadd.f32 %v803, %v930
      %v1001 = vadd.f32 %v804, %v932
      %v1002 = vadd.f32 %v805, %v934
      %v1003 = vadd.f32 %v806, %v936
      %v1004 = vadd.f32 %v807, %v938
      %v1005 = vadd.f32 %v808, %v940
      %v1006 = vadd.f32 %v809, %v942
      %vm1007 = vcmask 7168
      %1008 = vst.msk [vmem:[#allocation2] sm:$0xff] %vm1007, 0.0
      %1009 = vst.msk [vmem:[#allocation2 + $0x8] sm:$0xff] %vm1007, 0.0
      %vm1010 = vcmask 1024
      %1011 = vst.msk [vmem:[#allocation2 + $0x10] sm:$0x3] %vm1010, 0.0
      %1012 = vst.msk [vmem:[#allocation2 + $0x18] sm:$0xff] %vm1007, 0.0
      %1013 = vst.msk [vmem:[#allocation2 + $0x20] sm:$0xff] %vm1007, 0.0
      %1014 = vst.msk [vmem:[#allocation2 + $0x28] sm:$0x3] %vm1010, 0.0
      %1015 = vst.msk [vmem:[#allocation2 + $0x30] sm:$0xff] %vm1007, 0.0
      %1016 = vst.msk [vmem:[#allocation2 + $0x38] sm:$0xff] %vm1007, 0.0
      %1017 = vst.msk [vmem:[#allocation2 + $0x40] sm:$0x3] %vm1010, 0.0
      %1018 = vst.msk [vmem:[#allocation2 + $0x48] sm:$0xff] %vm1007, 0.0
      %1019 = vst.msk [vmem:[#allocation2 + $0x50] sm:$0xff] %vm1007, 0.0
      %1020 = vst.msk [vmem:[#allocation2 + $0x58] sm:$0x3] %vm1010, 0.0
      %1021 = vst.msk [vmem:[#allocation2 + $0x60] sm:$0xff] %vm1007, 0.0
      %1022 = vst.msk [vmem:[#allocation2 + $0x68] sm:$0xff] %vm1007, 0.0
      %1023 = vst.msk [vmem:[#allocation2 + $0x70] sm:$0x3] %vm1010, 0.0
      %1024 = vst.msk [vmem:[#allocation2 + $0x78] sm:$0xff] %vm1007, 0.0
      %1025 = vst.msk [vmem:[#allocation2 + $0x80] sm:$0xff] %vm1007, 0.0
      %1026 = vst.msk [vmem:[#allocation2 + $0x88] sm:$0x3] %vm1010, 0.0
      %1027 = vst.msk [vmem:[#allocation2 + $0x90] sm:$0xff] %vm1007, 0.0
      %1028 = vst.msk [vmem:[#allocation2 + $0x98] sm:$0xff] %vm1007, 0.0
      %1029 = vst.msk [vmem:[#allocation2 + $0xa0] sm:$0x3] %vm1010, 0.0
      %1030 = vst.msk [vmem:[#allocation2 + $0xa8] sm:$0xff] %vm1007, 0.0
      %1031 = vst.msk [vmem:[#allocation2 + $0xb0] sm:$0xff] %vm1007, 0.0
      %1032 = vst.msk [vmem:[#allocation2 + $0xb8] sm:$0x3] %vm1010, 0.0
      %1033 = vst.msk [vmem:[#allocation2 + $0xc0] sm:$0xff] %vm1007, 0.0
      %1034 = vst.msk [vmem:[#allocation2 + $0xc8] sm:$0xff] %vm1007, 0.0
      %1035 = vst.msk [vmem:[#allocation2 + $0xd0] sm:$0x3] %vm1010, 0.0
      %1036 = vst.msk [vmem:[#allocation2 + $0xd8] sm:$0xff] %vm1007, 0.0
      %1037 = vst.msk [vmem:[#allocation2 + $0xe0] sm:$0xff] %vm1007, 0.0
      %1038 = vst.msk [vmem:[#allocation2 + $0xe8] sm:$0x3] %vm1010, 0.0
      %1039 = vst.msk [vmem:[#allocation2 + $0xf0] sm:$0xff] %vm1007, 0.0
      %1040 = vst.msk [vmem:[#allocation2 + $0xf8] sm:$0xff] %vm1007, 0.0
      %1041 = vst.msk [vmem:[#allocation2 + $0x100] sm:$0x3] %vm1010, 0.0
      %1042 = vst.msk [vmem:[#allocation2 + $0x108] sm:$0xff] %vm1007, 0.0
      %1043 = vst.msk [vmem:[#allocation2 + $0x110] sm:$0xff] %vm1007, 0.0
      %1044 = vst.msk [vmem:[#allocation2 + $0x118] sm:$0x3] %vm1010, 0.0
      %1045 = vst.msk [vmem:[#allocation2 + $0x120] sm:$0xff] %vm1007, 0.0
      %1046 = vst.msk [vmem:[#allocation2 + $0x128] sm:$0xff] %vm1007, 0.0
      %1047 = vst.msk [vmem:[#allocation2 + $0x130] sm:$0x3] %vm1010, 0.0
      %1048 = vst.msk [vmem:[#allocation2 + $0x138] sm:$0xff] %vm1007, 0.0
      %1049 = vst.msk [vmem:[#allocation2 + $0x140] sm:$0xff] %vm1007, 0.0
      %1050 = vst.msk [vmem:[#allocation2 + $0x148] sm:$0x3] %vm1010, 0.0
      %1051 = vst.msk [vmem:[#allocation2 + $0x150] sm:$0xff] %vm1007, 0.0
      %1052 = vst.msk [vmem:[#allocation2 + $0x158] sm:$0xff] %vm1007, 0.0
      %1053 = vst.msk [vmem:[#allocation2 + $0x160] sm:$0x3] %vm1010, 0.0
      %1054 = vst.msk [vmem:[#allocation2 + $0x168] sm:$0xff] %vm1007, 0.0
      %1055 = vst.msk [vmem:[#allocation2 + $0x170] sm:$0xff] %vm1007, 0.0
      %1056 = vst.msk [vmem:[#allocation2 + $0x178] sm:$0x3] %vm1010, 0.0
      %1057 = vst.msk [vmem:[#allocation2 + $0x180] sm:$0xff] %vm1007, 0.0
      %1058 = vst.msk [vmem:[#allocation2 + $0x188] sm:$0xff] %vm1007, 0.0
      %1059 = vst.msk [vmem:[#allocation2 + $0x190] sm:$0x3] %vm1010, 0.0
      %1060 = vst.msk [vmem:[#allocation2 + $0x198] sm:$0xff] %vm1007, 0.0
      %1061 = vst.msk [vmem:[#allocation2 + $0x1a0] sm:$0xff] %vm1007, 0.0
      %1062 = vst.msk [vmem:[#allocation2 + $0x1a8] sm:$0x3] %vm1010, 0.0
      %s1063 = scalar_lea.vmem [#allocation2], 24
      %1064 = vst.msk [vmem:[%s1063 + $0x1] sm:$0xff] %vm1007, %v975
      %1065 = vst.msk [vmem:[%s1063 + $0x9] sm:$0xff] %vm1007, %v976
      %1066 = vst.msk [vmem:[%s1063 + $0x19] sm:$0xff] %vm1007, %v977
      %1067 = vst.msk [vmem:[%s1063 + $0x21] sm:$0xff] %vm1007, %v978
      %1068 = vst.msk [vmem:[%s1063 + $0x31] sm:$0xff] %vm1007, %v979
      %1069 = vst.msk [vmem:[%s1063 + $0x39] sm:$0xff] %vm1007, %v980
      %1070 = vst.msk [vmem:[%s1063 + $0x49] sm:$0xff] %vm1007, %v981
      %1071 = vst.msk [vmem:[%s1063 + $0x51] sm:$0xff] %vm1007, %v982
      %1072 = vst.msk [vmem:[%s1063 + $0x61] sm:$0xff] %vm1007, %v983
      %1073 = vst.msk [vmem:[%s1063 + $0x69] sm:$0xff] %vm1007, %v984
      %1074 = vst.msk [vmem:[%s1063 + $0x79] sm:$0xff] %vm1007, %v985
      %1075 = vst.msk [vmem:[%s1063 + $0x81] sm:$0xff] %vm1007, %v986
      %1076 = vst.msk [vmem:[%s1063 + $0x91] sm:$0xff] %vm1007, %v987
      %1077 = vst.msk [vmem:[%s1063 + $0x99] sm:$0xff] %vm1007, %v988
      %1078 = vst.msk [vmem:[%s1063 + $0xa9] sm:$0xff] %vm1007, %v989
      %1079 = vst.msk [vmem:[%s1063 + $0xb1] sm:$0xff] %vm1007, %v990
      %1080 = vst.msk [vmem:[%s1063 + $0xc1] sm:$0xff] %vm1007, %v991
      %1081 = vst.msk [vmem:[%s1063 + $0xc9] sm:$0xff] %vm1007, %v992
      %1082 = vst.msk [vmem:[%s1063 + $0xd9] sm:$0xff] %vm1007, %v993
      %1083 = vst.msk [vmem:[%s1063 + $0xe1] sm:$0xff] %vm1007, %v994
      %1084 = vst.msk [vmem:[%s1063 + $0xf1] sm:$0xff] %vm1007, %v995
      %1085 = vst.msk [vmem:[%s1063 + $0xf9] sm:$0xff] %vm1007, %v996
      %1086 = vst.msk [vmem:[%s1063 + $0x109] sm:$0xff] %vm1007, %v997
      %1087 = vst.msk [vmem:[%s1063 + $0x111] sm:$0xff] %vm1007, %v998
      %1088 = vst.msk [vmem:[%s1063 + $0x121] sm:$0xff] %vm1007, %v999
      %1089 = vst.msk [vmem:[%s1063 + $0x129] sm:$0xff] %vm1007, %v1000
      %1090 = vst.msk [vmem:[%s1063 + $0x139] sm:$0xff] %vm1007, %v1001
      %1091 = vst.msk [vmem:[%s1063 + $0x141] sm:$0xff] %vm1007, %v1002
      %1092 = vst.msk [vmem:[%s1063 + $0x151] sm:$0xff] %vm1007, %v1003
      %1093 = vst.msk [vmem:[%s1063 + $0x159] sm:$0xff] %vm1007, %v1004
      %1094 = vst.msk [vmem:[%s1063 + $0x169] sm:$0xff] %vm1007, %v1005
      %1095 = vst.msk [vmem:[%s1063 + $0x171] sm:$0xff] %vm1007, %v1006
      %v1096 = vld [vmem:[#allocation2] sm:$0xff]
      %v1097 = vld [vmem:[#allocation2 + $0x8] sm:$0xff]
      %v1098 = vld [vmem:[#allocation2 + $0x10] sm:$0x3]
      %v1099 = vld [vmem:[#allocation2 + $0x18] sm:$0xff]
      %v1100 = vld [vmem:[#allocation2 + $0x20] sm:$0xff]
      %v1101 = vld [vmem:[#allocation2 + $0x28] sm:$0x3]
      %v1102 = vld [vmem:[#allocation2 + $0x30] sm:$0xff]
      %v1103 = vld [vmem:[#allocation2 + $0x38] sm:$0xff]
      %v1104 = vld [vmem:[#allocation2 + $0x40] sm:$0x3]
      %v1105 = vld [vmem:[#allocation2 + $0x48] sm:$0xff]
      %v1106 = vld [vmem:[#allocation2 + $0x50] sm:$0xff]
      %v1107 = vld [vmem:[#allocation2 + $0x58] sm:$0x3]
      %v1108 = vld [vmem:[#allocation2 + $0x60] sm:$0xff]
      %v1109 = vld [vmem:[#allocation2 + $0x68] sm:$0xff]
      %v1110 = vld [vmem:[#allocation2 + $0x70] sm:$0x3]
      %v1111 = vld [vmem:[#allocation2 + $0x78] sm:$0xff]
      %v1112 = vld [vmem:[#allocation2 + $0x80] sm:$0xff]
      %v1113 = vld [vmem:[#allocation2 + $0x88] sm:$0x3]
      %v1114 = vld [vmem:[#allocation2 + $0x90] sm:$0xff]
      %v1115 = vld [vmem:[#allocation2 + $0x98] sm:$0xff]
      %v1116 = vld [vmem:[#allocation2 + $0xa0] sm:$0x3]
      %v1117 = vld [vmem:[#allocation2 + $0xa8] sm:$0xff]
      %v1118 = vld [vmem:[#allocation2 + $0xb0] sm:$0xff]
      %v1119 = vld [vmem:[#allocation2 + $0xb8] sm:$0x3]
      %v1120 = vld [vmem:[#allocation2 + $0xc0] sm:$0xff]
      %v1121 = vld [vmem:[#allocation2 + $0xc8] sm:$0xff]
      %v1122 = vld [vmem:[#allocation2 + $0xd0] sm:$0x3]
      %v1123 = vld [vmem:[#allocation2 + $0xd8] sm:$0xff]
      %v1124 = vld [vmem:[#allocation2 + $0xe0] sm:$0xff]
      %v1125 = vld [vmem:[#allocation2 + $0xe8] sm:$0x3]
      %v1126 = vld [vmem:[#allocation2 + $0xf0] sm:$0xff]
      %v1127 = vld [vmem:[#allocation2 + $0xf8] sm:$0xff]
      %v1128 = vld [vmem:[#allocation2 + $0x100] sm:$0x3]
      %v1129 = vld [vmem:[#allocation2 + $0x108] sm:$0xff]
      %v1130 = vld [vmem:[#allocation2 + $0x110] sm:$0xff]
      %v1131 = vld [vmem:[#allocation2 + $0x118] sm:$0x3]
      %v1132 = vld [vmem:[#allocation2 + $0x120] sm:$0xff]
      %v1133 = vld [vmem:[#allocation2 + $0x128] sm:$0xff]
      %v1134 = vld [vmem:[#allocation2 + $0x130] sm:$0x3]
      %v1135 = vld [vmem:[#allocation2 + $0x138] sm:$0xff]
      %v1136 = vld [vmem:[#allocation2 + $0x140] sm:$0xff]
      %v1137 = vld [vmem:[#allocation2 + $0x148] sm:$0x3]
      %v1138 = vld [vmem:[#allocation2 + $0x150] sm:$0xff]
      %v1139 = vld [vmem:[#allocation2 + $0x158] sm:$0xff]
      %v1140 = vld [vmem:[#allocation2 + $0x160] sm:$0x3]
      %v1141 = vld [vmem:[#allocation2 + $0x168] sm:$0xff]
      %v1142 = vld [vmem:[#allocation2 + $0x170] sm:$0xff]
      %v1143 = vld [vmem:[#allocation2 + $0x178] sm:$0x3]
      %v1144 = vld [vmem:[#allocation2 + $0x180] sm:$0xff]
      %v1145 = vld [vmem:[#allocation2 + $0x188] sm:$0xff]
      %v1146 = vld [vmem:[#allocation2 + $0x190] sm:$0x3]
      %v1147 = vld [vmem:[#allocation2 + $0x198] sm:$0xff]
      %v1148 = vld [vmem:[#allocation2 + $0x1a0] sm:$0xff]
      %v1149 = vld [vmem:[#allocation2 + $0x1a8] sm:$0x3]
      %v1150 = vld [vmem:[%s2] sm:$0x7]
      %v1151 = vperm.slane %v1150, 0
      %v1152 = vmul.f32 %v1151, %v1096
      %v1153 = vmul.f32 %v1151, %v1097
      %v1154 = vmul.f32 %v1151, %v1098
      %v1155 = vmul.f32 %v1151, %v1099
      %v1156 = vmul.f32 %v1151, %v1100
      %v1157 = vmul.f32 %v1151, %v1101
      %v1158 = vmul.f32 %v1151, %v1102
      %v1159 = vmul.f32 %v1151, %v1103
      %v1160 = vmul.f32 %v1151, %v1104
      %v1161 = vmul.f32 %v1151, %v1105
      %v1162 = vmul.f32 %v1151, %v1106
      %v1163 = vmul.f32 %v1151, %v1107
      %v1164 = vmul.f32 %v1151, %v1108
      %v1165 = vmul.f32 %v1151, %v1109
      %v1166 = vmul.f32 %v1151, %v1110
      %v1167 = vmul.f32 %v1151, %v1111
      %v1168 = vmul.f32 %v1151, %v1112
      %v1169 = vmul.f32 %v1151, %v1113
      %v1170 = vmul.f32 %v1151, %v1114
      %v1171 = vmul.f32 %v1151, %v1115
      %v1172 = vmul.f32 %v1151, %v1116
      %v1173 = vmul.f32 %v1151, %v1117
      %v1174 = vmul.f32 %v1151, %v1118
      %v1175 = vmul.f32 %v1151, %v1119
      %v1176 = vmul.f32 %v1151, %v1120
      %v1177 = vmul.f32 %v1151, %v1121
      %v1178 = vmul.f32 %v1151, %v1122
      %v1179 = vmul.f32 %v1151, %v1123
      %v1180 = vmul.f32 %v1151, %v1124
      %v1181 = vmul.f32 %v1151, %v1125
      %v1182 = vmul.f32 %v1151, %v1126
      %v1183 = vmul.f32 %v1151, %v1127
      %v1184 = vmul.f32 %v1151, %v1128
      %v1185 = vmul.f32 %v1151, %v1129
      %v1186 = vmul.f32 %v1151, %v1130
      %v1187 = vmul.f32 %v1151, %v1131
      %v1188 = vmul.f32 %v1151, %v1132
      %v1189 = vmul.f32 %v1151, %v1133
      %v1190 = vmul.f32 %v1151, %v1134
      %v1191 = vmul.f32 %v1151, %v1135
      %v1192 = vmul.f32 %v1151, %v1136
      %v1193 = vmul.f32 %v1151, %v1137
      %v1194 = vmul.f32 %v1151, %v1138
      %v1195 = vmul.f32 %v1151, %v1139
      %v1196 = vmul.f32 %v1151, %v1140
      %v1197 = vmul.f32 %v1151, %v1141
      %v1198 = vmul.f32 %v1151, %v1142
      %v1199 = vmul.f32 %v1151, %v1143
      %v1200 = vperm.slane %v1150, 1
      %v1201 = vmul.f32 %v1200, %v1099
      %v1202 = vmul.f32 %v1200, %v1100
      %v1203 = vmul.f32 %v1200, %v1101
      %v1204 = vmul.f32 %v1200, %v1102
      %v1205 = vmul.f32 %v1200, %v1103
      %v1206 = vmul.f32 %v1200, %v1104
      %v1207 = vmul.f32 %v1200, %v1105
      %v1208 = vmul.f32 %v1200, %v1106
      %v1209 = vmul.f32 %v1200, %v1107
      %v1210 = vmul.f32 %v1200, %v1108
      %v1211 = vmul.f32 %v1200, %v1109
      %v1212 = vmul.f32 %v1200, %v1110
      %v1213 = vmul.f32 %v1200, %v1111
      %v1214 = vmul.f32 %v1200, %v1112
      %v1215 = vmul.f32 %v1200, %v1113
      %v1216 = vmul.f32 %v1200, %v1114
      %v1217 = vmul.f32 %v1200, %v1115
      %v1218 = vmul.f32 %v1200, %v1116
      %v1219 = vmul.f32 %v1200, %v1117
      %v1220 = vmul.f32 %v1200, %v1118
      %v1221 = vmul.f32 %v1200, %v1119
      %v1222 = vmul.f32 %v1200, %v1120
      %v1223 = vmul.f32 %v1200, %v1121
      %v1224 = vmul.f32 %v1200, %v1122
      %v1225 = vmul.f32 %v1200, %v1123
      %v1226 = vmul.f32 %v1200, %v1124
      %v1227 = vmul.f32 %v1200, %v1125
      %v1228 = vmul.f32 %v1200, %v1126
      %v1229 = vmul.f32 %v1200, %v1127
      %v1230 = vmul.f32 %v1200, %v1128
      %v1231 = vmul.f32 %v1200, %v1129
      %v1232 = vmul.f32 %v1200, %v1130
      %v1233 = vmul.f32 %v1200, %v1131
      %v1234 = vmul.f32 %v1200, %v1132
      %v1235 = vmul.f32 %v1200, %v1133
      %v1236 = vmul.f32 %v1200, %v1134
      %v1237 = vmul.f32 %v1200, %v1135
      %v1238 = vmul.f32 %v1200, %v1136
      %v1239 = vmul.f32 %v1200, %v1137
      %v1240 = vmul.f32 %v1200, %v1138
      %v1241 = vmul.f32 %v1200, %v1139
      %v1242 = vmul.f32 %v1200, %v1140
      %v1243 = vmul.f32 %v1200, %v1141
      %v1244 = vmul.f32 %v1200, %v1142
      %v1245 = vmul.f32 %v1200, %v1143
      %v1246 = vmul.f32 %v1200, %v1144
      %v1247 = vmul.f32 %v1200, %v1145
      %v1248 = vmul.f32 %v1200, %v1146
      %v1249 = vadd.f32 %v1152, %v1201
      %v1250 = vadd.f32 %v1153, %v1202
      %v1251 = vadd.f32 %v1154, %v1203
      %v1252 = vadd.f32 %v1155, %v1204
      %v1253 = vadd.f32 %v1156, %v1205
      %v1254 = vadd.f32 %v1157, %v1206
      %v1255 = vadd.f32 %v1158, %v1207
      %v1256 = vadd.f32 %v1159, %v1208
      %v1257 = vadd.f32 %v1160, %v1209
      %v1258 = vadd.f32 %v1161, %v1210
      %v1259 = vadd.f32 %v1162, %v1211
      %v1260 = vadd.f32 %v1163, %v1212
      %v1261 = vadd.f32 %v1164, %v1213
      %v1262 = vadd.f32 %v1165, %v1214
      %v1263 = vadd.f32 %v1166, %v1215
      %v1264 = vadd.f32 %v1167, %v1216
      %v1265 = vadd.f32 %v1168, %v1217
      %v1266 = vadd.f32 %v1169, %v1218
      %v1267 = vadd.f32 %v1170, %v1219
      %v1268 = vadd.f32 %v1171, %v1220
      %v1269 = vadd.f32 %v1172, %v1221
      %v1270 = vadd.f32 %v1173, %v1222
      %v1271 = vadd.f32 %v1174, %v1223
      %v1272 = vadd.f32 %v1175, %v1224
      %v1273 = vadd.f32 %v1176, %v1225
      %v1274 = vadd.f32 %v1177, %v1226
      %v1275 = vadd.f32 %v1178, %v1227
      %v1276 = vadd.f32 %v1179, %v1228
      %v1277 = vadd.f32 %v1180, %v1229
      %v1278 = vadd.f32 %v1181, %v1230
      %v1279 = vadd.f32 %v1182, %v1231
      %v1280 = vadd.f32 %v1183, %v1232
      %v1281 = vadd.f32 %v1184, %v1233
      %v1282 = vadd.f32 %v1185, %v1234
      %v1283 = vadd.f32 %v1186, %v1235
      %v1284 = vadd.f32 %v1187, %v1236
      %v1285 = vadd.f32 %v1188, %v1237
      %v1286 = vadd.f32 %v1189, %v1238
      %v1287 = vadd.f32 %v1190, %v1239
      %v1288 = vadd.f32 %v1191, %v1240
      %v1289 = vadd.f32 %v1192, %v1241
      %v1290 = vadd.f32 %v1193, %v1242
      %v1291 = vadd.f32 %v1194, %v1243
      %v1292 = vadd.f32 %v1195, %v1244
      %v1293 = vadd.f32 %v1196, %v1245
      %v1294 = vadd.f32 %v1197, %v1246
      %v1295 = vadd.f32 %v1198, %v1247
      %v1296 = vadd.f32 %v1199, %v1248
      %v1297 = vperm.slane %v1150, 2
      %v1298 = vmul.f32 %v1297, %v1102
      %v1299 = vmul.f32 %v1297, %v1103
      %v1300 = vmul.f32 %v1297, %v1104
      %v1301 = vmul.f32 %v1297, %v1105
      %v1302 = vmul.f32 %v1297, %v1106
      %v1303 = vmul.f32 %v1297, %v1107
      %v1304 = vmul.f32 %v1297, %v1108
      %v1305 = vmul.f32 %v1297, %v1109
      %v1306 = vmul.f32 %v1297, %v1110
      %v1307 = vmul.f32 %v1297, %v1111
      %v1308 = vmul.f32 %v1297, %v1112
      %v1309 = vmul.f32 %v1297, %v1113
      %v1310 = vmul.f32 %v1297, %v1114
      %v1311 = vmul.f32 %v1297, %v1115
      %v1312 = vmul.f32 %v1297, %v1116
      %v1313 = vmul.f32 %v1297, %v1117
      %v1314 = vmul.f32 %v1297, %v1118
      %v1315 = vmul.f32 %v1297, %v1119
      %v1316 = vmul.f32 %v1297, %v1120
      %v1317 = vmul.f32 %v1297, %v1121
      %v1318 = vmul.f32 %v1297, %v1122
      %v1319 = vmul.f32 %v1297, %v1123
      %v1320 = vmul.f32 %v1297, %v1124
      %v1321 = vmul.f32 %v1297, %v1125
      %v1322 = vmul.f32 %v1297, %v1126
      %v1323 = vmul.f32 %v1297, %v1127
      %v1324 = vmul.f32 %v1297, %v1128
      %v1325 = vmul.f32 %v1297, %v1129
      %v1326 = vmul.f32 %v1297, %v1130
      %v1327 = vmul.f32 %v1297, %v1131
      %v1328 = vmul.f32 %v1297, %v1132
      %v1329 = vmul.f32 %v1297, %v1133
      %v1330 = vmul.f32 %v1297, %v1134
      %v1331 = vmul.f32 %v1297, %v1135
      %v1332 = vmul.f32 %v1297, %v1136
      %v1333 = vmul.f32 %v1297, %v1137
      %v1334 = vmul.f32 %v1297, %v1138
      %v1335 = vmul.f32 %v1297, %v1139
      %v1336 = vmul.f32 %v1297, %v1140
      %v1337 = vmul.f32 %v1297, %v1141
      %v1338 = vmul.f32 %v1297, %v1142
      %v1339 = vmul.f32 %v1297, %v1143
      %v1340 = vmul.f32 %v1297, %v1144
      %v1341 = vmul.f32 %v1297, %v1145
      %v1342 = vmul.f32 %v1297, %v1146
      %v1343 = vmul.f32 %v1297, %v1147
      %v1344 = vmul.f32 %v1297, %v1148
      %v1345 = vmul.f32 %v1297, %v1149
      %v1346 = vadd.f32 %v1249, %v1298
      %v1347 = vadd.f32 %v1250, %v1299
      %v1348 = vadd.f32 %v1251, %v1300
      %v1349 = vadd.f32 %v1252, %v1301
      %v1350 = vadd.f32 %v1253, %v1302
      %v1351 = vadd.f32 %v1254, %v1303
      %v1352 = vadd.f32 %v1255, %v1304
      %v1353 = vadd.f32 %v1256, %v1305
      %v1354 = vadd.f32 %v1257, %v1306
      %v1355 = vadd.f32 %v1258, %v1307
      %v1356 = vadd.f32 %v1259, %v1308
      %v1357 = vadd.f32 %v1260, %v1309
      %v1358 = vadd.f32 %v1261, %v1310
      %v1359 = vadd.f32 %v1262, %v1311
      %v1360 = vadd.f32 %v1263, %v1312
      %v1361 = vadd.f32 %v1264, %v1313
      %v1362 = vadd.f32 %v1265, %v1314
      %v1363 = vadd.f32 %v1266, %v1315
      %v1364 = vadd.f32 %v1267, %v1316
      %v1365 = vadd.f32 %v1268, %v1317
      %v1366 = vadd.f32 %v1269, %v1318
      %v1367 = vadd.f32 %v1270, %v1319
      %v1368 = vadd.f32 %v1271, %v1320
      %v1369 = vadd.f32 %v1272, %v1321
      %v1370 = vadd.f32 %v1273, %v1322
      %v1371 = vadd.f32 %v1274, %v1323
      %v1372 = vadd.f32 %v1275, %v1324
      %v1373 = vadd.f32 %v1276, %v1325
      %v1374 = vadd.f32 %v1277, %v1326
      %v1375 = vadd.f32 %v1278, %v1327
      %v1376 = vadd.f32 %v1279, %v1328
      %v1377 = vadd.f32 %v1280, %v1329
      %v1378 = vadd.f32 %v1281, %v1330
      %v1379 = vadd.f32 %v1282, %v1331
      %v1380 = vadd.f32 %v1283, %v1332
      %v1381 = vadd.f32 %v1284, %v1333
      %v1382 = vadd.f32 %v1285, %v1334
      %v1383 = vadd.f32 %v1286, %v1335
      %v1384 = vadd.f32 %v1287, %v1336
      %v1385 = vadd.f32 %v1288, %v1337
      %v1386 = vadd.f32 %v1289, %v1338
      %v1387 = vadd.f32 %v1290, %v1339
      %v1388 = vadd.f32 %v1291, %v1340
      %v1389 = vadd.f32 %v1292, %v1341
      %v1390 = vadd.f32 %v1293, %v1342
      %v1391 = vadd.f32 %v1294, %v1343
      %v1392 = vadd.f32 %v1295, %v1344
      %v1393 = vadd.f32 %v1296, %v1345
      %v1394 = vld [vmem:[%s3] sm:$0x7]
      %v1395 = vperm.slane %v1394, 0
      %v1396 = vmul.f32 %v1395, %v1346
      %v1397 = vmul.f32 %v1395, %v1347
      %v1398 = vmul.f32 %v1395, %v1349
      %v1399 = vmul.f32 %v1395, %v1350
      %v1400 = vmul.f32 %v1395, %v1352
      %v1401 = vmul.f32 %v1395, %v1353
      %v1402 = vmul.f32 %v1395, %v1355
      %v1403 = vmul.f32 %v1395, %v1356
      %v1404 = vmul.f32 %v1395, %v1358
      %v1405 = vmul.f32 %v1395, %v1359
      %v1406 = vmul.f32 %v1395, %v1361
      %v1407 = vmul.f32 %v1395, %v1362
      %v1408 = vmul.f32 %v1395, %v1364
      %v1409 = vmul.f32 %v1395, %v1365
      %v1410 = vmul.f32 %v1395, %v1367
      %v1411 = vmul.f32 %v1395, %v1368
      %v1412 = vmul.f32 %v1395, %v1370
      %v1413 = vmul.f32 %v1395, %v1371
      %v1414 = vmul.f32 %v1395, %v1373
      %v1415 = vmul.f32 %v1395, %v1374
      %v1416 = vmul.f32 %v1395, %v1376
      %v1417 = vmul.f32 %v1395, %v1377
      %v1418 = vmul.f32 %v1395, %v1379
      %v1419 = vmul.f32 %v1395, %v1380
      %v1420 = vmul.f32 %v1395, %v1382
      %v1421 = vmul.f32 %v1395, %v1383
      %v1422 = vmul.f32 %v1395, %v1385
      %v1423 = vmul.f32 %v1395, %v1386
      %v1424 = vmul.f32 %v1395, %v1388
      %v1425 = vmul.f32 %v1395, %v1389
      %v1426 = vmul.f32 %v1395, %v1391
      %v1427 = vmul.f32 %v1395, %v1392
      %v1428 = vperm.slane %v1394, 1
      %v1429 = vmul.f32 %v1428, %v1346
      %v1430 = vmul.f32 %v1428, %v1347
      %v1431 = vmul.f32 %v1428, %v1348
      %v1432 = vmul.f32 %v1428, %v1349
      %v1433 = vmul.f32 %v1428, %v1350
      %v1434 = vmul.f32 %v1428, %v1351
      %v1435 = vmul.f32 %v1428, %v1352
      %v1436 = vmul.f32 %v1428, %v1353
      %v1437 = vmul.f32 %v1428, %v1354
      %v1438 = vmul.f32 %v1428, %v1355
      %v1439 = vmul.f32 %v1428, %v1356
      %v1440 = vmul.f32 %v1428, %v1357
      %v1441 = vmul.f32 %v1428, %v1358
      %v1442 = vmul.f32 %v1428, %v1359
      %v1443 = vmul.f32 %v1428, %v1360
      %v1444 = vmul.f32 %v1428, %v1361
      %v1445 = vmul.f32 %v1428, %v1362
      %v1446 = vmul.f32 %v1428, %v1363
      %v1447 = vmul.f32 %v1428, %v1364
      %v1448 = vmul.f32 %v1428, %v1365
      %v1449 = vmul.f32 %v1428, %v1366
      %v1450 = vmul.f32 %v1428, %v1367
      %v1451 = vmul.f32 %v1428, %v1368
      %v1452 = vmul.f32 %v1428, %v1369
      %v1453 = vmul.f32 %v1428, %v1370
      %v1454 = vmul.f32 %v1428, %v1371
      %v1455 = vmul.f32 %v1428, %v1372
      %v1456 = vmul.f32 %v1428, %v1373
      %v1457 = vmul.f32 %v1428, %v1374
      %v1458 = vmul.f32 %v1428, %v1375
      %v1459 = vmul.f32 %v1428, %v1376
      %v1460 = vmul.f32 %v1428, %v1377
      %v1461 = vmul.f32 %v1428, %v1378
      %v1462 = vmul.f32 %v1428, %v1379
      %v1463 = vmul.f32 %v1428, %v1380
      %v1464 = vmul.f32 %v1428, %v1381
      %v1465 = vmul.f32 %v1428, %v1382
      %v1466 = vmul.f32 %v1428, %v1383
      %v1467 = vmul.f32 %v1428, %v1384
      %v1468 = vmul.f32 %v1428, %v1385
      %v1469 = vmul.f32 %v1428, %v1386
      %v1470 = vmul.f32 %v1428, %v1387
      %v1471 = vmul.f32 %v1428, %v1388
      %v1472 = vmul.f32 %v1428, %v1389
      %v1473 = vmul.f32 %v1428, %v1390
      %v1474 = vmul.f32 %v1428, %v1391
      %v1475 = vmul.f32 %v1428, %v1392
      %v1476 = vmul.f32 %v1428, %v1393
      %vm1525 = vcmask 1046528
      %v1526 = vrot.slane %v1429, 1
      %v1527 = vrot.slane %v1430, 1
      %v1528 = vsel %vm1525, %v1526, %v1527
      %v1529 = vrot.slane %v1431, 1
      %v1530 = vsel %vm1525, %v1527, %v1529
      %v1531 = vrot.slane %v1432, 1
      %v1532 = vrot.slane %v1433, 1
      %v1533 = vsel %vm1525, %v1531, %v1532
      %v1534 = vrot.slane %v1434, 1
      %v1535 = vsel %vm1525, %v1532, %v1534
      %v1536 = vrot.slane %v1435, 1
      %v1537 = vrot.slane %v1436, 1
      %v1538 = vsel %vm1525, %v1536, %v1537
      %v1539 = vrot.slane %v1437, 1
      %v1540 = vsel %vm1525, %v1537, %v1539
      %v1541 = vrot.slane %v1438, 1
      %v1542 = vrot.slane %v1439, 1
      %v1543 = vsel %vm1525, %v1541, %v1542
      %v1544 = vrot.slane %v1440, 1
      %v1545 = vsel %vm1525, %v1542, %v1544
      %v1546 = vrot.slane %v1441, 1
      %v1547 = vrot.slane %v1442, 1
      %v1548 = vsel %vm1525, %v1546, %v1547
      %v1549 = vrot.slane %v1443, 1
      %v1550 = vsel %vm1525, %v1547, %v1549
      %v1551 = vrot.slane %v1444, 1
      %v1552 = vrot.slane %v1445, 1
      %v1553 = vsel %vm1525, %v1551, %v1552
      %v1554 = vrot.slane %v1446, 1
      %v1555 = vsel %vm1525, %v1552, %v1554
      %v1556 = vrot.slane %v1447, 1
      %v1557 = vrot.slane %v1448, 1
      %v1558 = vsel %vm1525, %v1556, %v1557
      %v1559 = vrot.slane %v1449, 1
      %v1560 = vsel %vm1525, %v1557, %v1559
      %v1561 = vrot.slane %v1450, 1
      %v1562 = vrot.slane %v1451, 1
      %v1563 = vsel %vm1525, %v1561, %v1562
      %v1564 = vrot.slane %v1452, 1
      %v1565 = vsel %vm1525, %v1562, %v1564
      %v1566 = vrot.slane %v1453, 1
      %v1567 = vrot.slane %v1454, 1
      %v1568 = vsel %vm1525, %v1566, %v1567
      %v1569 = vrot.slane %v1455, 1
      %v1570 = vsel %vm1525, %v1567, %v1569
      %v1571 = vrot.slane %v1456, 1
      %v1572 = vrot.slane %v1457, 1
      %v1573 = vsel %vm1525, %v1571, %v1572
      %v1574 = vrot.slane %v1458, 1
      %v1575 = vsel %vm1525, %v1572, %v1574
      %v1576 = vrot.slane %v1459, 1
      %v1577 = vrot.slane %v1460, 1
      %v1578 = vsel %vm1525, %v1576, %v1577
      %v1579 = vrot.slane %v1461, 1
      %v1580 = vsel %vm1525, %v1577, %v1579
      %v1581 = vrot.slane %v1462, 1
      %v1582 = vrot.slane %v1463, 1
      %v1583 = vsel %vm1525, %v1581, %v1582
      %v1584 = vrot.slane %v1464, 1
      %v1585 = vsel %vm1525, %v1582, %v1584
      %v1586 = vrot.slane %v1465, 1
      %v1587 = vrot.slane %v1466, 1
      %v1588 = vsel %vm1525, %v1586, %v1587
      %v1589 = vrot.slane %v1467, 1
      %v1590 = vsel %vm1525, %v1587, %v1589
      %v1591 = vrot.slane %v1468, 1
      %v1592 = vrot.slane %v1469, 1
      %v1593 = vsel %vm1525, %v1591, %v1592
      %v1594 = vrot.slane %v1470, 1
      %v1595 = vsel %vm1525, %v1592, %v1594
      %v1596 = vrot.slane %v1471, 1
      %v1597 = vrot.slane %v1472, 1
      %v1598 = vsel %vm1525, %v1596, %v1597
      %v1599 = vrot.slane %v1473, 1
      %v1600 = vsel %vm1525, %v1597, %v1599
      %v1601 = vrot.slane %v1474, 1
      %v1602 = vrot.slane %v1475, 1
      %v1603 = vsel %vm1525, %v1601, %v1602
      %v1604 = vrot.slane %v1476, 1
      %v1605 = vsel %vm1525, %v1602, %v1604
      %v1638 = vadd.f32 %v1396, %v1528
      %v1639 = vadd.f32 %v1397, %v1530
      %v1640 = vadd.f32 %v1398, %v1533
      %v1641 = vadd.f32 %v1399, %v1535
      %v1642 = vadd.f32 %v1400, %v1538
      %v1643 = vadd.f32 %v1401, %v1540
      %v1644 = vadd.f32 %v1402, %v1543
      %v1645 = vadd.f32 %v1403, %v1545
      %v1646 = vadd.f32 %v1404, %v1548
      %v1647 = vadd.f32 %v1405, %v1550
      %v1648 = vadd.f32 %v1406, %v1553
      %v1649 = vadd.f32 %v1407, %v1555
      %v1650 = vadd.f32 %v1408, %v1558
      %v1651 = vadd.f32 %v1409, %v1560
      %v1652 = vadd.f32 %v1410, %v1563
      %v1653 = vadd.f32 %v1411, %v1565
      %v1654 = vadd.f32 %v1412, %v1568
      %v1655 = vadd.f32 %v1413, %v1570
      %v1656 = vadd.f32 %v1414, %v1573
      %v1657 = vadd.f32 %v1415, %v1575
      %v1658 = vadd.f32 %v1416, %v1578
      %v1659 = vadd.f32 %v1417, %v1580
      %v1660 = vadd.f32 %v1418, %v1583
      %v1661 = vadd.f32 %v1419, %v1585
      %v1662 = vadd.f32 %v1420, %v1588
      %v1663 = vadd.f32 %v1421, %v1590
      %v1664 = vadd.f32 %v1422, %v1593
      %v1665 = vadd.f32 %v1423, %v1595
      %v1666 = vadd.f32 %v1424, %v1598
      %v1667 = vadd.f32 %v1425, %v1600
      %v1668 = vadd.f32 %v1426, %v1603
      %v1669 = vadd.f32 %v1427, %v1605
      %v1670 = vperm.slane %v1394, 2
      %v1671 = vmul.f32 %v1670, %v1346
      %v1672 = vmul.f32 %v1670, %v1347
      %v1673 = vmul.f32 %v1670, %v1348
      %v1674 = vmul.f32 %v1670, %v1349
      %v1675 = vmul.f32 %v1670, %v1350
      %v1676 = vmul.f32 %v1670, %v1351
      %v1677 = vmul.f32 %v1670, %v1352
      %v1678 = vmul.f32 %v1670, %v1353
      %v1679 = vmul.f32 %v1670, %v1354
      %v1680 = vmul.f32 %v1670, %v1355
      %v1681 = vmul.f32 %v1670, %v1356
      %v1682 = vmul.f32 %v1670, %v1357
      %v1683 = vmul.f32 %v1670, %v1358
      %v1684 = vmul.f32 %v1670, %v1359
      %v1685 = vmul.f32 %v1670, %v1360
      %v1686 = vmul.f32 %v1670, %v1361
      %v1687 = vmul.f32 %v1670, %v1362
      %v1688 = vmul.f32 %v1670, %v1363
      %v1689 = vmul.f32 %v1670, %v1364
      %v1690 = vmul.f32 %v1670, %v1365
      %v1691 = vmul.f32 %v1670, %v1366
      %v1692 = vmul.f32 %v1670, %v1367
      %v1693 = vmul.f32 %v1670, %v1368
      %v1694 = vmul.f32 %v1670, %v1369
      %v1695 = vmul.f32 %v1670, %v1370
      %v1696 = vmul.f32 %v1670, %v1371
      %v1697 = vmul.f32 %v1670, %v1372
      %v1698 = vmul.f32 %v1670, %v1373
      %v1699 = vmul.f32 %v1670, %v1374
      %v1700 = vmul.f32 %v1670, %v1375
      %v1701 = vmul.f32 %v1670, %v1376
      %v1702 = vmul.f32 %v1670, %v1377
      %v1703 = vmul.f32 %v1670, %v1378
      %v1704 = vmul.f32 %v1670, %v1379
      %v1705 = vmul.f32 %v1670, %v1380
      %v1706 = vmul.f32 %v1670, %v1381
      %v1707 = vmul.f32 %v1670, %v1382
      %v1708 = vmul.f32 %v1670, %v1383
      %v1709 = vmul.f32 %v1670, %v1384
      %v1710 = vmul.f32 %v1670, %v1385
      %v1711 = vmul.f32 %v1670, %v1386
      %v1712 = vmul.f32 %v1670, %v1387
      %v1713 = vmul.f32 %v1670, %v1388
      %v1714 = vmul.f32 %v1670, %v1389
      %v1715 = vmul.f32 %v1670, %v1390
      %v1716 = vmul.f32 %v1670, %v1391
      %v1717 = vmul.f32 %v1670, %v1392
      %v1718 = vmul.f32 %v1670, %v1393
      %vm1767 = vcmask 1045504
      %v1768 = vrot.slane %v1671, 2
      %v1769 = vrot.slane %v1672, 2
      %v1770 = vsel %vm1767, %v1768, %v1769
      %v1771 = vrot.slane %v1673, 2
      %v1772 = vsel %vm1767, %v1769, %v1771
      %v1773 = vrot.slane %v1674, 2
      %v1774 = vrot.slane %v1675, 2
      %v1775 = vsel %vm1767, %v1773, %v1774
      %v1776 = vrot.slane %v1676, 2
      %v1777 = vsel %vm1767, %v1774, %v1776
      %v1778 = vrot.slane %v1677, 2
      %v1779 = vrot.slane %v1678, 2
      %v1780 = vsel %vm1767, %v1778, %v1779
      %v1781 = vrot.slane %v1679, 2
      %v1782 = vsel %vm1767, %v1779, %v1781
      %v1783 = vrot.slane %v1680, 2
      %v1784 = vrot.slane %v1681, 2
      %v1785 = vsel %vm1767, %v1783, %v1784
      %v1786 = vrot.slane %v1682, 2
      %v1787 = vsel %vm1767, %v1784, %v1786
      %v1788 = vrot.slane %v1683, 2
      %v1789 = vrot.slane %v1684, 2
      %v1790 = vsel %vm1767, %v1788, %v1789
      %v1791 = vrot.slane %v1685, 2
      %v1792 = vsel %vm1767, %v1789, %v1791
      %v1793 = vrot.slane %v1686, 2
      %v1794 = vrot.slane %v1687, 2
      %v1795 = vsel %vm1767, %v1793, %v1794
      %v1796 = vrot.slane %v1688, 2
      %v1797 = vsel %vm1767, %v1794, %v1796
      %v1798 = vrot.slane %v1689, 2
      %v1799 = vrot.slane %v1690, 2
      %v1800 = vsel %vm1767, %v1798, %v1799
      %v1801 = vrot.slane %v1691, 2
      %v1802 = vsel %vm1767, %v1799, %v1801
      %v1803 = vrot.slane %v1692, 2
      %v1804 = vrot.slane %v1693, 2
      %v1805 = vsel %vm1767, %v1803, %v1804
      %v1806 = vrot.slane %v1694, 2
      %v1807 = vsel %vm1767, %v1804, %v1806
      %v1808 = vrot.slane %v1695, 2
      %v1809 = vrot.slane %v1696, 2
      %v1810 = vsel %vm1767, %v1808, %v1809
      %v1811 = vrot.slane %v1697, 2
      %v1812 = vsel %vm1767, %v1809, %v1811
      %v1813 = vrot.slane %v1698, 2
      %v1814 = vrot.slane %v1699, 2
      %v1815 = vsel %vm1767, %v1813, %v1814
      %v1816 = vrot.slane %v1700, 2
      %v1817 = vsel %vm1767, %v1814, %v1816
      %v1818 = vrot.slane %v1701, 2
      %v1819 = vrot.slane %v1702, 2
      %v1820 = vsel %vm1767, %v1818, %v1819
      %v1821 = vrot.slane %v1703, 2
      %v1822 = vsel %vm1767, %v1819, %v1821
      %v1823 = vrot.slane %v1704, 2
      %v1824 = vrot.slane %v1705, 2
      %v1825 = vsel %vm1767, %v1823, %v1824
      %v1826 = vrot.slane %v1706, 2
      %v1827 = vsel %vm1767, %v1824, %v1826
      %v1828 = vrot.slane %v1707, 2
      %v1829 = vrot.slane %v1708, 2
      %v1830 = vsel %vm1767, %v1828, %v1829
      %v1831 = vrot.slane %v1709, 2
      %v1832 = vsel %vm1767, %v1829, %v1831
      %v1833 = vrot.slane %v1710, 2
      %v1834 = vrot.slane %v1711, 2
      %v1835 = vsel %vm1767, %v1833, %v1834
      %v1836 = vrot.slane %v1712, 2
      %v1837 = vsel %vm1767, %v1834, %v1836
      %v1838 = vrot.slane %v1713, 2
      %v1839 = vrot.slane %v1714, 2
      %v1840 = vsel %vm1767, %v1838, %v1839
      %v1841 = vrot.slane %v1715, 2
      %v1842 = vsel %vm1767, %v1839, %v1841
      %v1843 = vrot.slane %v1716, 2
      %v1844 = vrot.slane %v1717, 2
      %v1845 = vsel %vm1767, %v1843, %v1844
      %v1846 = vrot.slane %v1718, 2
      %v1847 = vsel %vm1767, %v1844, %v1846
      %v1880 = vadd.f32 %v1638, %v1770
      %v1881 = vadd.f32 %v1639, %v1772
      %v1882 = vadd.f32 %v1640, %v1775
      %v1883 = vadd.f32 %v1641, %v1777
      %v1884 = vadd.f32 %v1642, %v1780
      %v1885 = vadd.f32 %v1643, %v1782
      %v1886 = vadd.f32 %v1644, %v1785
      %v1887 = vadd.f32 %v1645, %v1787
      %v1888 = vadd.f32 %v1646, %v1790
      %v1889 = vadd.f32 %v1647, %v1792
      %v1890 = vadd.f32 %v1648, %v1795
      %v1891 = vadd.f32 %v1649, %v1797
      %v1892 = vadd.f32 %v1650, %v1800
      %v1893 = vadd.f32 %v1651, %v1802
      %v1894 = vadd.f32 %v1652, %v1805
      %v1895 = vadd.f32 %v1653, %v1807
      %v1896 = vadd.f32 %v1654, %v1810
      %v1897 = vadd.f32 %v1655, %v1812
      %v1898 = vadd.f32 %v1656, %v1815
      %v1899 = vadd.f32 %v1657, %v1817
      %v1900 = vadd.f32 %v1658, %v1820
      %v1901 = vadd.f32 %v1659, %v1822
      %v1902 = vadd.f32 %v1660, %v1825
      %v1903 = vadd.f32 %v1661, %v1827
      %v1904 = vadd.f32 %v1662, %v1830
      %v1905 = vadd.f32 %v1663, %v1832
      %v1906 = vadd.f32 %v1664, %v1835
      %v1907 = vadd.f32 %v1665, %v1837
      %v1908 = vadd.f32 %v1666, %v1840
      %v1909 = vadd.f32 %v1667, %v1842
      %v1910 = vadd.f32 %v1668, %v1845
      %v1911 = vadd.f32 %v1669, %v1847
      %v1912 = vld [vmem:[%s4] sm:$0x1]
      %1914 = vset.pattern.permute.xlu0 0
      %1915 = vperm.xlu0 %1914, %v1880
      %v1916 = vpop.permute.xlu0 %1915
      %1919 = vset.pattern.permute.xlu0 0
      %1920 = vperm.xlu0 %1919, %v1881
      %v1921 = vpop.permute.xlu0 %1920
      %1924 = vset.pattern.permute.xlu0 0
      %1925 = vperm.xlu0 %1924, %v1882
      %v1926 = vpop.permute.xlu0 %1925
      %1929 = vset.pattern.permute.xlu0 0
      %1930 = vperm.xlu0 %1929, %v1883
      %v1931 = vpop.permute.xlu0 %1930
      %1934 = vset.pattern.permute.xlu0 0
      %1935 = vperm.xlu0 %1934, %v1884
      %v1936 = vpop.permute.xlu0 %1935
      %1939 = vset.pattern.permute.xlu0 0
      %1940 = vperm.xlu0 %1939, %v1885
      %v1941 = vpop.permute.xlu0 %1940
      %1944 = vset.pattern.permute.xlu0 0
      %1945 = vperm.xlu0 %1944, %v1886
      %v1946 = vpop.permute.xlu0 %1945
      %1949 = vset.pattern.permute.xlu0 0
      %1950 = vperm.xlu0 %1949, %v1887
      %v1951 = vpop.permute.xlu0 %1950
      %1954 = vset.pattern.permute.xlu0 0
      %1955 = vperm.xlu0 %1954, %v1888
      %v1956 = vpop.permute.xlu0 %1955
      %1959 = vset.pattern.permute.xlu0 0
      %1960 = vperm.xlu0 %1959, %v1889
      %v1961 = vpop.permute.xlu0 %1960
      %1964 = vset.pattern.permute.xlu0 0
      %1965 = vperm.xlu0 %1964, %v1890
      %v1966 = vpop.permute.xlu0 %1965
      %1969 = vset.pattern.permute.xlu0 0
      %1970 = vperm.xlu0 %1969, %v1891
      %v1971 = vpop.permute.xlu0 %1970
      %1974 = vset.pattern.permute.xlu0 0
      %1975 = vperm.xlu0 %1974, %v1892
      %v1976 = vpop.permute.xlu0 %1975
      %1979 = vset.pattern.permute.xlu0 0
      %1980 = vperm.xlu0 %1979, %v1893
      %v1981 = vpop.permute.xlu0 %1980
      %1984 = vset.pattern.permute.xlu0 0
      %1985 = vperm.xlu0 %1984, %v1894
      %v1986 = vpop.permute.xlu0 %1985
      %1989 = vset.pattern.permute.xlu0 0
      %1990 = vperm.xlu0 %1989, %v1895
      %v1991 = vpop.permute.xlu0 %1990
      %1994 = vset.pattern.permute.xlu0 0
      %1995 = vperm.xlu0 %1994, %v1896
      %v1996 = vpop.permute.xlu0 %1995
      %1999 = vset.pattern.permute.xlu0 0
      %2000 = vperm.xlu0 %1999, %v1897
      %v2001 = vpop.permute.xlu0 %2000
      %2004 = vset.pattern.permute.xlu0 0
      %2005 = vperm.xlu0 %2004, %v1898
      %v2006 = vpop.permute.xlu0 %2005
      %2009 = vset.pattern.permute.xlu0 0
      %2010 = vperm.xlu0 %2009, %v1899
      %v2011 = vpop.permute.xlu0 %2010
      %2014 = vset.pattern.permute.xlu0 0
      %2015 = vperm.xlu0 %2014, %v1900
      %v2016 = vpop.permute.xlu0 %2015
      %2019 = vset.pattern.permute.xlu0 0
      %2020 = vperm.xlu0 %2019, %v1901
      %v2021 = vpop.permute.xlu0 %2020
      %2024 = vset.pattern.permute.xlu0 0
      %2025 = vperm.xlu0 %2024, %v1902
      %v2026 = vpop.permute.xlu0 %2025
      %2029 = vset.pattern.permute.xlu0 0
      %2030 = vperm.xlu0 %2029, %v1903
      %v2031 = vpop.permute.xlu0 %2030
      %2034 = vset.pattern.permute.xlu0 0
      %2035 = vperm.xlu0 %2034, %v1904
      %v2036 = vpop.permute.xlu0 %2035
      %2039 = vset.pattern.permute.xlu0 0
      %2040 = vperm.xlu0 %2039, %v1905
      %v2041 = vpop.permute.xlu0 %2040
      %2044 = vset.pattern.permute.xlu0 0
      %2045 = vperm.xlu0 %2044, %v1906
      %v2046 = vpop.permute.xlu0 %2045
      %2049 = vset.pattern.permute.xlu0 0
      %2050 = vperm.xlu0 %2049, %v1907
      %v2051 = vpop.permute.xlu0 %2050
      %2054 = vset.pattern.permute.xlu0 0
      %2055 = vperm.xlu0 %2054, %v1908
      %v2056 = vpop.permute.xlu0 %2055
      %2059 = vset.pattern.permute.xlu0 0
      %2060 = vperm.xlu0 %2059, %v1909
      %v2061 = vpop.permute.xlu0 %2060
      %2064 = vset.pattern.permute.xlu0 0
      %2065 = vperm.xlu0 %2064, %v1910
      %v2066 = vpop.permute.xlu0 %2065
      %2069 = vset.pattern.permute.xlu0 0
      %2070 = vperm.xlu0 %2069, %v1911
      %v2071 = vpop.permute.xlu0 %2070
      %v2074 = vperm.slane %v1912, 0
      %v2076 = vmul.f32 %v1916, %v2074
      %v2077 = vmul.f32 %v1921, %v2074
      %v2078 = vmul.f32 %v1926, %v2074
      %v2079 = vmul.f32 %v1931, %v2074
      %v2080 = vmul.f32 %v1936, %v2074
      %v2081 = vmul.f32 %v1941, %v2074
      %v2082 = vmul.f32 %v1946, %v2074
      %v2083 = vmul.f32 %v1951, %v2074
      %v2084 = vmul.f32 %v1956, %v2074
      %v2085 = vmul.f32 %v1961, %v2074
      %v2086 = vmul.f32 %v1966, %v2074
      %v2087 = vmul.f32 %v1971, %v2074
      %v2088 = vmul.f32 %v1976, %v2074
      %v2089 = vmul.f32 %v1981, %v2074
      %v2090 = vmul.f32 %v1986, %v2074
      %v2091 = vmul.f32 %v1991, %v2074
      %v2092 = vmul.f32 %v1996, %v2074
      %v2093 = vmul.f32 %v2001, %v2074
      %v2094 = vmul.f32 %v2006, %v2074
      %v2095 = vmul.f32 %v2011, %v2074
      %v2096 = vmul.f32 %v2016, %v2074
      %v2097 = vmul.f32 %v2021, %v2074
      %v2098 = vmul.f32 %v2026, %v2074
      %v2099 = vmul.f32 %v2031, %v2074
      %v2100 = vmul.f32 %v2036, %v2074
      %v2101 = vmul.f32 %v2041, %v2074
      %v2102 = vmul.f32 %v2046, %v2074
      %v2103 = vmul.f32 %v2051, %v2074
      %v2104 = vmul.f32 %v2056, %v2074
      %v2105 = vmul.f32 %v2061, %v2074
      %v2106 = vmul.f32 %v2066, %v2074
      %v2107 = vmul.f32 %v2071, %v2074
      %vm2108 = vcmask 64512
      %2109 = vst.msk [vmem:[%s343] sm:$0xff] %vm2108, %v2076
      %2110 = vst.msk [vmem:[%s343 + $0x8] sm:$0xff] %vm2108, %v2077
      %2111 = vst.msk [vmem:[%s343 + $0x10] sm:$0xff] %vm2108, %v2078
      %2112 = vst.msk [vmem:[%s343 + $0x18] sm:$0xff] %vm2108, %v2079
      %2113 = vst.msk [vmem:[%s343 + $0x20] sm:$0xff] %vm2108, %v2080
      %2114 = vst.msk [vmem:[%s343 + $0x28] sm:$0xff] %vm2108, %v2081
      %2115 = vst.msk [vmem:[%s343 + $0x30] sm:$0xff] %vm2108, %v2082
      %2116 = vst.msk [vmem:[%s343 + $0x38] sm:$0xff] %vm2108, %v2083
      %2117 = vst.msk [vmem:[%s343 + $0x40] sm:$0xff] %vm2108, %v2084
      %2118 = vst.msk [vmem:[%s343 + $0x48] sm:$0xff] %vm2108, %v2085
      %2119 = vst.msk [vmem:[%s343 + $0x50] sm:$0xff] %vm2108, %v2086
      %2120 = vst.msk [vmem:[%s343 + $0x58] sm:$0xff] %vm2108, %v2087
      %2121 = vst.msk [vmem:[%s343 + $0x60] sm:$0xff] %vm2108, %v2088
      %2122 = vst.msk [vmem:[%s343 + $0x68] sm:$0xff] %vm2108, %v2089
      %2123 = vst.msk [vmem:[%s343 + $0x70] sm:$0xff] %vm2108, %v2090
      %2124 = vst.msk [vmem:[%s343 + $0x78] sm:$0xff] %vm2108, %v2091
      %2125 = vst.msk [vmem:[%s343 + $0x80] sm:$0xff] %vm2108, %v2092
      %2126 = vst.msk [vmem:[%s343 + $0x88] sm:$0xff] %vm2108, %v2093
      %2127 = vst.msk [vmem:[%s343 + $0x90] sm:$0xff] %vm2108, %v2094
      %2128 = vst.msk [vmem:[%s343 + $0x98] sm:$0xff] %vm2108, %v2095
      %2129 = vst.msk [vmem:[%s343 + $0xa0] sm:$0xff] %vm2108, %v2096
      %2130 = vst.msk [vmem:[%s343 + $0xa8] sm:$0xff] %vm2108, %v2097
      %2131 = vst.msk [vmem:[%s343 + $0xb0] sm:$0xff] %vm2108, %v2098
      %2132 = vst.msk [vmem:[%s343 + $0xb8] sm:$0xff] %vm2108, %v2099
      %2133 = vst.msk [vmem:[%s343 + $0xc0] sm:$0xff] %vm2108, %v2100
      %2134 = vst.msk [vmem:[%s343 + $0xc8] sm:$0xff] %vm2108, %v2101
      %2135 = vst.msk [vmem:[%s343 + $0xd0] sm:$0xff] %vm2108, %v2102
      %2136 = vst.msk [vmem:[%s343 + $0xd8] sm:$0xff] %vm2108, %v2103
      %2137 = vst.msk [vmem:[%s343 + $0xe0] sm:$0xff] %vm2108, %v2104
      %2138 = vst.msk [vmem:[%s343 + $0xe8] sm:$0xff] %vm2108, %v2105
      %2139 = vst.msk [vmem:[%s343 + $0xf0] sm:$0xff] %vm2108, %v2106
      %2140 = vst.msk [vmem:[%s343 + $0xf8] sm:$0xff] %vm2108, %v2107
      %v2141 = vsel %vm2108, %v2076, 0.0
      %v2142 = vsel %vm2108, %v2077, 0.0
      %v2143 = vadd.f32 %v2141, %v2142
      %v2144 = vsel %vm2108, %v2078, 0.0
      %v2145 = vadd.f32 %v2143, %v2144
      %v2146 = vsel %vm2108, %v2079, 0.0
      %v2147 = vadd.f32 %v2145, %v2146
      %v2148 = vsel %vm2108, %v2080, 0.0
      %v2149 = vadd.f32 %v2147, %v2148
      %v2150 = vsel %vm2108, %v2081, 0.0
      %v2151 = vadd.f32 %v2149, %v2150
      %v2152 = vsel %vm2108, %v2082, 0.0
      %v2153 = vadd.f32 %v2151, %v2152
      %v2154 = vsel %vm2108, %v2083, 0.0
      %v2155 = vadd.f32 %v2153, %v2154
      %v2156 = vsel %vm2108, %v2084, 0.0
      %v2157 = vadd.f32 %v2155, %v2156
      %v2158 = vsel %vm2108, %v2085, 0.0
      %v2159 = vadd.f32 %v2157, %v2158
      %v2160 = vsel %vm2108, %v2086, 0.0
      %v2161 = vadd.f32 %v2159, %v2160
      %v2162 = vsel %vm2108, %v2087, 0.0
      %v2163 = vadd.f32 %v2161, %v2162
      %v2164 = vsel %vm2108, %v2088, 0.0
      %v2165 = vadd.f32 %v2163, %v2164
      %v2166 = vsel %vm2108, %v2089, 0.0
      %v2167 = vadd.f32 %v2165, %v2166
      %v2168 = vsel %vm2108, %v2090, 0.0
      %v2169 = vadd.f32 %v2167, %v2168
      %v2170 = vsel %vm2108, %v2091, 0.0
      %v2171 = vadd.f32 %v2169, %v2170
      %v2172 = vsel %vm2108, %v2092, 0.0
      %v2173 = vadd.f32 %v2171, %v2172
      %v2174 = vsel %vm2108, %v2093, 0.0
      %v2175 = vadd.f32 %v2173, %v2174
      %v2176 = vsel %vm2108, %v2094, 0.0
      %v2177 = vadd.f32 %v2175, %v2176
      %v2178 = vsel %vm2108, %v2095, 0.0
      %v2179 = vadd.f32 %v2177, %v2178
      %v2180 = vsel %vm2108, %v2096, 0.0
      %v2181 = vadd.f32 %v2179, %v2180
      %v2182 = vsel %vm2108, %v2097, 0.0
      %v2183 = vadd.f32 %v2181, %v2182
      %v2184 = vsel %vm2108, %v2098, 0.0
      %v2185 = vadd.f32 %v2183, %v2184
      %v2186 = vsel %vm2108, %v2099, 0.0
      %v2187 = vadd.f32 %v2185, %v2186
      %v2188 = vsel %vm2108, %v2100, 0.0
      %v2189 = vadd.f32 %v2187, %v2188
      %v2190 = vsel %vm2108, %v2101, 0.0
      %v2191 = vadd.f32 %v2189, %v2190
      %v2192 = vsel %vm2108, %v2102, 0.0
      %v2193 = vadd.f32 %v2191, %v2192
      %v2194 = vsel %vm2108, %v2103, 0.0
      %v2195 = vadd.f32 %v2193, %v2194
      %v2196 = vsel %vm2108, %v2104, 0.0
      %v2197 = vadd.f32 %v2195, %v2196
      %v2198 = vsel %vm2108, %v2105, 0.0
      %v2199 = vadd.f32 %v2197, %v2198
      %v2200 = vsel %vm2108, %v2106, 0.0
      %v2201 = vadd.f32 %v2199, %v2200
      %v2202 = vsel %vm2108, %v2107, 0.0
      %v2203 = vadd.f32 %v2201, %v2202
      %v2204 = vrot.slane %v2203, 4
      %v2205 = vadd.f32 %v2203, %v2204
      %v2206 = vrot.slane %v2205, 2
      %v2207 = vadd.f32 %v2205, %v2206
      %v2208 = vrot.slane %v2207, 1
      %v2209 = vadd.f32 %v2207, %v2208
      %vm2210 = vcmask 57344
      %2211 = vst.msk [vmem:[%s346] sm:$0x1] %vm2210, %v2209
      %v2212 = vmul.f32 %v2076, %v2076
      %v2213 = vmul.f32 %v2077, %v2077
      %v2214 = vmul.f32 %v2078, %v2078
      %v2215 = vmul.f32 %v2079, %v2079
      %v2216 = vmul.f32 %v2080, %v2080
      %v2217 = vmul.f32 %v2081, %v2081
      %v2218 = vmul.f32 %v2082, %v2082
      %v2219 = vmul.f32 %v2083, %v2083
      %v2220 = vmul.f32 %v2084, %v2084
      %v2221 = vmul.f32 %v2085, %v2085
      %v2222 = vmul.f32 %v2086, %v2086
      %v2223 = vmul.f32 %v2087, %v2087
      %v2224 = vmul.f32 %v2088, %v2088
      %v2225 = vmul.f32 %v2089, %v2089
      %v2226 = vmul.f32 %v2090, %v2090
      %v2227 = vmul.f32 %v2091, %v2091
      %v2228 = vmul.f32 %v2092, %v2092
      %v2229 = vmul.f32 %v2093, %v2093
      %v2230 = vmul.f32 %v2094, %v2094
      %v2231 = vmul.f32 %v2095, %v2095
      %v2232 = vmul.f32 %v2096, %v2096
      %v2233 = vmul.f32 %v2097, %v2097
      %v2234 = vmul.f32 %v2098, %v2098
      %v2235 = vmul.f32 %v2099, %v2099
      %v2236 = vmul.f32 %v2100, %v2100
      %v2237 = vmul.f32 %v2101, %v2101
      %v2238 = vmul.f32 %v2102, %v2102
      %v2239 = vmul.f32 %v2103, %v2103
      %v2240 = vmul.f32 %v2104, %v2104
      %v2241 = vmul.f32 %v2105, %v2105
      %v2242 = vmul.f32 %v2106, %v2106
      %v2243 = vmul.f32 %v2107, %v2107
      %v2244 = vsel %vm2108, %v2212, 0.0
      %v2245 = vsel %vm2108, %v2213, 0.0
      %v2246 = vadd.f32 %v2244, %v2245
      %v2247 = vsel %vm2108, %v2214, 0.0
      %v2248 = vadd.f32 %v2246, %v2247
      %v2249 = vsel %vm2108, %v2215, 0.0
      %v2250 = vadd.f32 %v2248, %v2249
      %v2251 = vsel %vm2108, %v2216, 0.0
      %v2252 = vadd.f32 %v2250, %v2251
      %v2253 = vsel %vm2108, %v2217, 0.0
      %v2254 = vadd.f32 %v2252, %v2253
      %v2255 = vsel %vm2108, %v2218, 0.0
      %v2256 = vadd.f32 %v2254, %v2255
      %v2257 = vsel %vm2108, %v2219, 0.0
      %v2258 = vadd.f32 %v2256, %v2257
      %v2259 = vsel %vm2108, %v2220, 0.0
      %v2260 = vadd.f32 %v2258, %v2259
      %v2261 = vsel %vm2108, %v2221, 0.0
      %v2262 = vadd.f32 %v2260, %v2261
      %v2263 = vsel %vm2108, %v2222, 0.0
      %v2264 = vadd.f32 %v2262, %v2263
      %v2265 = vsel %vm2108, %v2223, 0.0
      %v2266 = vadd.f32 %v2264, %v2265
      %v2267 = vsel %vm2108, %v2224, 0.0
      %v2268 = vadd.f32 %v2266, %v2267
      %v2269 = vsel %vm2108, %v2225, 0.0
      %v2270 = vadd.f32 %v2268, %v2269
      %v2271 = vsel %vm2108, %v2226, 0.0
      %v2272 = vadd.f32 %v2270, %v2271
      %v2273 = vsel %vm2108, %v2227, 0.0
      %v2274 = vadd.f32 %v2272, %v2273
      %v2275 = vsel %vm2108, %v2228, 0.0
      %v2276 = vadd.f32 %v2274, %v2275
      %v2277 = vsel %vm2108, %v2229, 0.0
      %v2278 = vadd.f32 %v2276, %v2277
      %v2279 = vsel %vm2108, %v2230, 0.0
      %v2280 = vadd.f32 %v2278, %v2279
      %v2281 = vsel %vm2108, %v2231, 0.0
      %v2282 = vadd.f32 %v2280, %v2281
      %v2283 = vsel %vm2108, %v2232, 0.0
      %v2284 = vadd.f32 %v2282, %v2283
      %v2285 = vsel %vm2108, %v2233, 0.0
      %v2286 = vadd.f32 %v2284, %v2285
      %v2287 = vsel %vm2108, %v2234, 0.0
      %v2288 = vadd.f32 %v2286, %v2287
      %v2289 = vsel %vm2108, %v2235, 0.0
      %v2290 = vadd.f32 %v2288, %v2289
      %v2291 = vsel %vm2108, %v2236, 0.0
      %v2292 = vadd.f32 %v2290, %v2291
      %v2293 = vsel %vm2108, %v2237, 0.0
      %v2294 = vadd.f32 %v2292, %v2293
      %v2295 = vsel %vm2108, %v2238, 0.0
      %v2296 = vadd.f32 %v2294, %v2295
      %v2297 = vsel %vm2108, %v2239, 0.0
      %v2298 = vadd.f32 %v2296, %v2297
      %v2299 = vsel %vm2108, %v2240, 0.0
      %v2300 = vadd.f32 %v2298, %v2299
      %v2301 = vsel %vm2108, %v2241, 0.0
      %v2302 = vadd.f32 %v2300, %v2301
      %v2303 = vsel %vm2108, %v2242, 0.0
      %v2304 = vadd.f32 %v2302, %v2303
      %v2305 = vsel %vm2108, %v2243, 0.0
      %v2306 = vadd.f32 %v2304, %v2305
      %v2307 = vrot.slane %v2306, 4
      %v2308 = vadd.f32 %v2306, %v2307
      %v2309 = vrot.slane %v2308, 2
      %v2310 = vadd.f32 %v2308, %v2309
      %v2311 = vrot.slane %v2310, 1
      %v2312 = vadd.f32 %v2310, %v2311
      %2313 = vst.msk [vmem:[%s349] sm:$0x1] %vm2210, %v2312
      %p2314 = scmp.lt.s32.totalorder %s21, 1
      %s2315 = scalar_select %p2314, %s21, 1
      %s2316 = smul.addr %s2315, 32
      %s2317 = smul.addr %s2316, 8
      %s2318 = scalar_lea.vmem %s7, %s2317
      %p2319 = scmp.lt.s32.totalorder %s21, 1
      %s2320 = scalar_select %p2319, %s21, 1
      %s2321 = scalar_lea.vmem %s8, %s2320
      %p2322 = scmp.lt.s32.totalorder %s21, 1
      %s2323 = scalar_select %p2322, %s21, 1
      %s2324 = scalar_lea.vmem %s9, %s2323
      // Predicated region
      $region49: #{double_conv_forward.3} parent=47 // pred_check
        %p2325 = pneg %p191
      $region50: #{double_conv_forward.3} parent=47 // pred_check_branch
        %2327 = sbr.rel (%p2325) target = $region52
      $region51: #{double_conv_forward.3} parent=47 // pred_region
        _
      $region52: #{double_conv_forward.3} parent=47 // pred_fallthru
        _
      // Predicated region
      $region53: #{double_conv_forward.3} parent=47 // pred_check
        %p2328 = pneg %p217
      $region54: #{double_conv_forward.3} parent=47 // pred_check_branch
        %2330 = sbr.rel (%p2328) target = $region56
      $region55: #{double_conv_forward.3} parent=47 // pred_region
        _
      $region56: #{double_conv_forward.3} parent=47 // pred_fallthru
        _
      // Predicated region
      $region57: #{double_conv_forward.3} parent=47 // pred_check
        %p2331 = pneg %p243
      $region58: #{double_conv_forward.3} parent=47 // pred_check_branch
        %2333 = sbr.rel (%p2331) target = $region60
      $region59: #{double_conv_forward.3} parent=47 // pred_region
        _
      $region60: #{double_conv_forward.3} parent=47 // pred_fallthru
        _
    $region48: #{double_conv_forward.3} parent=5 // pred_fallthru
      _
    %p2334 = scmp.le.s32.totalorder 2, %s16
    // Predicated region
    $region61: #{double_conv_forward.3} parent=5 // pred_check
      %p2335 = pneg %p2334
    $region62: #{double_conv_forward.3} parent=5 // pred_check_branch
      %2337 = sbr.rel (%p2335) target = $region64
    $region63: #{double_conv_forward.3} parent=5 // pred_region
      %s2338 = ssub.s32 %s16, 2
      // Predicated region
      $region65: #{double_conv_forward.3} parent=63 // pred_check
        %p2339 = pneg %p197
      $region66: #{double_conv_forward.3} parent=63 // pred_check_branch
        %2341 = sbr.rel (%p2339) target = $region68
      $region67: #{double_conv_forward.3} parent=63 // pred_region
        %p2342 = scmp.lt.s32.totalorder %s22, 1
        %s2343 = scalar_select %p2342, %s22, 1
        %s2344 = smul.addr %s2343, 32
        %s2345 = smul.addr %s2344, 8
        %s2346 = scalar_lea.vmem %s7, %s2345
      $region68: #{double_conv_forward.3} parent=63 // pred_fallthru
        _
      // Predicated region
      $region69: #{double_conv_forward.3} parent=63 // pred_check
        %p2347 = pneg %p223
      $region70: #{double_conv_forward.3} parent=63 // pred_check_branch
        %2349 = sbr.rel (%p2347) target = $region72
      $region71: #{double_conv_forward.3} parent=63 // pred_region
        %p2350 = scmp.lt.s32.totalorder %s22, 1
        %s2351 = scalar_select %p2350, %s22, 1
        %s2352 = scalar_lea.vmem %s8, %s2351
      $region72: #{double_conv_forward.3} parent=63 // pred_fallthru
        _
      // Predicated region
      $region73: #{double_conv_forward.3} parent=63 // pred_check
        %p2353 = pneg %p249
      $region74: #{double_conv_forward.3} parent=63 // pred_check_branch
        %2355 = sbr.rel (%p2353) target = $region76
      $region75: #{double_conv_forward.3} parent=63 // pred_region
        %p2356 = scmp.lt.s32.totalorder %s22, 1
        %s2357 = scalar_select %p2356, %s22, 1
        %s2358 = scalar_lea.vmem %s9, %s2357
      $region76: #{double_conv_forward.3} parent=63 // pred_fallthru
        _
    $region64: #{double_conv_forward.3} parent=5 // pred_fallthru
      _
  $region6: #{double_conv_forward.3} parent=0 // loop_footer
    %s20 = sadd.s32 1, %s16
  $region7: #{double_conv_forward.3} parent=0 // loop_footer_branch
    %15 = sbr.rel target = $region3
  $region8: #{double_conv_forward.3} parent=0 // loop_exit
    _

// kernel: double_conv_forward.4
$region0: #{double_conv_forward.4}
  #allocation0 [shape = 'u32[]', space=smem, size = 0x4, offset = 0x4, fixed_abs, tag = 'smem constant byte address 0x4 - core index']
  #allocation1 [shape = 'u32[72,128]{1,0:T(1,128)}', space=vmem, size = 0x9000, scoped, tag = 'internal scratch']
  #allocation2 [shape = 'f32[18,18,2]{2,1,0:T(8,128)}', space=vmem, size = 0x36000, scoped, tag = 'scratch operand']
  %s0 = inlined_call_operand.vmem [shape: f32[2,16,16,8], index: 0, kind: input, shape index: {}]
  %s1 = inlined_call_operand.vmem [shape: f32[8,2], index: 1, kind: input, shape index: {}]
  %s2 = inlined_call_operand.vmem [shape: f32[3,2], index: 2, kind: input, shape index: {}]
  %s3 = inlined_call_operand.vmem [shape: f32[3,2], index: 3, kind: input, shape index: {}]
  %s4 = inlined_call_operand.vmem [shape: f32[2,8], index: 4, kind: input, shape index: {}]
  %s5 = inlined_call_operand.vmem [shape: f32[1,8], index: 5, kind: input, shape index: {}]
  %s6 = inlined_call_operand.vmem [shape: f32[1,8], index: 6, kind: input, shape index: {}]
  %s7 = inlined_call_operand.vmem [shape: f32[2,16,16,8], index: 7, kind: output, shape index: {0}]
  %s8 = inlined_call_operand.vmem [shape: f32[2,1,8], index: 8, kind: output, shape index: {1}]
  %s9 = inlined_call_operand.vmem [shape: f32[2,1,8], index: 9, kind: output, shape index: {2}]
  %10 = xla_tuple %s7, %s8, %s9
  %s11 = sld [smem:[#allocation0]]
  $region77: #{double_conv_forward.4} parent=0
    _
  %s13 = ssub.s32 1, %s11
  %s14 = scalar_select 0, %s13, %s11
  loop: start=0, step=1, limit=4
  $region2: #{double_conv_forward.4} parent=0 // loop_pre_header
    _
  $region3: #{double_conv_forward.4} parent=0 // loop_header
    %s16 = sphi 0, %s20
    %p17 = scmp.ge.s32.totalorder %s16, 4
    %s26 = sphi 0, %s28
    %s29 = sphi 0, %s26
    %s30 = sphi 0, %s29
    %s46 = sphi 0, %s30
    %s50 = sphi 0, %s50
    %s52 = sphi 0, %s50
    %s53 = sphi 0, %s52
    %s67 = sphi 0, %s53
    %s71 = sphi 0, %s71
    %s73 = sphi 0, %s71
    %s74 = sphi 0, %s73
    %s88 = sphi 0, %s74
    %s92 = sphi 0, %s92
    %s94 = sphi 0, %s92
    %s95 = sphi 0, %s94
    %s109 = sphi 0, %s95
    %s113 = sphi 0, %s113
    %s115 = sphi 0, %s113
    %s116 = sphi 0, %s115
    %s130 = sphi 0, %s116
    %s134 = sphi 0, %s134
    %s136 = sphi 0, %s134
    %s137 = sphi 0, %s136
    %s151 = sphi 0, %s137
    %s155 = sphi 0, %s155
    %s157 = sphi 0, %s155
    %s158 = sphi 0, %s157
    %s172 = sphi 0, %s158
    %s178 = sphi 0, %s180
    %s181 = sphi 0, %s178
    %s182 = sphi 0, %s181
    %s198 = sphi 0, %s182
    %s204 = sphi 0, %s206
    %s207 = sphi 0, %s204
    %s208 = sphi 0, %s207
    %s224 = sphi 0, %s208
    %s230 = sphi 0, %s232
    %s233 = sphi 0, %s230
    %s234 = sphi 0, %s233
    %s250 = sphi 0, %s234
  $region4: #{double_conv_forward.4} parent=0 // loop_header_branch
    %19 = sbr.rel (%p17) target = $region8
  $region5: #{double_conv_forward.4} parent=0 // loop_body
    %s21 = ssub.s32 %s16, 1
    %s22 = ssub.s32 %s16, 2
    %s23 = sadd.s32 %s16, 1
    %s24 = ssub.s32 %s16, %s23
    %p25 = scmp.eq.s32.totalorder %s24, 0
    %s27 = sadd.s32 %s26, 1
    %s28 = scalar_select %p25, %s26, %s27
    %p31 = pneg %p25
    %p32 = scmp.eq.s32.totalorder %s16, 1
    %p33 = por %p31, %p32
    %p34 = scmp.ne.s32.totalorder %s26, %s29
    %p35 = scmp.eq.s32.totalorder %s16, 0
    %p36 = por %p34, %p35
    %p37 = scmp.ne.s32.totalorder %s26, %s29
    %p38 = scmp.eq.s32.totalorder %s21, 1
    %p39 = por %p37, %p38
    %p40 = scmp.ne.s32.totalorder %s29, %s30
    %p41 = scmp.eq.s32.totalorder %s21, 0
    %p42 = por %p40, %p41
    %p43 = scmp.ne.s32.totalorder %s29, %s30
    %p44 = scmp.eq.s32.totalorder %s22, 1
    %p45 = por %p43, %p44
    %p47 = scmp.ne.s32.totalorder %s30, %s46
    %p48 = scmp.eq.s32.totalorder %s22, 0
    %p49 = por %p47, %p48
    %s51 = sadd.s32 %s50, 1
    %p54 = scmp.eq.s32.totalorder %s16, 1
    %p55 = scmp.ne.s32.totalorder %s50, %s52
    %p56 = scmp.eq.s32.totalorder %s16, 0
    %p57 = por %p55, %p56
    %p58 = scmp.ne.s32.totalorder %s50, %s52
    %p59 = scmp.eq.s32.totalorder %s21, 1
    %p60 = por %p58, %p59
    %p61 = scmp.ne.s32.totalorder %s52, %s53
    %p62 = scmp.eq.s32.totalorder %s21, 0
    %p63 = por %p61, %p62
    %p64 = scmp.ne.s32.totalorder %s52, %s53
    %p65 = scmp.eq.s32.totalorder %s22, 1
    %p66 = por %p64, %p65
    %p68 = scmp.ne.s32.totalorder %s53, %s67
    %p69 = scmp.eq.s32.totalorder %s22, 0
    %p70 = por %p68, %p69
    %s72 = sadd.s32 %s71, 1
    %p75 = scmp.eq.s32.totalorder %s16, 1
    %p76 = scmp.ne.s32.totalorder %s71, %s73
    %p77 = scmp.eq.s32.totalorder %s16, 0
    %p78 = por %p76, %p77
    %p79 = scmp.ne.s32.totalorder %s71, %s73
    %p80 = scmp.eq.s32.totalorder %s21, 1
    %p81 = por %p79, %p80
    %p82 = scmp.ne.s32.totalorder %s73, %s74
    %p83 = scmp.eq.s32.totalorder %s21, 0
    %p84 = por %p82, %p83
    %p85 = scmp.ne.s32.totalorder %s73, %s74
    %p86 = scmp.eq.s32.totalorder %s22, 1
    %p87 = por %p85, %p86
    %p89 = scmp.ne.s32.totalorder %s74, %s88
    %p90 = scmp.eq.s32.totalorder %s22, 0
    %p91 = por %p89, %p90
    %s93 = sadd.s32 %s92, 1
    %p96 = scmp.eq.s32.totalorder %s16, 1
    %p97 = scmp.ne.s32.totalorder %s92, %s94
    %p98 = scmp.eq.s32.totalorder %s16, 0
    %p99 = por %p97, %p98
    %p100 = scmp.ne.s32.totalorder %s92, %s94
    %p101 = scmp.eq.s32.totalorder %s21, 1
    %p102 = por %p100, %p101
    %p103 = scmp.ne.s32.totalorder %s94, %s95
    %p104 = scmp.eq.s32.totalorder %s21, 0
    %p105 = por %p103, %p104
    %p106 = scmp.ne.s32.totalorder %s94, %s95
    %p107 = scmp.eq.s32.totalorder %s22, 1
    %p108 = por %p106, %p107
    %p110 = scmp.ne.s32.totalorder %s95, %s109
    %p111 = scmp.eq.s32.totalorder %s22, 0
    %p112 = por %p110, %p111
    %s114 = sadd.s32 %s113, 1
    %p117 = scmp.eq.s32.totalorder %s16, 1
    %p118 = scmp.ne.s32.totalorder %s113, %s115
    %p119 = scmp.eq.s32.totalorder %s16, 0
    %p120 = por %p118, %p119
    %p121 = scmp.ne.s32.totalorder %s113, %s115
    %p122 = scmp.eq.s32.totalorder %s21, 1
    %p123 = por %p121, %p122
    %p124 = scmp.ne.s32.totalorder %s115, %s116
    %p125 = scmp.eq.s32.totalorder %s21, 0
    %p126 = por %p124, %p125
    %p127 = scmp.ne.s32.totalorder %s115, %s116
    %p128 = scmp.eq.s32.totalorder %s22, 1
    %p129 = por %p127, %p128
    %p131 = scmp.ne.s32.totalorder %s116, %s130
    %p132 = scmp.eq.s32.totalorder %s22, 0
    %p133 = por %p131, %p132
    %s135 = sadd.s32 %s134, 1
    %p138 = scmp.eq.s32.totalorder %s16, 1
    %p139 = scmp.ne.s32.totalorder %s134, %s136
    %p140 = scmp.eq.s32.totalorder %s16, 0
    %p141 = por %p139, %p140
    %p142 = scmp.ne.s32.totalorder %s134, %s136
    %p143 = scmp.eq.s32.totalorder %s21, 1
    %p144 = por %p142, %p143
    %p145 = scmp.ne.s32.totalorder %s136, %s137
    %p146 = scmp.eq.s32.totalorder %s21, 0
    %p147 = por %p145, %p146
    %p148 = scmp.ne.s32.totalorder %s136, %s137
    %p149 = scmp.eq.s32.totalorder %s22, 1
    %p150 = por %p148, %p149
    %p152 = scmp.ne.s32.totalorder %s137, %s151
    %p153 = scmp.eq.s32.totalorder %s22, 0
    %p154 = por %p152, %p153
    %s156 = sadd.s32 %s155, 1
    %p159 = scmp.eq.s32.totalorder %s16, 1
    %p160 = scmp.ne.s32.totalorder %s155, %s157
    %p161 = scmp.eq.s32.totalorder %s16, 0
    %p162 = por %p160, %p161
    %p163 = scmp.ne.s32.totalorder %s155, %s157
    %p164 = scmp.eq.s32.totalorder %s21, 1
    %p165 = por %p163, %p164
    %p166 = scmp.ne.s32.totalorder %s157, %s158
    %p167 = scmp.eq.s32.totalorder %s21, 0
    %p168 = por %p166, %p167
    %p169 = scmp.ne.s32.totalorder %s157, %s158
    %p170 = scmp.eq.s32.totalorder %s22, 1
    %p171 = por %p169, %p170
    %p173 = scmp.ne.s32.totalorder %s158, %s172
    %p174 = scmp.eq.s32.totalorder %s22, 0
    %p175 = por %p173, %p174
    %s176 = ssub.s32 %s16, %s23
    %p177 = scmp.eq.s32.totalorder %s176, 0
    %s179 = sadd.s32 %s178, 1
    %s180 = scalar_select %p177, %s178, %s179
    %p183 = pneg %p177
    %p184 = scmp.eq.s32.totalorder %s16, 1
    %p185 = por %p183, %p184
    %p186 = scmp.ne.s32.totalorder %s178, %s181
    %p187 = scmp.eq.s32.totalorder %s16, 0
    %p188 = por %p186, %p187
    %p189 = scmp.ne.s32.totalorder %s178, %s181
    %p190 = scmp.eq.s32.totalorder %s21, 1
    %p191 = por %p189, %p190
    %p192 = scmp.ne.s32.totalorder %s181, %s182
    %p193 = scmp.eq.s32.totalorder %s21, 0
    %p194 = por %p192, %p193
    %p195 = scmp.ne.s32.totalorder %s181, %s182
    %p196 = scmp.eq.s32.totalorder %s22, 1
    %p197 = por %p195, %p196
    %p199 = scmp.ne.s32.totalorder %s182, %s198
    %p200 = scmp.eq.s32.totalorder %s22, 0
    %p201 = por %p199, %p200
    %s202 = ssub.s32 %s16, %s23
    %p203 = scmp.eq.s32.totalorder %s202, 0
    %s205 = sadd.s32 %s204, 1
    %s206 = scalar_select %p203, %s204, %s205
    %p209 = pneg %p203
    %p210 = scmp.eq.s32.totalorder %s16, 1
    %p211 = por %p209, %p210
    %p212 = scmp.ne.s32.totalorder %s204, %s207
    %p213 = scmp.eq.s32.totalorder %s16, 0
    %p214 = por %p212, %p213
    %p215 = scmp.ne.s32.totalorder %s204, %s207
    %p216 = scmp.eq.s32.totalorder %s21, 1
    %p217 = por %p215, %p216
    %p218 = scmp.ne.s32.totalorder %s207, %s208
    %p219 = scmp.eq.s32.totalorder %s21, 0
    %p220 = por %p218, %p219
    %p221 = scmp.ne.s32.totalorder %s207, %s208
    %p222 = scmp.eq.s32.totalorder %s22, 1
    %p223 = por %p221, %p222
    %p225 = scmp.ne.s32.totalorder %s208, %s224
    %p226 = scmp.eq.s32.totalorder %s22, 0
    %p227 = por %p225, %p226
    %s228 = ssub.s32 %s16, %s23
    %p229 = scmp.eq.s32.totalorder %s228, 0
    %s231 = sadd.s32 %s230, 1
    %s232 = scalar_select %p229, %s230, %s231
    %p235 = pneg %p229
    %p236 = scmp.eq.s32.totalorder %s16, 1
    %p237 = por %p235, %p236
    %p238 = scmp.ne.s32.totalorder %s230, %s233
    %p239 = scmp.eq.s32.totalorder %s16, 0
    %p240 = por %p238, %p239
    %p241 = scmp.ne.s32.totalorder %s230, %s233
    %p242 = scmp.eq.s32.totalorder %s21, 1
    %p243 = por %p241, %p242
    %p244 = scmp.ne.s32.totalorder %s233, %s234
    %p245 = scmp.eq.s32.totalorder %s21, 0
    %p246 = por %p244, %p245
    %p247 = scmp.ne.s32.totalorder %s233, %s234
    %p248 = scmp.eq.s32.totalorder %s22, 1
    %p249 = por %p247, %p248
    %p251 = scmp.ne.s32.totalorder %s234, %s250
    %p252 = scmp.eq.s32.totalorder %s22, 0
    %p253 = por %p251, %p252
    %p254 = scmp.le.s32.totalorder 1, %s16
    %p255 = scmp.lt.s32.totalorder %s16, 3
    %p256 = pnand %p254, %p255
    %p257 = pneg %p256
    // Predicated region
    $region9: #{double_conv_forward.4} parent=5 // pred_check
      _
    $region10: #{double_conv_forward.4} parent=5 // pred_check_branch
      %259 = sbr.rel (%p256) target = $region12
    $region11: #{double_conv_forward.4} parent=5 // pred_region
      %s260 = ssub.s32 %s16, 1
      // Predicated region
      $region13: #{double_conv_forward.4} parent=11 // pred_check
        %p261 = pneg %p63
      $region14: #{double_conv_forward.4} parent=11 // pred_check_branch
        %263 = sbr.rel (%p261) target = $region16
      $region15: #{double_conv_forward.4} parent=11 // pred_region
        _
      $region16: #{double_conv_forward.4} parent=11 // pred_fallthru
        _
      // Predicated region
      $region17: #{double_conv_forward.4} parent=11 // pred_check
        %p264 = pneg %p84
      $region18: #{double_conv_forward.4} parent=11 // pred_check_branch
        %266 = sbr.rel (%p264) target = $region20
      $region19: #{double_conv_forward.4} parent=11 // pred_region
        _
      $region20: #{double_conv_forward.4} parent=11 // pred_fallthru
        _
      // Predicated region
      $region21: #{double_conv_forward.4} parent=11 // pred_check
        %p267 = pneg %p105
      $region22: #{double_conv_forward.4} parent=11 // pred_check_branch
        %269 = sbr.rel (%p267) target = $region24
      $region23: #{double_conv_forward.4} parent=11 // pred_region
        _
      $region24: #{double_conv_forward.4} parent=11 // pred_fallthru
        _
      // Predicated region
      $region25: #{double_conv_forward.4} parent=11 // pred_check
        %p270 = pneg %p126
      $region26: #{double_conv_forward.4} parent=11 // pred_check_branch
        %272 = sbr.rel (%p270) target = $region28
      $region27: #{double_conv_forward.4} parent=11 // pred_region
        _
      $region28: #{double_conv_forward.4} parent=11 // pred_fallthru
        _
      // Predicated region
      $region29: #{double_conv_forward.4} parent=11 // pred_check
        %p273 = pneg %p147
      $region30: #{double_conv_forward.4} parent=11 // pred_check_branch
        %275 = sbr.rel (%p273) target = $region32
      $region31: #{double_conv_forward.4} parent=11 // pred_region
        _
      $region32: #{double_conv_forward.4} parent=11 // pred_fallthru
        _
      // Predicated region
      $region33: #{double_conv_forward.4} parent=11 // pred_check
        %p276 = pneg %p168
      $region34: #{double_conv_forward.4} parent=11 // pred_check_branch
        %278 = sbr.rel (%p276) target = $region36
      $region35: #{double_conv_forward.4} parent=11 // pred_region
        _
      $region36: #{double_conv_forward.4} parent=11 // pred_fallthru
        _
    $region12: #{double_conv_forward.4} parent=5 // pred_fallthru
      _
    %p279 = scmp.lt.s32.totalorder %s16, 2
    // Predicated region
    $region37: #{double_conv_forward.4} parent=5 // pred_check
      %p280 = pneg %p279
    $region38: #{double_conv_forward.4} parent=5 // pred_check_branch
      %282 = sbr.rel (%p280) target = $region40
    $region39: #{double_conv_forward.4} parent=5 // pred_region
      // Predicated region
      $region41: #{double_conv_forward.4} parent=39 // pred_check
        %p283 = pneg %p36
      $region42: #{double_conv_forward.4} parent=39 // pred_check_branch
        %285 = sbr.rel (%p283) target = $region44
      $region43: #{double_conv_forward.4} parent=39 // pred_region
        %p286 = scmp.lt.s32.totalorder %s16, 1
        %s287 = scalar_select %p286, %s16, 1
        %s288 = smul.addr %s287, 32
        %s289 = smul.addr %s288, 8
        %s290 = scalar_lea.vmem %s0, %s289
      $region44: #{double_conv_forward.4} parent=39 // pred_fallthru
        _
    $region40: #{double_conv_forward.4} parent=5 // pred_fallthru
      _
    %p291 = scmp.le.s32.totalorder 1, %s16
    %p292 = scmp.lt.s32.totalorder %s16, 3
    %p293 = pnand %p291, %p292
    %p294 = pneg %p293
    // Predicated region
    $region45: #{double_conv_forward.4} parent=5 // pred_check
      _
    $region46: #{double_conv_forward.4} parent=5 // pred_check_branch
      %296 = sbr.rel (%p293) target = $region48
    $region47: #{double_conv_forward.4} parent=5 // pred_region
      %s297 = ssub.s32 %s16, 1
      %p298 = scmp.lt.s32.totalorder %s21, 1
      %s299 = scalar_select %p298, %s21, 1
      %s300 = smul.addr %s299, 32
      %s301 = smul.addr %s300, 8
      %s302 = scalar_lea.vmem %s0, %s301
      %p303 = pneg %p42
      %p304 = pneg %p39
      %p305 = pneg %p63
      %p306 = pneg %p60
      %p307 = pneg %p84
      %p308 = pneg %p81
      %p309 = pneg %p105
      %p310 = pneg %p102
      %p311 = pneg %p126
      %p312 = pneg %p123
      %p313 = pneg %p147
      %p314 = pneg %p144
      %p315 = pneg %p168
      %p316 = pneg %p165
      %p317 = pneg %p194
      %p318 = pneg %p191
      %p319 = scmp.lt.s32.totalorder %s21, 1
      %s320 = scalar_select %p319, %s21, 1
      %s321 = smul.addr %s320, 32
      %s322 = smul.addr %s321, 8
      %s323 = scalar_lea.vmem %s7, %s322
      %p324 = pneg %p220
      %p325 = pneg %p217
      %p326 = scmp.lt.s32.totalorder %s21, 1
      %s327 = scalar_select %p326, %s21, 1
      %s328 = scalar_lea.vmem %s8, %s327
      %p329 = pneg %p246
      %p330 = pneg %p243
      %p331 = scmp.lt.s32.totalorder %s21, 1
      %s332 = scalar_select %p331, %s21, 1
      %s333 = scalar_lea.vmem %s9, %s332
      %p334 = scmp.lt.s32.totalorder %s21, 1
      %s335 = scalar_select %p334, %s21, 1
      %s336 = smul.addr %s335, 32
      %s337 = smul.addr %s336, 8
      %s338 = scalar_lea.vmem %s0, %s337
      %p339 = scmp.lt.s32.totalorder %s21, 1
      %s340 = scalar_select %p339, %s21, 1
      %s341 = smul.addr %s340, 32
      %s342 = smul.addr %s341, 8
      %s343 = scalar_lea.vmem %s7, %s342
      %p344 = scmp.lt.s32.totalorder %s21, 1
      %s345 = scalar_select %p344, %s21, 1
      %s346 = scalar_lea.vmem %s8, %s345
      %p347 = scmp.lt.s32.totalorder %s21, 1
      %s348 = scalar_select %p347, %s21, 1
      %s349 = scalar_lea.vmem %s9, %s348
      %v350 = vld [vmem:[%s338] sm:$0xff]
      %v351 = vld [vmem:[%s338 + $0x8] sm:$0xff]
      %v352 = vld [vmem:[%s338 + $0x10] sm:$0xff]
      %v353 = vld [vmem:[%s338 + $0x18] sm:$0xff]
      %v354 = vld [vmem:[%s338 + $0x20] sm:$0xff]
      %v355 = vld [vmem:[%s338 + $0x28] sm:$0xff]
      %v356 = vld [vmem:[%s338 + $0x30] sm:$0xff]
      %v357 = vld [vmem:[%s338 + $0x38] sm:$0xff]
      %v358 = vld [vmem:[%s338 + $0x40] sm:$0xff]
      %v359 = vld [vmem:[%s338 + $0x48] sm:$0xff]
      %v360 = vld [vmem:[%s338 + $0x50] sm:$0xff]
      %v361 = vld [vmem:[%s338 + $0x58] sm:$0xff]
      %v362 = vld [vmem:[%s338 + $0x60] sm:$0xff]
      %v363 = vld [vmem:[%s338 + $0x68] sm:$0xff]
      %v364 = vld [vmem:[%s338 + $0x70] sm:$0xff]
      %v365 = vld [vmem:[%s338 + $0x78] sm:$0xff]
      %v366 = vld [vmem:[%s338 + $0x80] sm:$0xff]
      %v367 = vld [vmem:[%s338 + $0x88] sm:$0xff]
      %v368 = vld [vmem:[%s338 + $0x90] sm:$0xff]
      %v369 = vld [vmem:[%s338 + $0x98] sm:$0xff]
      %v370 = vld [vmem:[%s338 + $0xa0] sm:$0xff]
      %v371 = vld [vmem:[%s338 + $0xa8] sm:$0xff]
      %v372 = vld [vmem:[%s338 + $0xb0] sm:$0xff]
      %v373 = vld [vmem:[%s338 + $0xb8] sm:$0xff]
      %v374 = vld [vmem:[%s338 + $0xc0] sm:$0xff]
      %v375 = vld [vmem:[%s338 + $0xc8] sm:$0xff]
      %v376 = vld [vmem:[%s338 + $0xd0] sm:$0xff]
      %v377 = vld [vmem:[%s338 + $0xd8] sm:$0xff]
      %v378 = vld [vmem:[%s338 + $0xe0] sm:$0xff]
      %v379 = vld [vmem:[%s338 + $0xe8] sm:$0xff]
      %v380 = vld [vmem:[%s338 + $0xf0] sm:$0xff]
      %v381 = vld [vmem:[%s338 + $0xf8] sm:$0xff]
      %v382 = vld [vmem:[%s5] sm:$0x1]
      %v384 = vperm.slane %v382, 0
      %v386 = vmul.f32 %v350, %v384
      %v387 = vmul.f32 %v351, %v384
      %v388 = vmul.f32 %v352, %v384
      %v389 = vmul.f32 %v353, %v384
      %v390 = vmul.f32 %v354, %v384
      %v391 = vmul.f32 %v355, %v384
      %v392 = vmul.f32 %v356, %v384
      %v393 = vmul.f32 %v357, %v384
      %v394 = vmul.f32 %v358, %v384
      %v395 = vmul.f32 %v359, %v384
      %v396 = vmul.f32 %v360, %v384
      %v397 = vmul.f32 %v361, %v384
      %v398 = vmul.f32 %v362, %v384
      %v399 = vmul.f32 %v363, %v384
      %v400 = vmul.f32 %v364, %v384
      %v401 = vmul.f32 %v365, %v384
      %v402 = vmul.f32 %v366, %v384
      %v403 = vmul.f32 %v367, %v384
      %v404 = vmul.f32 %v368, %v384
      %v405 = vmul.f32 %v369, %v384
      %v406 = vmul.f32 %v370, %v384
      %v407 = vmul.f32 %v371, %v384
      %v408 = vmul.f32 %v372, %v384
      %v409 = vmul.f32 %v373, %v384
      %v410 = vmul.f32 %v374, %v384
      %v411 = vmul.f32 %v375, %v384
      %v412 = vmul.f32 %v376, %v384
      %v413 = vmul.f32 %v377, %v384
      %v414 = vmul.f32 %v378, %v384
      %v415 = vmul.f32 %v379, %v384
      %v416 = vmul.f32 %v380, %v384
      %v417 = vmul.f32 %v381, %v384
      %v418 = vld [vmem:[%s6] sm:$0x1]
      %v420 = vperm.slane %v418, 0
      %v422 = vadd.f32 %v386, %v420
      %v423 = vadd.f32 %v387, %v420
      %v424 = vadd.f32 %v388, %v420
      %v425 = vadd.f32 %v389, %v420
      %v426 = vadd.f32 %v390, %v420
      %v427 = vadd.f32 %v391, %v420
      %v428 = vadd.f32 %v392, %v420
      %v429 = vadd.f32 %v393, %v420
      %v430 = vadd.f32 %v394, %v420
      %v431 = vadd.f32 %v395, %v420
      %v432 = vadd.f32 %v396, %v420
      %v433 = vadd.f32 %v397, %v420
      %v434 = vadd.f32 %v398, %v420
      %v435 = vadd.f32 %v399, %v420
      %v436 = vadd.f32 %v400, %v420
      %v437 = vadd.f32 %v401, %v420
      %v438 = vadd.f32 %v402, %v420
      %v439 = vadd.f32 %v403, %v420
      %v440 = vadd.f32 %v404, %v420
      %v441 = vadd.f32 %v405, %v420
      %v442 = vadd.f32 %v406, %v420
      %v443 = vadd.f32 %v407, %v420
      %v444 = vadd.f32 %v408, %v420
      %v445 = vadd.f32 %v409, %v420
      %v446 = vadd.f32 %v410, %v420
      %v447 = vadd.f32 %v411, %v420
      %v448 = vadd.f32 %v412, %v420
      %v449 = vadd.f32 %v413, %v420
      %v450 = vadd.f32 %v414, %v420
      %v451 = vadd.f32 %v415, %v420
      %v452 = vadd.f32 %v416, %v420
      %v453 = vadd.f32 %v417, %v420
      %v454 = vmax.f32 %v422, 0.0
      %v455 = vmax.f32 %v423, 0.0
      %v456 = vmax.f32 %v424, 0.0
      %v457 = vmax.f32 %v425, 0.0
      %v458 = vmax.f32 %v426, 0.0
      %v459 = vmax.f32 %v427, 0.0
      %v460 = vmax.f32 %v428, 0.0
      %v461 = vmax.f32 %v429, 0.0
      %v462 = vmax.f32 %v430, 0.0
      %v463 = vmax.f32 %v431, 0.0
      %v464 = vmax.f32 %v432, 0.0
      %v465 = vmax.f32 %v433, 0.0
      %v466 = vmax.f32 %v434, 0.0
      %v467 = vmax.f32 %v435, 0.0
      %v468 = vmax.f32 %v436, 0.0
      %v469 = vmax.f32 %v437, 0.0
      %v470 = vmax.f32 %v438, 0.0
      %v471 = vmax.f32 %v439, 0.0
      %v472 = vmax.f32 %v440, 0.0
      %v473 = vmax.f32 %v441, 0.0
      %v474 = vmax.f32 %v442, 0.0
      %v475 = vmax.f32 %v443, 0.0
      %v476 = vmax.f32 %v444, 0.0
      %v477 = vmax.f32 %v445, 0.0
      %v478 = vmax.f32 %v446, 0.0
      %v479 = vmax.f32 %v447, 0.0
      %v480 = vmax.f32 %v448, 0.0
      %v481 = vmax.f32 %v449, 0.0
      %v482 = vmax.f32 %v450, 0.0
      %v483 = vmax.f32 %v451, 0.0
      %v484 = vmax.f32 %v452, 0.0
      %v485 = vmax.f32 %v453, 0.0
      %v486 = vld [vmem:[%s1] sm:$0xff]
      %488 = vset.pattern.permute.xlu0 0
      %489 = vperm.xlu0 %488, %v454
      %v490 = vpop.permute.xlu0 %489
      %493 = vset.pattern.permute.xlu0 0
      %494 = vperm.xlu0 %493, %v455
      %v495 = vpop.permute.xlu0 %494
      %498 = vset.pattern.permute.xlu0 0
      %499 = vperm.xlu0 %498, %v456
      %v500 = vpop.permute.xlu0 %499
      %503 = vset.pattern.permute.xlu0 0
      %504 = vperm.xlu0 %503, %v457
      %v505 = vpop.permute.xlu0 %504
      %508 = vset.pattern.permute.xlu0 0
      %509 = vperm.xlu0 %508, %v458
      %v510 = vpop.permute.xlu0 %509
      %513 = vset.pattern.permute.xlu0 0
      %514 = vperm.xlu0 %513, %v459
      %v515 = vpop.permute.xlu0 %514
      %518 = vset.pattern.permute.xlu0 0
      %519 = vperm.xlu0 %518, %v460
      %v520 = vpop.permute.xlu0 %519
      %523 = vset.pattern.permute.xlu0 0
      %524 = vperm.xlu0 %523, %v461
      %v525 = vpop.permute.xlu0 %524
      %528 = vset.pattern.permute.xlu0 0
      %529 = vperm.xlu0 %528, %v462
      %v530 = vpop.permute.xlu0 %529
      %533 = vset.pattern.permute.xlu0 0
      %534 = vperm.xlu0 %533, %v463
      %v535 = vpop.permute.xlu0 %534
      %538 = vset.pattern.permute.xlu0 0
      %539 = vperm.xlu0 %538, %v464
      %v540 = vpop.permute.xlu0 %539
      %543 = vset.pattern.permute.xlu0 0
      %544 = vperm.xlu0 %543, %v465
      %v545 = vpop.permute.xlu0 %544
      %548 = vset.pattern.permute.xlu0 0
      %549 = vperm.xlu0 %548, %v466
      %v550 = vpop.permute.xlu0 %549
      %553 = vset.pattern.permute.xlu0 0
      %554 = vperm.xlu0 %553, %v467
      %v555 = vpop.permute.xlu0 %554
      %558 = vset.pattern.permute.xlu0 0
      %559 = vperm.xlu0 %558, %v468
      %v560 = vpop.permute.xlu0 %559
      %563 = vset.pattern.permute.xlu0 0
      %564 = vperm.xlu0 %563, %v469
      %v565 = vpop.permute.xlu0 %564
      %568 = vset.pattern.permute.xlu0 0
      %569 = vperm.xlu0 %568, %v470
      %v570 = vpop.permute.xlu0 %569
      %573 = vset.pattern.permute.xlu0 0
      %574 = vperm.xlu0 %573, %v471
      %v575 = vpop.permute.xlu0 %574
      %578 = vset.pattern.permute.xlu0 0
      %579 = vperm.xlu0 %578, %v472
      %v580 = vpop.permute.xlu0 %579
      %583 = vset.pattern.permute.xlu0 0
      %584 = vperm.xlu0 %583, %v473
      %v585 = vpop.permute.xlu0 %584
      %588 = vset.pattern.permute.xlu0 0
      %589 = vperm.xlu0 %588, %v474
      %v590 = vpop.permute.xlu0 %589
      %593 = vset.pattern.permute.xlu0 0
      %594 = vperm.xlu0 %593, %v475
      %v595 = vpop.permute.xlu0 %594
      %598 = vset.pattern.permute.xlu0 0
      %599 = vperm.xlu0 %598, %v476
      %v600 = vpop.permute.xlu0 %599
      %603 = vset.pattern.permute.xlu0 0
      %604 = vperm.xlu0 %603, %v477
      %v605 = vpop.permute.xlu0 %604
      %608 = vset.pattern.permute.xlu0 0
      %609 = vperm.xlu0 %608, %v478
      %v610 = vpop.permute.xlu0 %609
      %613 = vset.pattern.permute.xlu0 0
      %614 = vperm.xlu0 %613, %v479
      %v615 = vpop.permute.xlu0 %614
      %618 = vset.pattern.permute.xlu0 0
      %619 = vperm.xlu0 %618, %v480
      %v620 = vpop.permute.xlu0 %619
      %623 = vset.pattern.permute.xlu0 0
      %624 = vperm.xlu0 %623, %v481
      %v625 = vpop.permute.xlu0 %624
      %628 = vset.pattern.permute.xlu0 0
      %629 = vperm.xlu0 %628, %v482
      %v630 = vpop.permute.xlu0 %629
      %633 = vset.pattern.permute.xlu0 0
      %634 = vperm.xlu0 %633, %v483
      %v635 = vpop.permute.xlu0 %634
      %638 = vset.pattern.permute.xlu0 0
      %639 = vperm.xlu0 %638, %v484
      %v640 = vpop.permute.xlu0 %639
      %643 = vset.pattern.permute.xlu0 0
      %644 = vperm.xlu0 %643, %v485
      %v645 = vpop.permute.xlu0 %644
      %v647 = vperm.slane %v486, 0
      %v648 = vmul.f32 %v490, %v647
      %v649 = vmul.f32 %v495, %v647
      %v650 = vmul.f32 %v500, %v647
      %v651 = vmul.f32 %v505, %v647
      %v652 = vmul.f32 %v510, %v647
      %v653 = vmul.f32 %v515, %v647
      %v654 = vmul.f32 %v520, %v647
      %v655 = vmul.f32 %v525, %v647
      %v656 = vmul.f32 %v530, %v647
      %v657 = vmul.f32 %v535, %v647
      %v658 = vmul.f32 %v540, %v647
      %v659 = vmul.f32 %v545, %v647
      %v660 = vmul.f32 %v550, %v647
      %v661 = vmul.f32 %v555, %v647
      %v662 = vmul.f32 %v560, %v647
      %v663 = vmul.f32 %v565, %v647
      %v664 = vmul.f32 %v570, %v647
      %v665 = vmul.f32 %v575, %v647
      %v666 = vmul.f32 %v580, %v647
      %v667 = vmul.f32 %v585, %v647
      %v668 = vmul.f32 %v590, %v647
      %v669 = vmul.f32 %v595, %v647
      %v670 = vmul.f32 %v600, %v647
      %v671 = vmul.f32 %v605, %v647
      %v672 = vmul.f32 %v610, %v647
      %v673 = vmul.f32 %v615, %v647
      %v674 = vmul.f32 %v620, %v647
      %v675 = vmul.f32 %v625, %v647
      %v676 = vmul.f32 %v630, %v647
      %v677 = vmul.f32 %v635, %v647
      %v678 = vmul.f32 %v640, %v647
      %v679 = vmul.f32 %v645, %v647
      %680 = vset.pattern.permute.xlu0 1
      %681 = vperm.xlu0 %680, %v454
      %v682 = vpop.permute.xlu0 %681
      %684 = vset.pattern.permute.xlu0 1
      %685 = vperm.xlu0 %684, %v455
      %v686 = vpop.permute.xlu0 %685
      %688 = vset.pattern.permute.xlu0 1
      %689 = vperm.xlu0 %688, %v456
      %v690 = vpop.permute.xlu0 %689
      %692 = vset.pattern.permute.xlu0 1
      %693 = vperm.xlu0 %692, %v457
      %v694 = vpop.permute.xlu0 %693
      %696 = vset.pattern.permute.xlu0 1
      %697 = vperm.xlu0 %696, %v458
      %v698 = vpop.permute.xlu0 %697
      %700 = vset.pattern.permute.xlu0 1
      %701 = vperm.xlu0 %700, %v459
      %v702 = vpop.permute.xlu0 %701
      %704 = vset.pattern.permute.xlu0 1
      %705 = vperm.xlu0 %704, %v460
      %v706 = vpop.permute.xlu0 %705
      %708 = vset.pattern.permute.xlu0 1
      %709 = vperm.xlu0 %708, %v461
      %v710 = vpop.permute.xlu0 %709
      %712 = vset.pattern.permute.xlu0 1
      %713 = vperm.xlu0 %712, %v462
      %v714 = vpop.permute.xlu0 %713
      %716 = vset.pattern.permute.xlu0 1
      %717 = vperm.xlu0 %716, %v463
      %v718 = vpop.permute.xlu0 %717
      %720 = vset.pattern.permute.xlu0 1
      %721 = vperm.xlu0 %720, %v464
      %v722 = vpop.permute.xlu0 %721
      %724 = vset.pattern.permute.xlu0 1
      %725 = vperm.xlu0 %724, %v465
      %v726 = vpop.permute.xlu0 %725
      %728 = vset.pattern.permute.xlu0 1
      %729 = vperm.xlu0 %728, %v466
      %v730 = vpop.permute.xlu0 %729
      %732 = vset.pattern.permute.xlu0 1
      %733 = vperm.xlu0 %732, %v467
      %v734 = vpop.permute.xlu0 %733
      %736 = vset.pattern.permute.xlu0 1
      %737 = vperm.xlu0 %736, %v468
      %v738 = vpop.permute.xlu0 %737
      %740 = vset.pattern.permute.xlu0 1
      %741 = vperm.xlu0 %740, %v469
      %v742 = vpop.permute.xlu0 %741
      %744 = vset.pattern.permute.xlu0 1
      %745 = vperm.xlu0 %744, %v470
      %v746 = vpop.permute.xlu0 %745
      %748 = vset.pattern.permute.xlu0 1
      %749 = vperm.xlu0 %748, %v471
      %v750 = vpop.permute.xlu0 %749
      %752 = vset.pattern.permute.xlu0 1
      %753 = vperm.xlu0 %752, %v472
      %v754 = vpop.permute.xlu0 %753
      %756 = vset.pattern.permute.xlu0 1
      %757 = vperm.xlu0 %756, %v473
      %v758 = vpop.permute.xlu0 %757
      %760 = vset.pattern.permute.xlu0 1
      %761 = vperm.xlu0 %760, %v474
      %v762 = vpop.permute.xlu0 %761
      %764 = vset.pattern.permute.xlu0 1
      %765 = vperm.xlu0 %764, %v475
      %v766 = vpop.permute.xlu0 %765
      %768 = vset.pattern.permute.xlu0 1
      %769 = vperm.xlu0 %768, %v476
      %v770 = vpop.permute.xlu0 %769
      %772 = vset.pattern.permute.xlu0 1
      %773 = vperm.xlu0 %772, %v477
      %v774 = vpop.permute.xlu0 %773
      %776 = vset.pattern.permute.xlu0 1
      %777 = vperm.xlu0 %776, %v478
      %v778 = vpop.permute.xlu0 %777
      %780 = vset.pattern.permute.xlu0 1
      %781 = vperm.xlu0 %780, %v479
      %v782 = vpop.permute.xlu0 %781
      %784 = vset.pattern.permute.xlu0 1
      %785 = vperm.xlu0 %784, %v480
      %v786 = vpop.permute.xlu0 %785
      %788 = vset.pattern.permute.xlu0 1
      %789 = vperm.xlu0 %788, %v481
      %v790 = vpop.permute.xlu0 %789
      %792 = vset.pattern.permute.xlu0 1
      %793 = vperm.xlu0 %792, %v482
      %v794 = vpop.permute.xlu0 %793
      %796 = vset.pattern.permute.xlu0 1
      %797 = vperm.xlu0 %796, %v483
      %v798 = vpop.permute.xlu0 %797
      %800 = vset.pattern.permute.xlu0 1
      %801 = vperm.xlu0 %800, %v484
      %v802 = vpop.permute.xlu0 %801
      %804 = vset.pattern.permute.xlu0 1
      %805 = vperm.xlu0 %804, %v485
      %v806 = vpop.permute.xlu0 %805
      %v808 = vperm.slane %v486, 1
      %v809 = vmul.f32 %v682, %v808
      %v810 = vmul.f32 %v686, %v808
      %v811 = vmul.f32 %v690, %v808
      %v812 = vmul.f32 %v694, %v808
      %v813 = vmul.f32 %v698, %v808
      %v814 = vmul.f32 %v702, %v808
      %v815 = vmul.f32 %v706, %v808
      %v816 = vmul.f32 %v710, %v808
      %v817 = vmul.f32 %v714, %v808
      %v818 = vmul.f32 %v718, %v808
      %v819 = vmul.f32 %v722, %v808
      %v820 = vmul.f32 %v726, %v808
      %v821 = vmul.f32 %v730, %v808
      %v822 = vmul.f32 %v734, %v808
      %v823 = vmul.f32 %v738, %v808
      %v824 = vmul.f32 %v742, %v808
      %v825 = vmul.f32 %v746, %v808
      %v826 = vmul.f32 %v750, %v808
      %v827 = vmul.f32 %v754, %v808
      %v828 = vmul.f32 %v758, %v808
      %v829 = vmul.f32 %v762, %v808
      %v830 = vmul.f32 %v766, %v808
      %v831 = vmul.f32 %v770, %v808
      %v832 = vmul.f32 %v774, %v808
      %v833 = vmul.f32 %v778, %v808
      %v834 = vmul.f32 %v782, %v808
      %v835 = vmul.f32 %v786, %v808
      %v836 = vmul.f32 %v790, %v808
      %v837 = vmul.f32 %v794, %v808
      %v838 = vmul.f32 %v798, %v808
      %v839 = vmul.f32 %v802, %v808
      %v840 = vmul.f32 %v806, %v808
      %v841 = vadd.f32 %v648, %v809
      %v842 = vadd.f32 %v649, %v810
      %v843 = vadd.f32 %v650, %v811
      %v844 = vadd.f32 %v651, %v812
      %v845 = vadd.f32 %v652, %v813
      %v846 = vadd.f32 %v653, %v814
      %v847 = vadd.f32 %v654, %v815
      %v848 = vadd.f32 %v655, %v816
      %v849 = vadd.f32 %v656, %v817
      %v850 = vadd.f32 %v657, %v818
      %v851 = vadd.f32 %v658, %v819
      %v852 = vadd.f32 %v659, %v820
      %v853 = vadd.f32 %v660, %v821
      %v854 = vadd.f32 %v661, %v822
      %v855 = vadd.f32 %v662, %v823
      %v856 = vadd.f32 %v663, %v824
      %v857 = vadd.f32 %v664, %v825
      %v858 = vadd.f32 %v665, %v826
      %v859 = vadd.f32 %v666, %v827
      %v860 = vadd.f32 %v667, %v828
      %v861 = vadd.f32 %v668, %v829
      %v862 = vadd.f32 %v669, %v830
      %v863 = vadd.f32 %v670, %v831
      %v864 = vadd.f32 %v671, %v832
      %v865 = vadd.f32 %v672, %v833
      %v866 = vadd.f32 %v673, %v834
      %v867 = vadd.f32 %v674, %v835
      %v868 = vadd.f32 %v675, %v836
      %v869 = vadd.f32 %v676, %v837
      %v870 = vadd.f32 %v677, %v838
      %v871 = vadd.f32 %v678, %v839
      %v872 = vadd.f32 %v679, %v840
      %873 = vset.pattern.permute.xlu0 2
      %874 = vperm.xlu0 %873, %v454
      %v875 = vpop.permute.xlu0 %874
      %877 = vset.pattern.permute.xlu0 2
      %878 = vperm.xlu0 %877, %v455
      %v879 = vpop.permute.xlu0 %878
      %881 = vset.pattern.permute.xlu0 2
      %882 = vperm.xlu0 %881, %v456
      %v883 = vpop.permute.xlu0 %882
      %885 = vset.pattern.permute.xlu0 2
      %886 = vperm.xlu0 %885, %v457
      %v887 = vpop.permute.xlu0 %886
      %889 = vset.pattern.permute.xlu0 2
      %890 = vperm.xlu0 %889, %v458
      %v891 = vpop.permute.xlu0 %890
      %893 = vset.pattern.permute.xlu0 2
      %894 = vperm.xlu0 %893, %v459
      %v895 = vpop.permute.xlu0 %894
      %897 = vset.pattern.permute.xlu0 2
      %898 = vperm.xlu0 %897, %v460
      %v899 = vpop.permute.xlu0 %898
      %901 = vset.pattern.permute.xlu0 2
      %902 = vperm.xlu0 %901, %v461
      %v903 = vpop.permute.xlu0 %902
      %905 = vset.pattern.permute.xlu0 2
      %906 = vperm.xlu0 %905, %v462
      %v907 = vpop.permute.xlu0 %906
      %909 = vset.pattern.permute.xlu0 2
      %910 = vperm.xlu0 %909, %v463
      %v911 = vpop.permute.xlu0 %910
      %913 = vset.pattern.permute.xlu0 2
      %914 = vperm.xlu0 %913, %v464
      %v915 = vpop.permute.xlu0 %914
      %917 = vset.pattern.permute.xlu0 2
      %918 = vperm.xlu0 %917, %v465
      %v919 = vpop.permute.xlu0 %918
      %921 = vset.pattern.permute.xlu0 2
      %922 = vperm.xlu0 %921, %v466
      %v923 = vpop.permute.xlu0 %922
      %925 = vset.pattern.permute.xlu0 2
      %926 = vperm.xlu0 %925, %v467
      %v927 = vpop.permute.xlu0 %926
      %929 = vset.pattern.permute.xlu0 2
      %930 = vperm.xlu0 %929, %v468
      %v931 = vpop.permute.xlu0 %930
      %933 = vset.pattern.permute.xlu0 2
      %934 = vperm.xlu0 %933, %v469
      %v935 = vpop.permute.xlu0 %934
      %937 = vset.pattern.permute.xlu0 2
      %938 = vperm.xlu0 %937, %v470
      %v939 = vpop.permute.xlu0 %938
      %941 = vset.pattern.permute.xlu0 2
      %942 = vperm.xlu0 %941, %v471
      %v943 = vpop.permute.xlu0 %942
      %945 = vset.pattern.permute.xlu0 2
      %946 = vperm.xlu0 %945, %v472
      %v947 = vpop.permute.xlu0 %946
      %949 = vset.pattern.permute.xlu0 2
      %950 = vperm.xlu0 %949, %v473
      %v951 = vpop.permute.xlu0 %950
      %953 = vset.pattern.permute.xlu0 2
      %954 = vperm.xlu0 %953, %v474
      %v955 = vpop.permute.xlu0 %954
      %957 = vset.pattern.permute.xlu0 2
      %958 = vperm.xlu0 %957, %v475
      %v959 = vpop.permute.xlu0 %958
      %961 = vset.pattern.permute.xlu0 2
      %962 = vperm.xlu0 %961, %v476
      %v963 = vpop.permute.xlu0 %962
      %965 = vset.pattern.permute.xlu0 2
      %966 = vperm.xlu0 %965, %v477
      %v967 = vpop.permute.xlu0 %966
      %969 = vset.pattern.permute.xlu0 2
      %970 = vperm.xlu0 %969, %v478
      %v971 = vpop.permute.xlu0 %970
      %973 = vset.pattern.permute.xlu0 2
      %974 = vperm.xlu0 %973, %v479
      %v975 = vpop.permute.xlu0 %974
      %977 = vset.pattern.permute.xlu0 2
      %978 = vperm.xlu0 %977, %v480
      %v979 = vpop.permute.xlu0 %978
      %981 = vset.pattern.permute.xlu0 2
      %982 = vperm.xlu0 %981, %v481
      %v983 = vpop.permute.xlu0 %982
      %985 = vset.pattern.permute.xlu0 2
      %986 = vperm.xlu0 %985, %v482
      %v987 = vpop.permute.xlu0 %986
      %989 = vset.pattern.permute.xlu0 2
      %990 = vperm.xlu0 %989, %v483
      %v991 = vpop.permute.xlu0 %990
      %993 = vset.pattern.permute.xlu0 2
      %994 = vperm.xlu0 %993, %v484
      %v995 = vpop.permute.xlu0 %994
      %997 = vset.pattern.permute.xlu0 2
      %998 = vperm.xlu0 %997, %v485
      %v999 = vpop.permute.xlu0 %998
      %v1001 = vperm.slane %v486, 2
      %v1002 = vmul.f32 %v875, %v1001
      %v1003 = vmul.f32 %v879, %v1001
      %v1004 = vmul.f32 %v883, %v1001
      %v1005 = vmul.f32 %v887, %v1001
      %v1006 = vmul.f32 %v891, %v1001
      %v1007 = vmul.f32 %v895, %v1001
      %v1008 = vmul.f32 %v899, %v1001
      %v1009 = vmul.f32 %v903, %v1001
      %v1010 = vmul.f32 %v907, %v1001
      %v1011 = vmul.f32 %v911, %v1001
      %v1012 = vmul.f32 %v915, %v1001
      %v1013 = vmul.f32 %v919, %v1001
      %v1014 = vmul.f32 %v923, %v1001
      %v1015 = vmul.f32 %v927, %v1001
      %v1016 = vmul.f32 %v931, %v1001
      %v1017 = vmul.f32 %v935, %v1001
      %v1018 = vmul.f32 %v939, %v1001
      %v1019 = vmul.f32 %v943, %v1001
      %v1020 = vmul.f32 %v947, %v1001
      %v1021 = vmul.f32 %v951, %v1001
      %v1022 = vmul.f32 %v955, %v1001
      %v1023 = vmul.f32 %v959, %v1001
      %v1024 = vmul.f32 %v963, %v1001
      %v1025 = vmul.f32 %v967, %v1001
      %v1026 = vmul.f32 %v971, %v1001
      %v1027 = vmul.f32 %v975, %v1001
      %v1028 = vmul.f32 %v979, %v1001
      %v1029 = vmul.f32 %v983, %v1001
      %v1030 = vmul.f32 %v987, %v1001
      %v1031 = vmul.f32 %v991, %v1001
      %v1032 = vmul.f32 %v995, %v1001
      %v1033 = vmul.f32 %v999, %v1001
      %v1034 = vadd.f32 %v841, %v1002
      %v1035 = vadd.f32 %v842, %v1003
      %v1036 = vadd.f32 %v843, %v1004
      %v1037 = vadd.f32 %v844, %v1005
      %v1038 = vadd.f32 %v845, %v1006
      %v1039 = vadd.f32 %v846, %v1007
      %v1040 = vadd.f32 %v847, %v1008
      %v1041 = vadd.f32 %v848, %v1009
      %v1042 = vadd.f32 %v849, %v1010
      %v1043 = vadd.f32 %v850, %v1011
      %v1044 = vadd.f32 %v851, %v1012
      %v1045 = vadd.f32 %v852, %v1013
      %v1046 = vadd.f32 %v853, %v1014
      %v1047 = vadd.f32 %v854, %v1015
      %v1048 = vadd.f32 %v855, %v1016
      %v1049 = vadd.f32 %v856, %v1017
      %v1050 = vadd.f32 %v857, %v1018
      %v1051 = vadd.f32 %v858, %v1019
      %v1052 = vadd.f32 %v859, %v1020
      %v1053 = vadd.f32 %v860, %v1021
      %v1054 = vadd.f32 %v861, %v1022
      %v1055 = vadd.f32 %v862, %v1023
      %v1056 = vadd.f32 %v863, %v1024
      %v1057 = vadd.f32 %v864, %v1025
      %v1058 = vadd.f32 %v865, %v1026
      %v1059 = vadd.f32 %v866, %v1027
      %v1060 = vadd.f32 %v867, %v1028
      %v1061 = vadd.f32 %v868, %v1029
      %v1062 = vadd.f32 %v869, %v1030
      %v1063 = vadd.f32 %v870, %v1031
      %v1064 = vadd.f32 %v871, %v1032
      %v1065 = vadd.f32 %v872, %v1033
      %1066 = vset.pattern.permute.xlu0 3
      %1067 = vperm.xlu0 %1066, %v454
      %v1068 = vpop.permute.xlu0 %1067
      %1070 = vset.pattern.permute.xlu0 3
      %1071 = vperm.xlu0 %1070, %v455
      %v1072 = vpop.permute.xlu0 %1071
      %1074 = vset.pattern.permute.xlu0 3
      %1075 = vperm.xlu0 %1074, %v456
      %v1076 = vpop.permute.xlu0 %1075
      %1078 = vset.pattern.permute.xlu0 3
      %1079 = vperm.xlu0 %1078, %v457
      %v1080 = vpop.permute.xlu0 %1079
      %1082 = vset.pattern.permute.xlu0 3
      %1083 = vperm.xlu0 %1082, %v458
      %v1084 = vpop.permute.xlu0 %1083
      %1086 = vset.pattern.permute.xlu0 3
      %1087 = vperm.xlu0 %1086, %v459
      %v1088 = vpop.permute.xlu0 %1087
      %1090 = vset.pattern.permute.xlu0 3
      %1091 = vperm.xlu0 %1090, %v460
      %v1092 = vpop.permute.xlu0 %1091
      %1094 = vset.pattern.permute.xlu0 3
      %1095 = vperm.xlu0 %1094, %v461
      %v1096 = vpop.permute.xlu0 %1095
      %1098 = vset.pattern.permute.xlu0 3
      %1099 = vperm.xlu0 %1098, %v462
      %v1100 = vpop.permute.xlu0 %1099
      %1102 = vset.pattern.permute.xlu0 3
      %1103 = vperm.xlu0 %1102, %v463
      %v1104 = vpop.permute.xlu0 %1103
      %1106 = vset.pattern.permute.xlu0 3
      %1107 = vperm.xlu0 %1106, %v464
      %v1108 = vpop.permute.xlu0 %1107
      %1110 = vset.pattern.permute.xlu0 3
      %1111 = vperm.xlu0 %1110, %v465
      %v1112 = vpop.permute.xlu0 %1111
      %1114 = vset.pattern.permute.xlu0 3
      %1115 = vperm.xlu0 %1114, %v466
      %v1116 = vpop.permute.xlu0 %1115
      %1118 = vset.pattern.permute.xlu0 3
      %1119 = vperm.xlu0 %1118, %v467
      %v1120 = vpop.permute.xlu0 %1119
      %1122 = vset.pattern.permute.xlu0 3
      %1123 = vperm.xlu0 %1122, %v468
      %v1124 = vpop.permute.xlu0 %1123
      %1126 = vset.pattern.permute.xlu0 3
      %1127 = vperm.xlu0 %1126, %v469
      %v1128 = vpop.permute.xlu0 %1127
      %1130 = vset.pattern.permute.xlu0 3
      %1131 = vperm.xlu0 %1130, %v470
      %v1132 = vpop.permute.xlu0 %1131
      %1134 = vset.pattern.permute.xlu0 3
      %1135 = vperm.xlu0 %1134, %v471
      %v1136 = vpop.permute.xlu0 %1135
      %1138 = vset.pattern.permute.xlu0 3
      %1139 = vperm.xlu0 %1138, %v472
      %v1140 = vpop.permute.xlu0 %1139
      %1142 = vset.pattern.permute.xlu0 3
      %1143 = vperm.xlu0 %1142, %v473
      %v1144 = vpop.permute.xlu0 %1143
      %1146 = vset.pattern.permute.xlu0 3
      %1147 = vperm.xlu0 %1146, %v474
      %v1148 = vpop.permute.xlu0 %1147
      %1150 = vset.pattern.permute.xlu0 3
      %1151 = vperm.xlu0 %1150, %v475
      %v1152 = vpop.permute.xlu0 %1151
      %1154 = vset.pattern.permute.xlu0 3
      %1155 = vperm.xlu0 %1154, %v476
      %v1156 = vpop.permute.xlu0 %1155
      %1158 = vset.pattern.permute.xlu0 3
      %1159 = vperm.xlu0 %1158, %v477
      %v1160 = vpop.permute.xlu0 %1159
      %1162 = vset.pattern.permute.xlu0 3
      %1163 = vperm.xlu0 %1162, %v478
      %v1164 = vpop.permute.xlu0 %1163
      %1166 = vset.pattern.permute.xlu0 3
      %1167 = vperm.xlu0 %1166, %v479
      %v1168 = vpop.permute.xlu0 %1167
      %1170 = vset.pattern.permute.xlu0 3
      %1171 = vperm.xlu0 %1170, %v480
      %v1172 = vpop.permute.xlu0 %1171
      %1174 = vset.pattern.permute.xlu0 3
      %1175 = vperm.xlu0 %1174, %v481
      %v1176 = vpop.permute.xlu0 %1175
      %1178 = vset.pattern.permute.xlu0 3
      %1179 = vperm.xlu0 %1178, %v482
      %v1180 = vpop.permute.xlu0 %1179
      %1182 = vset.pattern.permute.xlu0 3
      %1183 = vperm.xlu0 %1182, %v483
      %v1184 = vpop.permute.xlu0 %1183
      %1186 = vset.pattern.permute.xlu0 3
      %1187 = vperm.xlu0 %1186, %v484
      %v1188 = vpop.permute.xlu0 %1187
      %1190 = vset.pattern.permute.xlu0 3
      %1191 = vperm.xlu0 %1190, %v485
      %v1192 = vpop.permute.xlu0 %1191
      %v1194 = vperm.slane %v486, 3
      %v1195 = vmul.f32 %v1068, %v1194
      %v1196 = vmul.f32 %v1072, %v1194
      %v1197 = vmul.f32 %v1076, %v1194
      %v1198 = vmul.f32 %v1080, %v1194
      %v1199 = vmul.f32 %v1084, %v1194
      %v1200 = vmul.f32 %v1088, %v1194
      %v1201 = vmul.f32 %v1092, %v1194
      %v1202 = vmul.f32 %v1096, %v1194
      %v1203 = vmul.f32 %v1100, %v1194
      %v1204 = vmul.f32 %v1104, %v1194
      %v1205 = vmul.f32 %v1108, %v1194
      %v1206 = vmul.f32 %v1112, %v1194
      %v1207 = vmul.f32 %v1116, %v1194
      %v1208 = vmul.f32 %v1120, %v1194
      %v1209 = vmul.f32 %v1124, %v1194
      %v1210 = vmul.f32 %v1128, %v1194
      %v1211 = vmul.f32 %v1132, %v1194
      %v1212 = vmul.f32 %v1136, %v1194
      %v1213 = vmul.f32 %v1140, %v1194
      %v1214 = vmul.f32 %v1144, %v1194
      %v1215 = vmul.f32 %v1148, %v1194
      %v1216 = vmul.f32 %v1152, %v1194
      %v1217 = vmul.f32 %v1156, %v1194
      %v1218 = vmul.f32 %v1160, %v1194
      %v1219 = vmul.f32 %v1164, %v1194
      %v1220 = vmul.f32 %v1168, %v1194
      %v1221 = vmul.f32 %v1172, %v1194
      %v1222 = vmul.f32 %v1176, %v1194
      %v1223 = vmul.f32 %v1180, %v1194
      %v1224 = vmul.f32 %v1184, %v1194
      %v1225 = vmul.f32 %v1188, %v1194
      %v1226 = vmul.f32 %v1192, %v1194
      %v1227 = vadd.f32 %v1034, %v1195
      %v1228 = vadd.f32 %v1035, %v1196
      %v1229 = vadd.f32 %v1036, %v1197
      %v1230 = vadd.f32 %v1037, %v1198
      %v1231 = vadd.f32 %v1038, %v1199
      %v1232 = vadd.f32 %v1039, %v1200
      %v1233 = vadd.f32 %v1040, %v1201
      %v1234 = vadd.f32 %v1041, %v1202
      %v1235 = vadd.f32 %v1042, %v1203
      %v1236 = vadd.f32 %v1043, %v1204
      %v1237 = vadd.f32 %v1044, %v1205
      %v1238 = vadd.f32 %v1045, %v1206
      %v1239 = vadd.f32 %v1046, %v1207
      %v1240 = vadd.f32 %v1047, %v1208
      %v1241 = vadd.f32 %v1048, %v1209
      %v1242 = vadd.f32 %v1049, %v1210
      %v1243 = vadd.f32 %v1050, %v1211
      %v1244 = vadd.f32 %v1051, %v1212
      %v1245 = vadd.f32 %v1052, %v1213
      %v1246 = vadd.f32 %v1053, %v1214
      %v1247 = vadd.f32 %v1054, %v1215
      %v1248 = vadd.f32 %v1055, %v1216
      %v1249 = vadd.f32 %v1056, %v1217
      %v1250 = vadd.f32 %v1057, %v1218
      %v1251 = vadd.f32 %v1058, %v1219
      %v1252 = vadd.f32 %v1059, %v1220
      %v1253 = vadd.f32 %v1060, %v1221
      %v1254 = vadd.f32 %v1061, %v1222
      %v1255 = vadd.f32 %v1062, %v1223
      %v1256 = vadd.f32 %v1063, %v1224
      %v1257 = vadd.f32 %v1064, %v1225
      %v1258 = vadd.f32 %v1065, %v1226
      %1259 = vset.pattern.permute.xlu0 4
      %1260 = vperm.xlu0 %1259, %v454
      %v1261 = vpop.permute.xlu0 %1260
      %1263 = vset.pattern.permute.xlu0 4
      %1264 = vperm.xlu0 %1263, %v455
      %v1265 = vpop.permute.xlu0 %1264
      %1267 = vset.pattern.permute.xlu0 4
      %1268 = vperm.xlu0 %1267, %v456
      %v1269 = vpop.permute.xlu0 %1268
      %1271 = vset.pattern.permute.xlu0 4
      %1272 = vperm.xlu0 %1271, %v457
      %v1273 = vpop.permute.xlu0 %1272
      %1275 = vset.pattern.permute.xlu0 4
      %1276 = vperm.xlu0 %1275, %v458
      %v1277 = vpop.permute.xlu0 %1276
      %1279 = vset.pattern.permute.xlu0 4
      %1280 = vperm.xlu0 %1279, %v459
      %v1281 = vpop.permute.xlu0 %1280
      %1283 = vset.pattern.permute.xlu0 4
      %1284 = vperm.xlu0 %1283, %v460
      %v1285 = vpop.permute.xlu0 %1284
      %1287 = vset.pattern.permute.xlu0 4
      %1288 = vperm.xlu0 %1287, %v461
      %v1289 = vpop.permute.xlu0 %1288
      %1291 = vset.pattern.permute.xlu0 4
      %1292 = vperm.xlu0 %1291, %v462
      %v1293 = vpop.permute.xlu0 %1292
      %1295 = vset.pattern.permute.xlu0 4
      %1296 = vperm.xlu0 %1295, %v463
      %v1297 = vpop.permute.xlu0 %1296
      %1299 = vset.pattern.permute.xlu0 4
      %1300 = vperm.xlu0 %1299, %v464
      %v1301 = vpop.permute.xlu0 %1300
      %1303 = vset.pattern.permute.xlu0 4
      %1304 = vperm.xlu0 %1303, %v465
      %v1305 = vpop.permute.xlu0 %1304
      %1307 = vset.pattern.permute.xlu0 4
      %1308 = vperm.xlu0 %1307, %v466
      %v1309 = vpop.permute.xlu0 %1308
      %1311 = vset.pattern.permute.xlu0 4
      %1312 = vperm.xlu0 %1311, %v467
      %v1313 = vpop.permute.xlu0 %1312
      %1315 = vset.pattern.permute.xlu0 4
      %1316 = vperm.xlu0 %1315, %v468
      %v1317 = vpop.permute.xlu0 %1316
      %1319 = vset.pattern.permute.xlu0 4
      %1320 = vperm.xlu0 %1319, %v469
      %v1321 = vpop.permute.xlu0 %1320
      %1323 = vset.pattern.permute.xlu0 4
      %1324 = vperm.xlu0 %1323, %v470
      %v1325 = vpop.permute.xlu0 %1324
      %1327 = vset.pattern.permute.xlu0 4
      %1328 = vperm.xlu0 %1327, %v471
      %v1329 = vpop.permute.xlu0 %1328
      %1331 = vset.pattern.permute.xlu0 4
      %1332 = vperm.xlu0 %1331, %v472
      %v1333 = vpop.permute.xlu0 %1332
      %1335 = vset.pattern.permute.xlu0 4
      %1336 = vperm.xlu0 %1335, %v473
      %v1337 = vpop.permute.xlu0 %1336
      %1339 = vset.pattern.permute.xlu0 4
      %1340 = vperm.xlu0 %1339, %v474
      %v1341 = vpop.permute.xlu0 %1340
      %1343 = vset.pattern.permute.xlu0 4
      %1344 = vperm.xlu0 %1343, %v475
      %v1345 = vpop.permute.xlu0 %1344
      %1347 = vset.pattern.permute.xlu0 4
      %1348 = vperm.xlu0 %1347, %v476
      %v1349 = vpop.permute.xlu0 %1348
      %1351 = vset.pattern.permute.xlu0 4
      %1352 = vperm.xlu0 %1351, %v477
      %v1353 = vpop.permute.xlu0 %1352
      %1355 = vset.pattern.permute.xlu0 4
      %1356 = vperm.xlu0 %1355, %v478
      %v1357 = vpop.permute.xlu0 %1356
      %1359 = vset.pattern.permute.xlu0 4
      %1360 = vperm.xlu0 %1359, %v479
      %v1361 = vpop.permute.xlu0 %1360
      %1363 = vset.pattern.permute.xlu0 4
      %1364 = vperm.xlu0 %1363, %v480
      %v1365 = vpop.permute.xlu0 %1364
      %1367 = vset.pattern.permute.xlu0 4
      %1368 = vperm.xlu0 %1367, %v481
      %v1369 = vpop.permute.xlu0 %1368
      %1371 = vset.pattern.permute.xlu0 4
      %1372 = vperm.xlu0 %1371, %v482
      %v1373 = vpop.permute.xlu0 %1372
      %1375 = vset.pattern.permute.xlu0 4
      %1376 = vperm.xlu0 %1375, %v483
      %v1377 = vpop.permute.xlu0 %1376
      %1379 = vset.pattern.permute.xlu0 4
      %1380 = vperm.xlu0 %1379, %v484
      %v1381 = vpop.permute.xlu0 %1380
      %1383 = vset.pattern.permute.xlu0 4
      %1384 = vperm.xlu0 %1383, %v485
      %v1385 = vpop.permute.xlu0 %1384
      %v1387 = vperm.slane %v486, 4
      %v1388 = vmul.f32 %v1261, %v1387
      %v1389 = vmul.f32 %v1265, %v1387
      %v1390 = vmul.f32 %v1269, %v1387
      %v1391 = vmul.f32 %v1273, %v1387
      %v1392 = vmul.f32 %v1277, %v1387
      %v1393 = vmul.f32 %v1281, %v1387
      %v1394 = vmul.f32 %v1285, %v1387
      %v1395 = vmul.f32 %v1289, %v1387
      %v1396 = vmul.f32 %v1293, %v1387
      %v1397 = vmul.f32 %v1297, %v1387
      %v1398 = vmul.f32 %v1301, %v1387
      %v1399 = vmul.f32 %v1305, %v1387
      %v1400 = vmul.f32 %v1309, %v1387
      %v1401 = vmul.f32 %v1313, %v1387
      %v1402 = vmul.f32 %v1317, %v1387
      %v1403 = vmul.f32 %v1321, %v1387
      %v1404 = vmul.f32 %v1325, %v1387
      %v1405 = vmul.f32 %v1329, %v1387
      %v1406 = vmul.f32 %v1333, %v1387
      %v1407 = vmul.f32 %v1337, %v1387
      %v1408 = vmul.f32 %v1341, %v1387
      %v1409 = vmul.f32 %v1345, %v1387
      %v1410 = vmul.f32 %v1349, %v1387
      %v1411 = vmul.f32 %v1353, %v1387
      %v1412 = vmul.f32 %v1357, %v1387
      %v1413 = vmul.f32 %v1361, %v1387
      %v1414 = vmul.f32 %v1365, %v1387
      %v1415 = vmul.f32 %v1369, %v1387
      %v1416 = vmul.f32 %v1373, %v1387
      %v1417 = vmul.f32 %v1377, %v1387
      %v1418 = vmul.f32 %v1381, %v1387
      %v1419 = vmul.f32 %v1385, %v1387
      %v1420 = vadd.f32 %v1227, %v1388
      %v1421 = vadd.f32 %v1228, %v1389
      %v1422 = vadd.f32 %v1229, %v1390
      %v1423 = vadd.f32 %v1230, %v1391
      %v1424 = vadd.f32 %v1231, %v1392
      %v1425 = vadd.f32 %v1232, %v1393
      %v1426 = vadd.f32 %v1233, %v1394
      %v1427 = vadd.f32 %v1234, %v1395
      %v1428 = vadd.f32 %v1235, %v1396
      %v1429 = vadd.f32 %v1236, %v1397
      %v1430 = vadd.f32 %v1237, %v1398
      %v1431 = vadd.f32 %v1238, %v1399
      %v1432 = vadd.f32 %v1239, %v1400
      %v1433 = vadd.f32 %v1240, %v1401
      %v1434 = vadd.f32 %v1241, %v1402
      %v1435 = vadd.f32 %v1242, %v1403
      %v1436 = vadd.f32 %v1243, %v1404
      %v1437 = vadd.f32 %v1244, %v1405
      %v1438 = vadd.f32 %v1245, %v1406
      %v1439 = vadd.f32 %v1246, %v1407
      %v1440 = vadd.f32 %v1247, %v1408
      %v1441 = vadd.f32 %v1248, %v1409
      %v1442 = vadd.f32 %v1249, %v1410
      %v1443 = vadd.f32 %v1250, %v1411
      %v1444 = vadd.f32 %v1251, %v1412
      %v1445 = vadd.f32 %v1252, %v1413
      %v1446 = vadd.f32 %v1253, %v1414
      %v1447 = vadd.f32 %v1254, %v1415
      %v1448 = vadd.f32 %v1255, %v1416
      %v1449 = vadd.f32 %v1256, %v1417
      %v1450 = vadd.f32 %v1257, %v1418
      %v1451 = vadd.f32 %v1258, %v1419
      %1452 = vset.pattern.permute.xlu0 5
      %1453 = vperm.xlu0 %1452, %v454
      %v1454 = vpop.permute.xlu0 %1453
      %1456 = vset.pattern.permute.xlu0 5
      %1457 = vperm.xlu0 %1456, %v455
      %v1458 = vpop.permute.xlu0 %1457
      %1460 = vset.pattern.permute.xlu0 5
      %1461 = vperm.xlu0 %1460, %v456
      %v1462 = vpop.permute.xlu0 %1461
      %1464 = vset.pattern.permute.xlu0 5
      %1465 = vperm.xlu0 %1464, %v457
      %v1466 = vpop.permute.xlu0 %1465
      %1468 = vset.pattern.permute.xlu0 5
      %1469 = vperm.xlu0 %1468, %v458
      %v1470 = vpop.permute.xlu0 %1469
      %1472 = vset.pattern.permute.xlu0 5
      %1473 = vperm.xlu0 %1472, %v459
      %v1474 = vpop.permute.xlu0 %1473
      %1476 = vset.pattern.permute.xlu0 5
      %1477 = vperm.xlu0 %1476, %v460
      %v1478 = vpop.permute.xlu0 %1477
      %1480 = vset.pattern.permute.xlu0 5
      %1481 = vperm.xlu0 %1480, %v461
      %v1482 = vpop.permute.xlu0 %1481
      %1484 = vset.pattern.permute.xlu0 5
      %1485 = vperm.xlu0 %1484, %v462
      %v1486 = vpop.permute.xlu0 %1485
      %1488 = vset.pattern.permute.xlu0 5
      %1489 = vperm.xlu0 %1488, %v463
      %v1490 = vpop.permute.xlu0 %1489
      %1492 = vset.pattern.permute.xlu0 5
      %1493 = vperm.xlu0 %1492, %v464
      %v1494 = vpop.permute.xlu0 %1493
      %1496 = vset.pattern.permute.xlu0 5
      %1497 = vperm.xlu0 %1496, %v465
      %v1498 = vpop.permute.xlu0 %1497
      %1500 = vset.pattern.permute.xlu0 5
      %1501 = vperm.xlu0 %1500, %v466
      %v1502 = vpop.permute.xlu0 %1501
      %1504 = vset.pattern.permute.xlu0 5
      %1505 = vperm.xlu0 %1504, %v467
      %v1506 = vpop.permute.xlu0 %1505
      %1508 = vset.pattern.permute.xlu0 5
      %1509 = vperm.xlu0 %1508, %v468
      %v1510 = vpop.permute.xlu0 %1509
      %1512 = vset.pattern.permute.xlu0 5
      %1513 = vperm.xlu0 %1512, %v469
      %v1514 = vpop.permute.xlu0 %1513
      %1516 = vset.pattern.permute.xlu0 5
      %1517 = vperm.xlu0 %1516, %v470
      %v1518 = vpop.permute.xlu0 %1517
      %1520 = vset.pattern.permute.xlu0 5
      %1521 = vperm.xlu0 %1520, %v471
      %v1522 = vpop.permute.xlu0 %1521
      %1524 = vset.pattern.permute.xlu0 5
      %1525 = vperm.xlu0 %1524, %v472
      %v1526 = vpop.permute.xlu0 %1525
      %1528 = vset.pattern.permute.xlu0 5
      %1529 = vperm.xlu0 %1528, %v473
      %v1530 = vpop.permute.xlu0 %1529
      %1532 = vset.pattern.permute.xlu0 5
      %1533 = vperm.xlu0 %1532, %v474
      %v1534 = vpop.permute.xlu0 %1533
      %1536 = vset.pattern.permute.xlu0 5
      %1537 = vperm.xlu0 %1536, %v475
      %v1538 = vpop.permute.xlu0 %1537
      %1540 = vset.pattern.permute.xlu0 5
      %1541 = vperm.xlu0 %1540, %v476
      %v1542 = vpop.permute.xlu0 %1541
      %1544 = vset.pattern.permute.xlu0 5
      %1545 = vperm.xlu0 %1544, %v477
      %v1546 = vpop.permute.xlu0 %1545
      %1548 = vset.pattern.permute.xlu0 5
      %1549 = vperm.xlu0 %1548, %v478
      %v1550 = vpop.permute.xlu0 %1549
      %1552 = vset.pattern.permute.xlu0 5
      %1553 = vperm.xlu0 %1552, %v479
      %v1554 = vpop.permute.xlu0 %1553
      %1556 = vset.pattern.permute.xlu0 5
      %1557 = vperm.xlu0 %1556, %v480
      %v1558 = vpop.permute.xlu0 %1557
      %1560 = vset.pattern.permute.xlu0 5
      %1561 = vperm.xlu0 %1560, %v481
      %v1562 = vpop.permute.xlu0 %1561
      %1564 = vset.pattern.permute.xlu0 5
      %1565 = vperm.xlu0 %1564, %v482
      %v1566 = vpop.permute.xlu0 %1565
      %1568 = vset.pattern.permute.xlu0 5
      %1569 = vperm.xlu0 %1568, %v483
      %v1570 = vpop.permute.xlu0 %1569
      %1572 = vset.pattern.permute.xlu0 5
      %1573 = vperm.xlu0 %1572, %v484
      %v1574 = vpop.permute.xlu0 %1573
      %1576 = vset.pattern.permute.xlu0 5
      %1577 = vperm.xlu0 %1576, %v485
      %v1578 = vpop.permute.xlu0 %1577
      %v1580 = vperm.slane %v486, 5
      %v1581 = vmul.f32 %v1454, %v1580
      %v1582 = vmul.f32 %v1458, %v1580
      %v1583 = vmul.f32 %v1462, %v1580
      %v1584 = vmul.f32 %v1466, %v1580
      %v1585 = vmul.f32 %v1470, %v1580
      %v1586 = vmul.f32 %v1474, %v1580
      %v1587 = vmul.f32 %v1478, %v1580
      %v1588 = vmul.f32 %v1482, %v1580
      %v1589 = vmul.f32 %v1486, %v1580
      %v1590 = vmul.f32 %v1490, %v1580
      %v1591 = vmul.f32 %v1494, %v1580
      %v1592 = vmul.f32 %v1498, %v1580
      %v1593 = vmul.f32 %v1502, %v1580
      %v1594 = vmul.f32 %v1506, %v1580
      %v1595 = vmul.f32 %v1510, %v1580
      %v1596 = vmul.f32 %v1514, %v1580
      %v1597 = vmul.f32 %v1518, %v1580
      %v1598 = vmul.f32 %v1522, %v1580
      %v1599 = vmul.f32 %v1526, %v1580
      %v1600 = vmul.f32 %v1530, %v1580
      %v1601 = vmul.f32 %v1534, %v1580
      %v1602 = vmul.f32 %v1538, %v1580
      %v1603 = vmul.f32 %v1542, %v1580
      %v1604 = vmul.f32 %v1546, %v1580
      %v1605 = vmul.f32 %v1550, %v1580
      %v1606 = vmul.f32 %v1554, %v1580
      %v1607 = vmul.f32 %v1558, %v1580
      %v1608 = vmul.f32 %v1562, %v1580
      %v1609 = vmul.f32 %v1566, %v1580
      %v1610 = vmul.f32 %v1570, %v1580
      %v1611 = vmul.f32 %v1574, %v1580
      %v1612 = vmul.f32 %v1578, %v1580
      %v1613 = vadd.f32 %v1420, %v1581
      %v1614 = vadd.f32 %v1421, %v1582
      %v1615 = vadd.f32 %v1422, %v1583
      %v1616 = vadd.f32 %v1423, %v1584
      %v1617 = vadd.f32 %v1424, %v1585
      %v1618 = vadd.f32 %v1425, %v1586
      %v1619 = vadd.f32 %v1426, %v1587
      %v1620 = vadd.f32 %v1427, %v1588
      %v1621 = vadd.f32 %v1428, %v1589
      %v1622 = vadd.f32 %v1429, %v1590
      %v1623 = vadd.f32 %v1430, %v1591
      %v1624 = vadd.f32 %v1431, %v1592
      %v1625 = vadd.f32 %v1432, %v1593
      %v1626 = vadd.f32 %v1433, %v1594
      %v1627 = vadd.f32 %v1434, %v1595
      %v1628 = vadd.f32 %v1435, %v1596
      %v1629 = vadd.f32 %v1436, %v1597
      %v1630 = vadd.f32 %v1437, %v1598
      %v1631 = vadd.f32 %v1438, %v1599
      %v1632 = vadd.f32 %v1439, %v1600
      %v1633 = vadd.f32 %v1440, %v1601
      %v1634 = vadd.f32 %v1441, %v1602
      %v1635 = vadd.f32 %v1442, %v1603
      %v1636 = vadd.f32 %v1443, %v1604
      %v1637 = vadd.f32 %v1444, %v1605
      %v1638 = vadd.f32 %v1445, %v1606
      %v1639 = vadd.f32 %v1446, %v1607
      %v1640 = vadd.f32 %v1447, %v1608
      %v1641 = vadd.f32 %v1448, %v1609
      %v1642 = vadd.f32 %v1449, %v1610
      %v1643 = vadd.f32 %v1450, %v1611
      %v1644 = vadd.f32 %v1451, %v1612
      %1645 = vset.pattern.permute.xlu0 6
      %1646 = vperm.xlu0 %1645, %v454
      %v1647 = vpop.permute.xlu0 %1646
      %1649 = vset.pattern.permute.xlu0 6
      %1650 = vperm.xlu0 %1649, %v455
      %v1651 = vpop.permute.xlu0 %1650
      %1653 = vset.pattern.permute.xlu0 6
      %1654 = vperm.xlu0 %1653, %v456
      %v1655 = vpop.permute.xlu0 %1654
      %1657 = vset.pattern.permute.xlu0 6
      %1658 = vperm.xlu0 %1657, %v457
      %v1659 = vpop.permute.xlu0 %1658
      %1661 = vset.pattern.permute.xlu0 6
      %1662 = vperm.xlu0 %1661, %v458
      %v1663 = vpop.permute.xlu0 %1662
      %1665 = vset.pattern.permute.xlu0 6
      %1666 = vperm.xlu0 %1665, %v459
      %v1667 = vpop.permute.xlu0 %1666
      %1669 = vset.pattern.permute.xlu0 6
      %1670 = vperm.xlu0 %1669, %v460
      %v1671 = vpop.permute.xlu0 %1670
      %1673 = vset.pattern.permute.xlu0 6
      %1674 = vperm.xlu0 %1673, %v461
      %v1675 = vpop.permute.xlu0 %1674
      %1677 = vset.pattern.permute.xlu0 6
      %1678 = vperm.xlu0 %1677, %v462
      %v1679 = vpop.permute.xlu0 %1678
      %1681 = vset.pattern.permute.xlu0 6
      %1682 = vperm.xlu0 %1681, %v463
      %v1683 = vpop.permute.xlu0 %1682
      %1685 = vset.pattern.permute.xlu0 6
      %1686 = vperm.xlu0 %1685, %v464
      %v1687 = vpop.permute.xlu0 %1686
      %1689 = vset.pattern.permute.xlu0 6
      %1690 = vperm.xlu0 %1689, %v465
      %v1691 = vpop.permute.xlu0 %1690
      %1693 = vset.pattern.permute.xlu0 6
      %1694 = vperm.xlu0 %1693, %v466
      %v1695 = vpop.permute.xlu0 %1694
      %1697 = vset.pattern.permute.xlu0 6
      %1698 = vperm.xlu0 %1697, %v467
      %v1699 = vpop.permute.xlu0 %1698
      %1701 = vset.pattern.permute.xlu0 6
      %1702 = vperm.xlu0 %1701, %v468
      %v1703 = vpop.permute.xlu0 %1702
      %1705 = vset.pattern.permute.xlu0 6
      %1706 = vperm.xlu0 %1705, %v469
      %v1707 = vpop.permute.xlu0 %1706
      %1709 = vset.pattern.permute.xlu0 6
      %1710 = vperm.xlu0 %1709, %v470
      %v1711 = vpop.permute.xlu0 %1710
      %1713 = vset.pattern.permute.xlu0 6
      %1714 = vperm.xlu0 %1713, %v471
      %v1715 = vpop.permute.xlu0 %1714
      %1717 = vset.pattern.permute.xlu0 6
      %1718 = vperm.xlu0 %1717, %v472
      %v1719 = vpop.permute.xlu0 %1718
      %1721 = vset.pattern.permute.xlu0 6
      %1722 = vperm.xlu0 %1721, %v473
      %v1723 = vpop.permute.xlu0 %1722
      %1725 = vset.pattern.permute.xlu0 6
      %1726 = vperm.xlu0 %1725, %v474
      %v1727 = vpop.permute.xlu0 %1726
      %1729 = vset.pattern.permute.xlu0 6
      %1730 = vperm.xlu0 %1729, %v475
      %v1731 = vpop.permute.xlu0 %1730
      %1733 = vset.pattern.permute.xlu0 6
      %1734 = vperm.xlu0 %1733, %v476
      %v1735 = vpop.permute.xlu0 %1734
      %1737 = vset.pattern.permute.xlu0 6
      %1738 = vperm.xlu0 %1737, %v477
      %v1739 = vpop.permute.xlu0 %1738
      %1741 = vset.pattern.permute.xlu0 6
      %1742 = vperm.xlu0 %1741, %v478
      %v1743 = vpop.permute.xlu0 %1742
      %1745 = vset.pattern.permute.xlu0 6
      %1746 = vperm.xlu0 %1745, %v479
      %v1747 = vpop.permute.xlu0 %1746
      %1749 = vset.pattern.permute.xlu0 6
      %1750 = vperm.xlu0 %1749, %v480
      %v1751 = vpop.permute.xlu0 %1750
      %1753 = vset.pattern.permute.xlu0 6
      %1754 = vperm.xlu0 %1753, %v481
      %v1755 = vpop.permute.xlu0 %1754
      %1757 = vset.pattern.permute.xlu0 6
      %1758 = vperm.xlu0 %1757, %v482
      %v1759 = vpop.permute.xlu0 %1758
      %1761 = vset.pattern.permute.xlu0 6
      %1762 = vperm.xlu0 %1761, %v483
      %v1763 = vpop.permute.xlu0 %1762
      %1765 = vset.pattern.permute.xlu0 6
      %1766 = vperm.xlu0 %1765, %v484
      %v1767 = vpop.permute.xlu0 %1766
      %1769 = vset.pattern.permute.xlu0 6
      %1770 = vperm.xlu0 %1769, %v485
      %v1771 = vpop.permute.xlu0 %1770
      %v1773 = vperm.slane %v486, 6
      %v1774 = vmul.f32 %v1647, %v1773
      %v1775 = vmul.f32 %v1651, %v1773
      %v1776 = vmul.f32 %v1655, %v1773
      %v1777 = vmul.f32 %v1659, %v1773
      %v1778 = vmul.f32 %v1663, %v1773
      %v1779 = vmul.f32 %v1667, %v1773
      %v1780 = vmul.f32 %v1671, %v1773
      %v1781 = vmul.f32 %v1675, %v1773
      %v1782 = vmul.f32 %v1679, %v1773
      %v1783 = vmul.f32 %v1683, %v1773
      %v1784 = vmul.f32 %v1687, %v1773
      %v1785 = vmul.f32 %v1691, %v1773
      %v1786 = vmul.f32 %v1695, %v1773
      %v1787 = vmul.f32 %v1699, %v1773
      %v1788 = vmul.f32 %v1703, %v1773
      %v1789 = vmul.f32 %v1707, %v1773
      %v1790 = vmul.f32 %v1711, %v1773
      %v1791 = vmul.f32 %v1715, %v1773
      %v1792 = vmul.f32 %v1719, %v1773
      %v1793 = vmul.f32 %v1723, %v1773
      %v1794 = vmul.f32 %v1727, %v1773
      %v1795 = vmul.f32 %v1731, %v1773
      %v1796 = vmul.f32 %v1735, %v1773
      %v1797 = vmul.f32 %v1739, %v1773
      %v1798 = vmul.f32 %v1743, %v1773
      %v1799 = vmul.f32 %v1747, %v1773
      %v1800 = vmul.f32 %v1751, %v1773
      %v1801 = vmul.f32 %v1755, %v1773
      %v1802 = vmul.f32 %v1759, %v1773
      %v1803 = vmul.f32 %v1763, %v1773
      %v1804 = vmul.f32 %v1767, %v1773
      %v1805 = vmul.f32 %v1771, %v1773
      %v1806 = vadd.f32 %v1613, %v1774
      %v1807 = vadd.f32 %v1614, %v1775
      %v1808 = vadd.f32 %v1615, %v1776
      %v1809 = vadd.f32 %v1616, %v1777
      %v1810 = vadd.f32 %v1617, %v1778
      %v1811 = vadd.f32 %v1618, %v1779
      %v1812 = vadd.f32 %v1619, %v1780
      %v1813 = vadd.f32 %v1620, %v1781
      %v1814 = vadd.f32 %v1621, %v1782
      %v1815 = vadd.f32 %v1622, %v1783
      %v1816 = vadd.f32 %v1623, %v1784
      %v1817 = vadd.f32 %v1624, %v1785
      %v1818 = vadd.f32 %v1625, %v1786
      %v1819 = vadd.f32 %v1626, %v1787
      %v1820 = vadd.f32 %v1627, %v1788
      %v1821 = vadd.f32 %v1628, %v1789
      %v1822 = vadd.f32 %v1629, %v1790
      %v1823 = vadd.f32 %v1630, %v1791
      %v1824 = vadd.f32 %v1631, %v1792
      %v1825 = vadd.f32 %v1632, %v1793
      %v1826 = vadd.f32 %v1633, %v1794
      %v1827 = vadd.f32 %v1634, %v1795
      %v1828 = vadd.f32 %v1635, %v1796
      %v1829 = vadd.f32 %v1636, %v1797
      %v1830 = vadd.f32 %v1637, %v1798
      %v1831 = vadd.f32 %v1638, %v1799
      %v1832 = vadd.f32 %v1639, %v1800
      %v1833 = vadd.f32 %v1640, %v1801
      %v1834 = vadd.f32 %v1641, %v1802
      %v1835 = vadd.f32 %v1642, %v1803
      %v1836 = vadd.f32 %v1643, %v1804
      %v1837 = vadd.f32 %v1644, %v1805
      %1838 = vset.pattern.permute.xlu0 7
      %1839 = vperm.xlu0 %1838, %v454
      %v1840 = vpop.permute.xlu0 %1839
      %1842 = vset.pattern.permute.xlu0 7
      %1843 = vperm.xlu0 %1842, %v455
      %v1844 = vpop.permute.xlu0 %1843
      %1846 = vset.pattern.permute.xlu0 7
      %1847 = vperm.xlu0 %1846, %v456
      %v1848 = vpop.permute.xlu0 %1847
      %1850 = vset.pattern.permute.xlu0 7
      %1851 = vperm.xlu0 %1850, %v457
      %v1852 = vpop.permute.xlu0 %1851
      %1854 = vset.pattern.permute.xlu0 7
      %1855 = vperm.xlu0 %1854, %v458
      %v1856 = vpop.permute.xlu0 %1855
      %1858 = vset.pattern.permute.xlu0 7
      %1859 = vperm.xlu0 %1858, %v459
      %v1860 = vpop.permute.xlu0 %1859
      %1862 = vset.pattern.permute.xlu0 7
      %1863 = vperm.xlu0 %1862, %v460
      %v1864 = vpop.permute.xlu0 %1863
      %1866 = vset.pattern.permute.xlu0 7
      %1867 = vperm.xlu0 %1866, %v461
      %v1868 = vpop.permute.xlu0 %1867
      %1870 = vset.pattern.permute.xlu0 7
      %1871 = vperm.xlu0 %1870, %v462
      %v1872 = vpop.permute.xlu0 %1871
      %1874 = vset.pattern.permute.xlu0 7
      %1875 = vperm.xlu0 %1874, %v463
      %v1876 = vpop.permute.xlu0 %1875
      %1878 = vset.pattern.permute.xlu0 7
      %1879 = vperm.xlu0 %1878, %v464
      %v1880 = vpop.permute.xlu0 %1879
      %1882 = vset.pattern.permute.xlu0 7
      %1883 = vperm.xlu0 %1882, %v465
      %v1884 = vpop.permute.xlu0 %1883
      %1886 = vset.pattern.permute.xlu0 7
      %1887 = vperm.xlu0 %1886, %v466
      %v1888 = vpop.permute.xlu0 %1887
      %1890 = vset.pattern.permute.xlu0 7
      %1891 = vperm.xlu0 %1890, %v467
      %v1892 = vpop.permute.xlu0 %1891
      %1894 = vset.pattern.permute.xlu0 7
      %1895 = vperm.xlu0 %1894, %v468
      %v1896 = vpop.permute.xlu0 %1895
      %1898 = vset.pattern.permute.xlu0 7
      %1899 = vperm.xlu0 %1898, %v469
      %v1900 = vpop.permute.xlu0 %1899
      %1902 = vset.pattern.permute.xlu0 7
      %1903 = vperm.xlu0 %1902, %v470
      %v1904 = vpop.permute.xlu0 %1903
      %1906 = vset.pattern.permute.xlu0 7
      %1907 = vperm.xlu0 %1906, %v471
      %v1908 = vpop.permute.xlu0 %1907
      %1910 = vset.pattern.permute.xlu0 7
      %1911 = vperm.xlu0 %1910, %v472
      %v1912 = vpop.permute.xlu0 %1911
      %1914 = vset.pattern.permute.xlu0 7
      %1915 = vperm.xlu0 %1914, %v473
      %v1916 = vpop.permute.xlu0 %1915
      %1918 = vset.pattern.permute.xlu0 7
      %1919 = vperm.xlu0 %1918, %v474
      %v1920 = vpop.permute.xlu0 %1919
      %1922 = vset.pattern.permute.xlu0 7
      %1923 = vperm.xlu0 %1922, %v475
      %v1924 = vpop.permute.xlu0 %1923
      %1926 = vset.pattern.permute.xlu0 7
      %1927 = vperm.xlu0 %1926, %v476
      %v1928 = vpop.permute.xlu0 %1927
      %1930 = vset.pattern.permute.xlu0 7
      %1931 = vperm.xlu0 %1930, %v477
      %v1932 = vpop.permute.xlu0 %1931
      %1934 = vset.pattern.permute.xlu0 7
      %1935 = vperm.xlu0 %1934, %v478
      %v1936 = vpop.permute.xlu0 %1935
      %1938 = vset.pattern.permute.xlu0 7
      %1939 = vperm.xlu0 %1938, %v479
      %v1940 = vpop.permute.xlu0 %1939
      %1942 = vset.pattern.permute.xlu0 7
      %1943 = vperm.xlu0 %1942, %v480
      %v1944 = vpop.permute.xlu0 %1943
      %1946 = vset.pattern.permute.xlu0 7
      %1947 = vperm.xlu0 %1946, %v481
      %v1948 = vpop.permute.xlu0 %1947
      %1950 = vset.pattern.permute.xlu0 7
      %1951 = vperm.xlu0 %1950, %v482
      %v1952 = vpop.permute.xlu0 %1951
      %1954 = vset.pattern.permute.xlu0 7
      %1955 = vperm.xlu0 %1954, %v483
      %v1956 = vpop.permute.xlu0 %1955
      %1958 = vset.pattern.permute.xlu0 7
      %1959 = vperm.xlu0 %1958, %v484
      %v1960 = vpop.permute.xlu0 %1959
      %1962 = vset.pattern.permute.xlu0 7
      %1963 = vperm.xlu0 %1962, %v485
      %v1964 = vpop.permute.xlu0 %1963
      %v1966 = vperm.slane %v486, 7
      %v1967 = vmul.f32 %v1840, %v1966
      %v1968 = vmul.f32 %v1844, %v1966
      %v1969 = vmul.f32 %v1848, %v1966
      %v1970 = vmul.f32 %v1852, %v1966
      %v1971 = vmul.f32 %v1856, %v1966
      %v1972 = vmul.f32 %v1860, %v1966
      %v1973 = vmul.f32 %v1864, %v1966
      %v1974 = vmul.f32 %v1868, %v1966
      %v1975 = vmul.f32 %v1872, %v1966
      %v1976 = vmul.f32 %v1876, %v1966
      %v1977 = vmul.f32 %v1880, %v1966
      %v1978 = vmul.f32 %v1884, %v1966
      %v1979 = vmul.f32 %v1888, %v1966
      %v1980 = vmul.f32 %v1892, %v1966
      %v1981 = vmul.f32 %v1896, %v1966
      %v1982 = vmul.f32 %v1900, %v1966
      %v1983 = vmul.f32 %v1904, %v1966
      %v1984 = vmul.f32 %v1908, %v1966
      %v1985 = vmul.f32 %v1912, %v1966
      %v1986 = vmul.f32 %v1916, %v1966
      %v1987 = vmul.f32 %v1920, %v1966
      %v1988 = vmul.f32 %v1924, %v1966
      %v1989 = vmul.f32 %v1928, %v1966
      %v1990 = vmul.f32 %v1932, %v1966
      %v1991 = vmul.f32 %v1936, %v1966
      %v1992 = vmul.f32 %v1940, %v1966
      %v1993 = vmul.f32 %v1944, %v1966
      %v1994 = vmul.f32 %v1948, %v1966
      %v1995 = vmul.f32 %v1952, %v1966
      %v1996 = vmul.f32 %v1956, %v1966
      %v1997 = vmul.f32 %v1960, %v1966
      %v1998 = vmul.f32 %v1964, %v1966
      %v1999 = vadd.f32 %v1806, %v1967
      %v2000 = vadd.f32 %v1807, %v1968
      %v2001 = vadd.f32 %v1808, %v1969
      %v2002 = vadd.f32 %v1809, %v1970
      %v2003 = vadd.f32 %v1810, %v1971
      %v2004 = vadd.f32 %v1811, %v1972
      %v2005 = vadd.f32 %v1812, %v1973
      %v2006 = vadd.f32 %v1813, %v1974
      %v2007 = vadd.f32 %v1814, %v1975
      %v2008 = vadd.f32 %v1815, %v1976
      %v2009 = vadd.f32 %v1816, %v1977
      %v2010 = vadd.f32 %v1817, %v1978
      %v2011 = vadd.f32 %v1818, %v1979
      %v2012 = vadd.f32 %v1819, %v1980
      %v2013 = vadd.f32 %v1820, %v1981
      %v2014 = vadd.f32 %v1821, %v1982
      %v2015 = vadd.f32 %v1822, %v1983
      %v2016 = vadd.f32 %v1823, %v1984
      %v2017 = vadd.f32 %v1824, %v1985
      %v2018 = vadd.f32 %v1825, %v1986
      %v2019 = vadd.f32 %v1826, %v1987
      %v2020 = vadd.f32 %v1827, %v1988
      %v2021 = vadd.f32 %v1828, %v1989
      %v2022 = vadd.f32 %v1829, %v1990
      %v2023 = vadd.f32 %v1830, %v1991
      %v2024 = vadd.f32 %v1831, %v1992
      %v2025 = vadd.f32 %v1832, %v1993
      %v2026 = vadd.f32 %v1833, %v1994
      %v2027 = vadd.f32 %v1834, %v1995
      %v2028 = vadd.f32 %v1835, %v1996
      %v2029 = vadd.f32 %v1836, %v1997
      %v2030 = vadd.f32 %v1837, %v1998
      %vm2031 = vcmask 15360
      %2032 = vst.msk [vmem:[#allocation2] sm:$0xff] %vm2031, 0.0
      %2033 = vst.msk [vmem:[#allocation2 + $0x8] sm:$0xff] %vm2031, 0.0
      %vm2034 = vcmask 9216
      %2035 = vst.msk [vmem:[#allocation2 + $0x10] sm:$0x3] %vm2034, 0.0
      %2036 = vst.msk [vmem:[#allocation2 + $0x18] sm:$0xff] %vm2031, 0.0
      %2037 = vst.msk [vmem:[#allocation2 + $0x20] sm:$0xff] %vm2031, 0.0
      %2038 = vst.msk [vmem:[#allocation2 + $0x28] sm:$0x3] %vm2034, 0.0
      %2039 = vst.msk [vmem:[#allocation2 + $0x30] sm:$0xff] %vm2031, 0.0
      %2040 = vst.msk [vmem:[#allocation2 + $0x38] sm:$0xff] %vm2031, 0.0
      %2041 = vst.msk [vmem:[#allocation2 + $0x40] sm:$0x3] %vm2034, 0.0
      %2042 = vst.msk [vmem:[#allocation2 + $0x48] sm:$0xff] %vm2031, 0.0
      %2043 = vst.msk [vmem:[#allocation2 + $0x50] sm:$0xff] %vm2031, 0.0
      %2044 = vst.msk [vmem:[#allocation2 + $0x58] sm:$0x3] %vm2034, 0.0
      %2045 = vst.msk [vmem:[#allocation2 + $0x60] sm:$0xff] %vm2031, 0.0
      %2046 = vst.msk [vmem:[#allocation2 + $0x68] sm:$0xff] %vm2031, 0.0
      %2047 = vst.msk [vmem:[#allocation2 + $0x70] sm:$0x3] %vm2034, 0.0
      %2048 = vst.msk [vmem:[#allocation2 + $0x78] sm:$0xff] %vm2031, 0.0
      %2049 = vst.msk [vmem:[#allocation2 + $0x80] sm:$0xff] %vm2031, 0.0
      %2050 = vst.msk [vmem:[#allocation2 + $0x88] sm:$0x3] %vm2034, 0.0
      %2051 = vst.msk [vmem:[#allocation2 + $0x90] sm:$0xff] %vm2031, 0.0
      %2052 = vst.msk [vmem:[#allocation2 + $0x98] sm:$0xff] %vm2031, 0.0
      %2053 = vst.msk [vmem:[#allocation2 + $0xa0] sm:$0x3] %vm2034, 0.0
      %2054 = vst.msk [vmem:[#allocation2 + $0xa8] sm:$0xff] %vm2031, 0.0
      %2055 = vst.msk [vmem:[#allocation2 + $0xb0] sm:$0xff] %vm2031, 0.0
      %2056 = vst.msk [vmem:[#allocation2 + $0xb8] sm:$0x3] %vm2034, 0.0
      %2057 = vst.msk [vmem:[#allocation2 + $0xc0] sm:$0xff] %vm2031, 0.0
      %2058 = vst.msk [vmem:[#allocation2 + $0xc8] sm:$0xff] %vm2031, 0.0
      %2059 = vst.msk [vmem:[#allocation2 + $0xd0] sm:$0x3] %vm2034, 0.0
      %2060 = vst.msk [vmem:[#allocation2 + $0xd8] sm:$0xff] %vm2031, 0.0
      %2061 = vst.msk [vmem:[#allocation2 + $0xe0] sm:$0xff] %vm2031, 0.0
      %2062 = vst.msk [vmem:[#allocation2 + $0xe8] sm:$0x3] %vm2034, 0.0
      %2063 = vst.msk [vmem:[#allocation2 + $0xf0] sm:$0xff] %vm2031, 0.0
      %2064 = vst.msk [vmem:[#allocation2 + $0xf8] sm:$0xff] %vm2031, 0.0
      %2065 = vst.msk [vmem:[#allocation2 + $0x100] sm:$0x3] %vm2034, 0.0
      %2066 = vst.msk [vmem:[#allocation2 + $0x108] sm:$0xff] %vm2031, 0.0
      %2067 = vst.msk [vmem:[#allocation2 + $0x110] sm:$0xff] %vm2031, 0.0
      %2068 = vst.msk [vmem:[#allocation2 + $0x118] sm:$0x3] %vm2034, 0.0
      %2069 = vst.msk [vmem:[#allocation2 + $0x120] sm:$0xff] %vm2031, 0.0
      %2070 = vst.msk [vmem:[#allocation2 + $0x128] sm:$0xff] %vm2031, 0.0
      %2071 = vst.msk [vmem:[#allocation2 + $0x130] sm:$0x3] %vm2034, 0.0
      %2072 = vst.msk [vmem:[#allocation2 + $0x138] sm:$0xff] %vm2031, 0.0
      %2073 = vst.msk [vmem:[#allocation2 + $0x140] sm:$0xff] %vm2031, 0.0
      %2074 = vst.msk [vmem:[#allocation2 + $0x148] sm:$0x3] %vm2034, 0.0
      %2075 = vst.msk [vmem:[#allocation2 + $0x150] sm:$0xff] %vm2031, 0.0
      %2076 = vst.msk [vmem:[#allocation2 + $0x158] sm:$0xff] %vm2031, 0.0
      %2077 = vst.msk [vmem:[#allocation2 + $0x160] sm:$0x3] %vm2034, 0.0
      %2078 = vst.msk [vmem:[#allocation2 + $0x168] sm:$0xff] %vm2031, 0.0
      %2079 = vst.msk [vmem:[#allocation2 + $0x170] sm:$0xff] %vm2031, 0.0
      %2080 = vst.msk [vmem:[#allocation2 + $0x178] sm:$0x3] %vm2034, 0.0
      %2081 = vst.msk [vmem:[#allocation2 + $0x180] sm:$0xff] %vm2031, 0.0
      %2082 = vst.msk [vmem:[#allocation2 + $0x188] sm:$0xff] %vm2031, 0.0
      %2083 = vst.msk [vmem:[#allocation2 + $0x190] sm:$0x3] %vm2034, 0.0
      %2084 = vst.msk [vmem:[#allocation2 + $0x198] sm:$0xff] %vm2031, 0.0
      %2085 = vst.msk [vmem:[#allocation2 + $0x1a0] sm:$0xff] %vm2031, 0.0
      %2086 = vst.msk [vmem:[#allocation2 + $0x1a8] sm:$0x3] %vm2034, 0.0
      %s2087 = scalar_lea.vmem [#allocation2], 24
      %2088 = vst.msk [vmem:[%s2087 + $0x1] sm:$0xff] %vm2031, %v1999
      %2089 = vst.msk [vmem:[%s2087 + $0x9] sm:$0xff] %vm2031, %v2000
      %2090 = vst.msk [vmem:[%s2087 + $0x19] sm:$0xff] %vm2031, %v2001
      %2091 = vst.msk [vmem:[%s2087 + $0x21] sm:$0xff] %vm2031, %v2002
      %2092 = vst.msk [vmem:[%s2087 + $0x31] sm:$0xff] %vm2031, %v2003
      %2093 = vst.msk [vmem:[%s2087 + $0x39] sm:$0xff] %vm2031, %v2004
      %2094 = vst.msk [vmem:[%s2087 + $0x49] sm:$0xff] %vm2031, %v2005
      %2095 = vst.msk [vmem:[%s2087 + $0x51] sm:$0xff] %vm2031, %v2006
      %2096 = vst.msk [vmem:[%s2087 + $0x61] sm:$0xff] %vm2031, %v2007
      %2097 = vst.msk [vmem:[%s2087 + $0x69] sm:$0xff] %vm2031, %v2008
      %2098 = vst.msk [vmem:[%s2087 + $0x79] sm:$0xff] %vm2031, %v2009
      %2099 = vst.msk [vmem:[%s2087 + $0x81] sm:$0xff] %vm2031, %v2010
      %2100 = vst.msk [vmem:[%s2087 + $0x91] sm:$0xff] %vm2031, %v2011
      %2101 = vst.msk [vmem:[%s2087 + $0x99] sm:$0xff] %vm2031, %v2012
      %2102 = vst.msk [vmem:[%s2087 + $0xa9] sm:$0xff] %vm2031, %v2013
      %2103 = vst.msk [vmem:[%s2087 + $0xb1] sm:$0xff] %vm2031, %v2014
      %2104 = vst.msk [vmem:[%s2087 + $0xc1] sm:$0xff] %vm2031, %v2015
      %2105 = vst.msk [vmem:[%s2087 + $0xc9] sm:$0xff] %vm2031, %v2016
      %2106 = vst.msk [vmem:[%s2087 + $0xd9] sm:$0xff] %vm2031, %v2017
      %2107 = vst.msk [vmem:[%s2087 + $0xe1] sm:$0xff] %vm2031, %v2018
      %2108 = vst.msk [vmem:[%s2087 + $0xf1] sm:$0xff] %vm2031, %v2019
      %2109 = vst.msk [vmem:[%s2087 + $0xf9] sm:$0xff] %vm2031, %v2020
      %2110 = vst.msk [vmem:[%s2087 + $0x109] sm:$0xff] %vm2031, %v2021
      %2111 = vst.msk [vmem:[%s2087 + $0x111] sm:$0xff] %vm2031, %v2022
      %2112 = vst.msk [vmem:[%s2087 + $0x121] sm:$0xff] %vm2031, %v2023
      %2113 = vst.msk [vmem:[%s2087 + $0x129] sm:$0xff] %vm2031, %v2024
      %2114 = vst.msk [vmem:[%s2087 + $0x139] sm:$0xff] %vm2031, %v2025
      %2115 = vst.msk [vmem:[%s2087 + $0x141] sm:$0xff] %vm2031, %v2026
      %2116 = vst.msk [vmem:[%s2087 + $0x151] sm:$0xff] %vm2031, %v2027
      %2117 = vst.msk [vmem:[%s2087 + $0x159] sm:$0xff] %vm2031, %v2028
      %2118 = vst.msk [vmem:[%s2087 + $0x169] sm:$0xff] %vm2031, %v2029
      %2119 = vst.msk [vmem:[%s2087 + $0x171] sm:$0xff] %vm2031, %v2030
      %v2120 = vld [vmem:[#allocation2] sm:$0xff]
      %v2121 = vld [vmem:[#allocation2 + $0x8] sm:$0xff]
      %v2122 = vld [vmem:[#allocation2 + $0x10] sm:$0x3]
      %v2123 = vld [vmem:[#allocation2 + $0x18] sm:$0xff]
      %v2124 = vld [vmem:[#allocation2 + $0x20] sm:$0xff]
      %v2125 = vld [vmem:[#allocation2 + $0x28] sm:$0x3]
      %v2126 = vld [vmem:[#allocation2 + $0x30] sm:$0xff]
      %v2127 = vld [vmem:[#allocation2 + $0x38] sm:$0xff]
      %v2128 = vld [vmem:[#allocation2 + $0x40] sm:$0x3]
      %v2129 = vld [vmem:[#allocation2 + $0x48] sm:$0xff]
      %v2130 = vld [vmem:[#allocation2 + $0x50] sm:$0xff]
      %v2131 = vld [vmem:[#allocation2 + $0x58] sm:$0x3]
      %v2132 = vld [vmem:[#allocation2 + $0x60] sm:$0xff]
      %v2133 = vld [vmem:[#allocation2 + $0x68] sm:$0xff]
      %v2134 = vld [vmem:[#allocation2 + $0x70] sm:$0x3]
      %v2135 = vld [vmem:[#allocation2 + $0x78] sm:$0xff]
      %v2136 = vld [vmem:[#allocation2 + $0x80] sm:$0xff]
      %v2137 = vld [vmem:[#allocation2 + $0x88] sm:$0x3]
      %v2138 = vld [vmem:[#allocation2 + $0x90] sm:$0xff]
      %v2139 = vld [vmem:[#allocation2 + $0x98] sm:$0xff]
      %v2140 = vld [vmem:[#allocation2 + $0xa0] sm:$0x3]
      %v2141 = vld [vmem:[#allocation2 + $0xa8] sm:$0xff]
      %v2142 = vld [vmem:[#allocation2 + $0xb0] sm:$0xff]
      %v2143 = vld [vmem:[#allocation2 + $0xb8] sm:$0x3]
      %v2144 = vld [vmem:[#allocation2 + $0xc0] sm:$0xff]
      %v2145 = vld [vmem:[#allocation2 + $0xc8] sm:$0xff]
      %v2146 = vld [vmem:[#allocation2 + $0xd0] sm:$0x3]
      %v2147 = vld [vmem:[#allocation2 + $0xd8] sm:$0xff]
      %v2148 = vld [vmem:[#allocation2 + $0xe0] sm:$0xff]
      %v2149 = vld [vmem:[#allocation2 + $0xe8] sm:$0x3]
      %v2150 = vld [vmem:[#allocation2 + $0xf0] sm:$0xff]
      %v2151 = vld [vmem:[#allocation2 + $0xf8] sm:$0xff]
      %v2152 = vld [vmem:[#allocation2 + $0x100] sm:$0x3]
      %v2153 = vld [vmem:[#allocation2 + $0x108] sm:$0xff]
      %v2154 = vld [vmem:[#allocation2 + $0x110] sm:$0xff]
      %v2155 = vld [vmem:[#allocation2 + $0x118] sm:$0x3]
      %v2156 = vld [vmem:[#allocation2 + $0x120] sm:$0xff]
      %v2157 = vld [vmem:[#allocation2 + $0x128] sm:$0xff]
      %v2158 = vld [vmem:[#allocation2 + $0x130] sm:$0x3]
      %v2159 = vld [vmem:[#allocation2 + $0x138] sm:$0xff]
      %v2160 = vld [vmem:[#allocation2 + $0x140] sm:$0xff]
      %v2161 = vld [vmem:[#allocation2 + $0x148] sm:$0x3]
      %v2162 = vld [vmem:[#allocation2 + $0x150] sm:$0xff]
      %v2163 = vld [vmem:[#allocation2 + $0x158] sm:$0xff]
      %v2164 = vld [vmem:[#allocation2 + $0x160] sm:$0x3]
      %v2165 = vld [vmem:[#allocation2 + $0x168] sm:$0xff]
      %v2166 = vld [vmem:[#allocation2 + $0x170] sm:$0xff]
      %v2167 = vld [vmem:[#allocation2 + $0x178] sm:$0x3]
      %v2168 = vld [vmem:[#allocation2 + $0x180] sm:$0xff]
      %v2169 = vld [vmem:[#allocation2 + $0x188] sm:$0xff]
      %v2170 = vld [vmem:[#allocation2 + $0x190] sm:$0x3]
      %v2171 = vld [vmem:[#allocation2 + $0x198] sm:$0xff]
      %v2172 = vld [vmem:[#allocation2 + $0x1a0] sm:$0xff]
      %v2173 = vld [vmem:[#allocation2 + $0x1a8] sm:$0x3]
      %v2174 = vld [vmem:[%s2] sm:$0x7]
      %v2175 = vperm.slane %v2174, 0
      %v2176 = vmul.f32 %v2175, %v2120
      %v2177 = vmul.f32 %v2175, %v2121
      %v2178 = vmul.f32 %v2175, %v2122
      %v2179 = vmul.f32 %v2175, %v2123
      %v2180 = vmul.f32 %v2175, %v2124
      %v2181 = vmul.f32 %v2175, %v2125
      %v2182 = vmul.f32 %v2175, %v2126
      %v2183 = vmul.f32 %v2175, %v2127
      %v2184 = vmul.f32 %v2175, %v2128
      %v2185 = vmul.f32 %v2175, %v2129
      %v2186 = vmul.f32 %v2175, %v2130
      %v2187 = vmul.f32 %v2175, %v2131
      %v2188 = vmul.f32 %v2175, %v2132
      %v2189 = vmul.f32 %v2175, %v2133
      %v2190 = vmul.f32 %v2175, %v2134
      %v2191 = vmul.f32 %v2175, %v2135
      %v2192 = vmul.f32 %v2175, %v2136
      %v2193 = vmul.f32 %v2175, %v2137
      %v2194 = vmul.f32 %v2175, %v2138
      %v2195 = vmul.f32 %v2175, %v2139
      %v2196 = vmul.f32 %v2175, %v2140
      %v2197 = vmul.f32 %v2175, %v2141
      %v2198 = vmul.f32 %v2175, %v2142
      %v2199 = vmul.f32 %v2175, %v2143
      %v2200 = vmul.f32 %v2175, %v2144
      %v2201 = vmul.f32 %v2175, %v2145
      %v2202 = vmul.f32 %v2175, %v2146
      %v2203 = vmul.f32 %v2175, %v2147
      %v2204 = vmul.f32 %v2175, %v2148
      %v2205 = vmul.f32 %v2175, %v2149
      %v2206 = vmul.f32 %v2175, %v2150
      %v2207 = vmul.f32 %v2175, %v2151
      %v2208 = vmul.f32 %v2175, %v2152
      %v2209 = vmul.f32 %v2175, %v2153
      %v2210 = vmul.f32 %v2175, %v2154
      %v2211 = vmul.f32 %v2175, %v2155
      %v2212 = vmul.f32 %v2175, %v2156
      %v2213 = vmul.f32 %v2175, %v2157
      %v2214 = vmul.f32 %v2175, %v2158
      %v2215 = vmul.f32 %v2175, %v2159
      %v2216 = vmul.f32 %v2175, %v2160
      %v2217 = vmul.f32 %v2175, %v2161
      %v2218 = vmul.f32 %v2175, %v2162
      %v2219 = vmul.f32 %v2175, %v2163
      %v2220 = vmul.f32 %v2175, %v2164
      %v2221 = vmul.f32 %v2175, %v2165
      %v2222 = vmul.f32 %v2175, %v2166
      %v2223 = vmul.f32 %v2175, %v2167
      %v2224 = vperm.slane %v2174, 1
      %v2225 = vmul.f32 %v2224, %v2123
      %v2226 = vmul.f32 %v2224, %v2124
      %v2227 = vmul.f32 %v2224, %v2125
      %v2228 = vmul.f32 %v2224, %v2126
      %v2229 = vmul.f32 %v2224, %v2127
      %v2230 = vmul.f32 %v2224, %v2128
      %v2231 = vmul.f32 %v2224, %v2129
      %v2232 = vmul.f32 %v2224, %v2130
      %v2233 = vmul.f32 %v2224, %v2131
      %v2234 = vmul.f32 %v2224, %v2132
      %v2235 = vmul.f32 %v2224, %v2133
      %v2236 = vmul.f32 %v2224, %v2134
      %v2237 = vmul.f32 %v2224, %v2135
      %v2238 = vmul.f32 %v2224, %v2136
      %v2239 = vmul.f32 %v2224, %v2137
      %v2240 = vmul.f32 %v2224, %v2138
      %v2241 = vmul.f32 %v2224, %v2139
      %v2242 = vmul.f32 %v2224, %v2140
      %v2243 = vmul.f32 %v2224, %v2141
      %v2244 = vmul.f32 %v2224, %v2142
      %v2245 = vmul.f32 %v2224, %v2143
      %v2246 = vmul.f32 %v2224, %v2144
      %v2247 = vmul.f32 %v2224, %v2145
      %v2248 = vmul.f32 %v2224, %v2146
      %v2249 = vmul.f32 %v2224, %v2147
      %v2250 = vmul.f32 %v2224, %v2148
      %v2251 = vmul.f32 %v2224, %v2149
      %v2252 = vmul.f32 %v2224, %v2150
      %v2253 = vmul.f32 %v2224, %v2151
      %v2254 = vmul.f32 %v2224, %v2152
      %v2255 = vmul.f32 %v2224, %v2153
      %v2256 = vmul.f32 %v2224, %v2154
      %v2257 = vmul.f32 %v2224, %v2155
      %v2258 = vmul.f32 %v2224, %v2156
      %v2259 = vmul.f32 %v2224, %v2157
      %v2260 = vmul.f32 %v2224, %v2158
      %v2261 = vmul.f32 %v2224, %v2159
      %v2262 = vmul.f32 %v2224, %v2160
      %v2263 = vmul.f32 %v2224, %v2161
      %v2264 = vmul.f32 %v2224, %v2162
      %v2265 = vmul.f32 %v2224, %v2163
      %v2266 = vmul.f32 %v2224, %v2164
      %v2267 = vmul.f32 %v2224, %v2165
      %v2268 = vmul.f32 %v2224, %v2166
      %v2269 = vmul.f32 %v2224, %v2167
      %v2270 = vmul.f32 %v2224, %v2168
      %v2271 = vmul.f32 %v2224, %v2169
      %v2272 = vmul.f32 %v2224, %v2170
      %v2273 = vadd.f32 %v2176, %v2225
      %v2274 = vadd.f32 %v2177, %v2226
      %v2275 = vadd.f32 %v2178, %v2227
      %v2276 = vadd.f32 %v2179, %v2228
      %v2277 = vadd.f32 %v2180, %v2229
      %v2278 = vadd.f32 %v2181, %v2230
      %v2279 = vadd.f32 %v2182, %v2231
      %v2280 = vadd.f32 %v2183, %v2232
      %v2281 = vadd.f32 %v2184, %v2233
      %v2282 = vadd.f32 %v2185, %v2234
      %v2283 = vadd.f32 %v2186, %v2235
      %v2284 = vadd.f32 %v2187, %v2236
      %v2285 = vadd.f32 %v2188, %v2237
      %v2286 = vadd.f32 %v2189, %v2238
      %v2287 = vadd.f32 %v2190, %v2239
      %v2288 = vadd.f32 %v2191, %v2240
      %v2289 = vadd.f32 %v2192, %v2241
      %v2290 = vadd.f32 %v2193, %v2242
      %v2291 = vadd.f32 %v2194, %v2243
      %v2292 = vadd.f32 %v2195, %v2244
      %v2293 = vadd.f32 %v2196, %v2245
      %v2294 = vadd.f32 %v2197, %v2246
      %v2295 = vadd.f32 %v2198, %v2247
      %v2296 = vadd.f32 %v2199, %v2248
      %v2297 = vadd.f32 %v2200, %v2249
      %v2298 = vadd.f32 %v2201, %v2250
      %v2299 = vadd.f32 %v2202, %v2251
      %v2300 = vadd.f32 %v2203, %v2252
      %v2301 = vadd.f32 %v2204, %v2253
      %v2302 = vadd.f32 %v2205, %v2254
      %v2303 = vadd.f32 %v2206, %v2255
      %v2304 = vadd.f32 %v2207, %v2256
      %v2305 = vadd.f32 %v2208, %v2257
      %v2306 = vadd.f32 %v2209, %v2258
      %v2307 = vadd.f32 %v2210, %v2259
      %v2308 = vadd.f32 %v2211, %v2260
      %v2309 = vadd.f32 %v2212, %v2261
      %v2310 = vadd.f32 %v2213, %v2262
      %v2311 = vadd.f32 %v2214, %v2263
      %v2312 = vadd.f32 %v2215, %v2264
      %v2313 = vadd.f32 %v2216, %v2265
      %v2314 = vadd.f32 %v2217, %v2266
      %v2315 = vadd.f32 %v2218, %v2267
      %v2316 = vadd.f32 %v2219, %v2268
      %v2317 = vadd.f32 %v2220, %v2269
      %v2318 = vadd.f32 %v2221, %v2270
      %v2319 = vadd.f32 %v2222, %v2271
      %v2320 = vadd.f32 %v2223, %v2272
      %v2321 = vperm.slane %v2174, 2
      %v2322 = vmul.f32 %v2321, %v2126
      %v2323 = vmul.f32 %v2321, %v2127
      %v2324 = vmul.f32 %v2321, %v2128
      %v2325 = vmul.f32 %v2321, %v2129
      %v2326 = vmul.f32 %v2321, %v2130
      %v2327 = vmul.f32 %v2321, %v2131
      %v2328 = vmul.f32 %v2321, %v2132
      %v2329 = vmul.f32 %v2321, %v2133
      %v2330 = vmul.f32 %v2321, %v2134
      %v2331 = vmul.f32 %v2321, %v2135
      %v2332 = vmul.f32 %v2321, %v2136
      %v2333 = vmul.f32 %v2321, %v2137
      %v2334 = vmul.f32 %v2321, %v2138
      %v2335 = vmul.f32 %v2321, %v2139
      %v2336 = vmul.f32 %v2321, %v2140
      %v2337 = vmul.f32 %v2321, %v2141
      %v2338 = vmul.f32 %v2321, %v2142
      %v2339 = vmul.f32 %v2321, %v2143
      %v2340 = vmul.f32 %v2321, %v2144
      %v2341 = vmul.f32 %v2321, %v2145
      %v2342 = vmul.f32 %v2321, %v2146
      %v2343 = vmul.f32 %v2321, %v2147
      %v2344 = vmul.f32 %v2321, %v2148
      %v2345 = vmul.f32 %v2321, %v2149
      %v2346 = vmul.f32 %v2321, %v2150
      %v2347 = vmul.f32 %v2321, %v2151
      %v2348 = vmul.f32 %v2321, %v2152
      %v2349 = vmul.f32 %v2321, %v2153
      %v2350 = vmul.f32 %v2321, %v2154
      %v2351 = vmul.f32 %v2321, %v2155
      %v2352 = vmul.f32 %v2321, %v2156
      %v2353 = vmul.f32 %v2321, %v2157
      %v2354 = vmul.f32 %v2321, %v2158
      %v2355 = vmul.f32 %v2321, %v2159
      %v2356 = vmul.f32 %v2321, %v2160
      %v2357 = vmul.f32 %v2321, %v2161
      %v2358 = vmul.f32 %v2321, %v2162
      %v2359 = vmul.f32 %v2321, %v2163
      %v2360 = vmul.f32 %v2321, %v2164
      %v2361 = vmul.f32 %v2321, %v2165
      %v2362 = vmul.f32 %v2321, %v2166
      %v2363 = vmul.f32 %v2321, %v2167
      %v2364 = vmul.f32 %v2321, %v2168
      %v2365 = vmul.f32 %v2321, %v2169
      %v2366 = vmul.f32 %v2321, %v2170
      %v2367 = vmul.f32 %v2321, %v2171
      %v2368 = vmul.f32 %v2321, %v2172
      %v2369 = vmul.f32 %v2321, %v2173
      %v2370 = vadd.f32 %v2273, %v2322
      %v2371 = vadd.f32 %v2274, %v2323
      %v2372 = vadd.f32 %v2275, %v2324
      %v2373 = vadd.f32 %v2276, %v2325
      %v2374 = vadd.f32 %v2277, %v2326
      %v2375 = vadd.f32 %v2278, %v2327
      %v2376 = vadd.f32 %v2279, %v2328
      %v2377 = vadd.f32 %v2280, %v2329
      %v2378 = vadd.f32 %v2281, %v2330
      %v2379 = vadd.f32 %v2282, %v2331
      %v2380 = vadd.f32 %v2283, %v2332
      %v2381 = vadd.f32 %v2284, %v2333
      %v2382 = vadd.f32 %v2285, %v2334
      %v2383 = vadd.f32 %v2286, %v2335
      %v2384 = vadd.f32 %v2287, %v2336
      %v2385 = vadd.f32 %v2288, %v2337
      %v2386 = vadd.f32 %v2289, %v2338
      %v2387 = vadd.f32 %v2290, %v2339
      %v2388 = vadd.f32 %v2291, %v2340
      %v2389 = vadd.f32 %v2292, %v2341
      %v2390 = vadd.f32 %v2293, %v2342
      %v2391 = vadd.f32 %v2294, %v2343
      %v2392 = vadd.f32 %v2295, %v2344
      %v2393 = vadd.f32 %v2296, %v2345
      %v2394 = vadd.f32 %v2297, %v2346
      %v2395 = vadd.f32 %v2298, %v2347
      %v2396 = vadd.f32 %v2299, %v2348
      %v2397 = vadd.f32 %v2300, %v2349
      %v2398 = vadd.f32 %v2301, %v2350
      %v2399 = vadd.f32 %v2302, %v2351
      %v2400 = vadd.f32 %v2303, %v2352
      %v2401 = vadd.f32 %v2304, %v2353
      %v2402 = vadd.f32 %v2305, %v2354
      %v2403 = vadd.f32 %v2306, %v2355
      %v2404 = vadd.f32 %v2307, %v2356
      %v2405 = vadd.f32 %v2308, %v2357
      %v2406 = vadd.f32 %v2309, %v2358
      %v2407 = vadd.f32 %v2310, %v2359
      %v2408 = vadd.f32 %v2311, %v2360
      %v2409 = vadd.f32 %v2312, %v2361
      %v2410 = vadd.f32 %v2313, %v2362
      %v2411 = vadd.f32 %v2314, %v2363
      %v2412 = vadd.f32 %v2315, %v2364
      %v2413 = vadd.f32 %v2316, %v2365
      %v2414 = vadd.f32 %v2317, %v2366
      %v2415 = vadd.f32 %v2318, %v2367
      %v2416 = vadd.f32 %v2319, %v2368
      %v2417 = vadd.f32 %v2320, %v2369
      %v2418 = vld [vmem:[%s3] sm:$0x7]
      %v2419 = vperm.slane %v2418, 0
      %v2420 = vmul.f32 %v2419, %v2370
      %v2421 = vmul.f32 %v2419, %v2371
      %v2422 = vmul.f32 %v2419, %v2373
      %v2423 = vmul.f32 %v2419, %v2374
      %v2424 = vmul.f32 %v2419, %v2376
      %v2425 = vmul.f32 %v2419, %v2377
      %v2426 = vmul.f32 %v2419, %v2379
      %v2427 = vmul.f32 %v2419, %v2380
      %v2428 = vmul.f32 %v2419, %v2382
      %v2429 = vmul.f32 %v2419, %v2383
      %v2430 = vmul.f32 %v2419, %v2385
      %v2431 = vmul.f32 %v2419, %v2386
      %v2432 = vmul.f32 %v2419, %v2388
      %v2433 = vmul.f32 %v2419, %v2389
      %v2434 = vmul.f32 %v2419, %v2391
      %v2435 = vmul.f32 %v2419, %v2392
      %v2436 = vmul.f32 %v2419, %v2394
      %v2437 = vmul.f32 %v2419, %v2395
      %v2438 = vmul.f32 %v2419, %v2397
      %v2439 = vmul.f32 %v2419, %v2398
      %v2440 = vmul.f32 %v2419, %v2400
      %v2441 = vmul.f32 %v2419, %v2401
      %v2442 = vmul.f32 %v2419, %v2403
      %v2443 = vmul.f32 %v2419, %v2404
      %v2444 = vmul.f32 %v2419, %v2406
      %v2445 = vmul.f32 %v2419, %v2407
      %v2446 = vmul.f32 %v2419, %v2409
      %v2447 = vmul.f32 %v2419, %v2410
      %v2448 = vmul.f32 %v2419, %v2412
      %v2449 = vmul.f32 %v2419, %v2413
      %v2450 = vmul.f32 %v2419, %v2415
      %v2451 = vmul.f32 %v2419, %v2416
      %v2452 = vperm.slane %v2418, 1
      %v2453 = vmul.f32 %v2452, %v2370
      %v2454 = vmul.f32 %v2452, %v2371
      %v2455 = vmul.f32 %v2452, %v2372
      %v2456 = vmul.f32 %v2452, %v2373
      %v2457 = vmul.f32 %v2452, %v2374
      %v2458 = vmul.f32 %v2452, %v2375
      %v2459 = vmul.f32 %v2452, %v2376
      %v2460 = vmul.f32 %v2452, %v2377
      %v2461 = vmul.f32 %v2452, %v2378
      %v2462 = vmul.f32 %v2452, %v2379
      %v2463 = vmul.f32 %v2452, %v2380
      %v2464 = vmul.f32 %v2452, %v2381
      %v2465 = vmul.f32 %v2452, %v2382
      %v2466 = vmul.f32 %v2452, %v2383
      %v2467 = vmul.f32 %v2452, %v2384
      %v2468 = vmul.f32 %v2452, %v2385
      %v2469 = vmul.f32 %v2452, %v2386
      %v2470 = vmul.f32 %v2452, %v2387
      %v2471 = vmul.f32 %v2452, %v2388
      %v2472 = vmul.f32 %v2452, %v2389
      %v2473 = vmul.f32 %v2452, %v2390
      %v2474 = vmul.f32 %v2452, %v2391
      %v2475 = vmul.f32 %v2452, %v2392
      %v2476 = vmul.f32 %v2452, %v2393
      %v2477 = vmul.f32 %v2452, %v2394
      %v2478 = vmul.f32 %v2452, %v2395
      %v2479 = vmul.f32 %v2452, %v2396
      %v2480 = vmul.f32 %v2452, %v2397
      %v2481 = vmul.f32 %v2452, %v2398
      %v2482 = vmul.f32 %v2452, %v2399
      %v2483 = vmul.f32 %v2452, %v2400
      %v2484 = vmul.f32 %v2452, %v2401
      %v2485 = vmul.f32 %v2452, %v2402
      %v2486 = vmul.f32 %v2452, %v2403
      %v2487 = vmul.f32 %v2452, %v2404
      %v2488 = vmul.f32 %v2452, %v2405
      %v2489 = vmul.f32 %v2452, %v2406
      %v2490 = vmul.f32 %v2452, %v2407
      %v2491 = vmul.f32 %v2452, %v2408
      %v2492 = vmul.f32 %v2452, %v2409
      %v2493 = vmul.f32 %v2452, %v2410
      %v2494 = vmul.f32 %v2452, %v2411
      %v2495 = vmul.f32 %v2452, %v2412
      %v2496 = vmul.f32 %v2452, %v2413
      %v2497 = vmul.f32 %v2452, %v2414
      %v2498 = vmul.f32 %v2452, %v2415
      %v2499 = vmul.f32 %v2452, %v2416
      %v2500 = vmul.f32 %v2452, %v2417
      %vm2549 = vcmask 1046528
      %v2550 = vrot.slane %v2453, 1
      %v2551 = vrot.slane %v2454, 1
      %v2552 = vsel %vm2549, %v2550, %v2551
      %v2553 = vrot.slane %v2455, 1
      %v2554 = vsel %vm2549, %v2551, %v2553
      %v2555 = vrot.slane %v2456, 1
      %v2556 = vrot.slane %v2457, 1
      %v2557 = vsel %vm2549, %v2555, %v2556
      %v2558 = vrot.slane %v2458, 1
      %v2559 = vsel %vm2549, %v2556, %v2558
      %v2560 = vrot.slane %v2459, 1
      %v2561 = vrot.slane %v2460, 1
      %v2562 = vsel %vm2549, %v2560, %v2561
      %v2563 = vrot.slane %v2461, 1
      %v2564 = vsel %vm2549, %v2561, %v2563
      %v2565 = vrot.slane %v2462, 1
      %v2566 = vrot.slane %v2463, 1
      %v2567 = vsel %vm2549, %v2565, %v2566
      %v2568 = vrot.slane %v2464, 1
      %v2569 = vsel %vm2549, %v2566, %v2568
      %v2570 = vrot.slane %v2465, 1
      %v2571 = vrot.slane %v2466, 1
      %v2572 = vsel %vm2549, %v2570, %v2571
      %v2573 = vrot.slane %v2467, 1
      %v2574 = vsel %vm2549, %v2571, %v2573
      %v2575 = vrot.slane %v2468, 1
      %v2576 = vrot.slane %v2469, 1
      %v2577 = vsel %vm2549, %v2575, %v2576
      %v2578 = vrot.slane %v2470, 1
      %v2579 = vsel %vm2549, %v2576, %v2578
      %v2580 = vrot.slane %v2471, 1
      %v2581 = vrot.slane %v2472, 1
      %v2582 = vsel %vm2549, %v2580, %v2581
      %v2583 = vrot.slane %v2473, 1
      %v2584 = vsel %vm2549, %v2581, %v2583
      %v2585 = vrot.slane %v2474, 1
      %v2586 = vrot.slane %v2475, 1
      %v2587 = vsel %vm2549, %v2585, %v2586
      %v2588 = vrot.slane %v2476, 1
      %v2589 = vsel %vm2549, %v2586, %v2588
      %v2590 = vrot.slane %v2477, 1
      %v2591 = vrot.slane %v2478, 1
      %v2592 = vsel %vm2549, %v2590, %v2591
      %v2593 = vrot.slane %v2479, 1
      %v2594 = vsel %vm2549, %v2591, %v2593
      %v2595 = vrot.slane %v2480, 1
      %v2596 = vrot.slane %v2481, 1
      %v2597 = vsel %vm2549, %v2595, %v2596
      %v2598 = vrot.slane %v2482, 1
      %v2599 = vsel %vm2549, %v2596, %v2598
      %v2600 = vrot.slane %v2483, 1
      %v2601 = vrot.slane %v2484, 1
      %v2602 = vsel %vm2549, %v2600, %v2601
      %v2603 = vrot.slane %v2485, 1
      %v2604 = vsel %vm2549, %v2601, %v2603
      %v2605 = vrot.slane %v2486, 1
      %v2606 = vrot.slane %v2487, 1
      %v2607 = vsel %vm2549, %v2605, %v2606
      %v2608 = vrot.slane %v2488, 1
      %v2609 = vsel %vm2549, %v2606, %v2608
      %v2610 = vrot.slane %v2489, 1
      %v2611 = vrot.slane %v2490, 1
      %v2612 = vsel %vm2549, %v2610, %v2611
      %v2613 = vrot.slane %v2491, 1
      %v2614 = vsel %vm2549, %v2611, %v2613
      %v2615 = vrot.slane %v2492, 1
      %v2616 = vrot.slane %v2493, 1
      %v2617 = vsel %vm2549, %v2615, %v2616
      %v2618 = vrot.slane %v2494, 1
      %v2619 = vsel %vm2549, %v2616, %v2618
      %v2620 = vrot.slane %v2495, 1
      %v2621 = vrot.slane %v2496, 1
      %v2622 = vsel %vm2549, %v2620, %v2621
      %v2623 = vrot.slane %v2497, 1
      %v2624 = vsel %vm2549, %v2621, %v2623
      %v2625 = vrot.slane %v2498, 1
      %v2626 = vrot.slane %v2499, 1
      %v2627 = vsel %vm2549, %v2625, %v2626
      %v2628 = vrot.slane %v2500, 1
      %v2629 = vsel %vm2549, %v2626, %v2628
      %v2662 = vadd.f32 %v2420, %v2552
      %v2663 = vadd.f32 %v2421, %v2554
      %v2664 = vadd.f32 %v2422, %v2557
      %v2665 = vadd.f32 %v2423, %v2559
      %v2666 = vadd.f32 %v2424, %v2562
      %v2667 = vadd.f32 %v2425, %v2564
      %v2668 = vadd.f32 %v2426, %v2567
      %v2669 = vadd.f32 %v2427, %v2569
      %v2670 = vadd.f32 %v2428, %v2572
      %v2671 = vadd.f32 %v2429, %v2574
      %v2672 = vadd.f32 %v2430, %v2577
      %v2673 = vadd.f32 %v2431, %v2579
      %v2674 = vadd.f32 %v2432, %v2582
      %v2675 = vadd.f32 %v2433, %v2584
      %v2676 = vadd.f32 %v2434, %v2587
      %v2677 = vadd.f32 %v2435, %v2589
      %v2678 = vadd.f32 %v2436, %v2592
      %v2679 = vadd.f32 %v2437, %v2594
      %v2680 = vadd.f32 %v2438, %v2597
      %v2681 = vadd.f32 %v2439, %v2599
      %v2682 = vadd.f32 %v2440, %v2602
      %v2683 = vadd.f32 %v2441, %v2604
      %v2684 = vadd.f32 %v2442, %v2607
      %v2685 = vadd.f32 %v2443, %v2609
      %v2686 = vadd.f32 %v2444, %v2612
      %v2687 = vadd.f32 %v2445, %v2614
      %v2688 = vadd.f32 %v2446, %v2617
      %v2689 = vadd.f32 %v2447, %v2619
      %v2690 = vadd.f32 %v2448, %v2622
      %v2691 = vadd.f32 %v2449, %v2624
      %v2692 = vadd.f32 %v2450, %v2627
      %v2693 = vadd.f32 %v2451, %v2629
      %v2694 = vperm.slane %v2418, 2
      %v2695 = vmul.f32 %v2694, %v2370
      %v2696 = vmul.f32 %v2694, %v2371
      %v2697 = vmul.f32 %v2694, %v2372
      %v2698 = vmul.f32 %v2694, %v2373
      %v2699 = vmul.f32 %v2694, %v2374
      %v2700 = vmul.f32 %v2694, %v2375
      %v2701 = vmul.f32 %v2694, %v2376
      %v2702 = vmul.f32 %v2694, %v2377
      %v2703 = vmul.f32 %v2694, %v2378
      %v2704 = vmul.f32 %v2694, %v2379
      %v2705 = vmul.f32 %v2694, %v2380
      %v2706 = vmul.f32 %v2694, %v2381
      %v2707 = vmul.f32 %v2694, %v2382
      %v2708 = vmul.f32 %v2694, %v2383
      %v2709 = vmul.f32 %v2694, %v2384
      %v2710 = vmul.f32 %v2694, %v2385
      %v2711 = vmul.f32 %v2694, %v2386
      %v2712 = vmul.f32 %v2694, %v2387
      %v2713 = vmul.f32 %v2694, %v2388
      %v2714 = vmul.f32 %v2694, %v2389
      %v2715 = vmul.f32 %v2694, %v2390
      %v2716 = vmul.f32 %v2694, %v2391
      %v2717 = vmul.f32 %v2694, %v2392
      %v2718 = vmul.f32 %v2694, %v2393
      %v2719 = vmul.f32 %v2694, %v2394
      %v2720 = vmul.f32 %v2694, %v2395
      %v2721 = vmul.f32 %v2694, %v2396
      %v2722 = vmul.f32 %v2694, %v2397
      %v2723 = vmul.f32 %v2694, %v2398
      %v2724 = vmul.f32 %v2694, %v2399
      %v2725 = vmul.f32 %v2694, %v2400
      %v2726 = vmul.f32 %v2694, %v2401
      %v2727 = vmul.f32 %v2694, %v2402
      %v2728 = vmul.f32 %v2694, %v2403
      %v2729 = vmul.f32 %v2694, %v2404
      %v2730 = vmul.f32 %v2694, %v2405
      %v2731 = vmul.f32 %v2694, %v2406
      %v2732 = vmul.f32 %v2694, %v2407
      %v2733 = vmul.f32 %v2694, %v2408
      %v2734 = vmul.f32 %v2694, %v2409
      %v2735 = vmul.f32 %v2694, %v2410
      %v2736 = vmul.f32 %v2694, %v2411
      %v2737 = vmul.f32 %v2694, %v2412
      %v2738 = vmul.f32 %v2694, %v2413
      %v2739 = vmul.f32 %v2694, %v2414
      %v2740 = vmul.f32 %v2694, %v2415
      %v2741 = vmul.f32 %v2694, %v2416
      %v2742 = vmul.f32 %v2694, %v2417
      %vm2791 = vcmask 1045504
      %v2792 = vrot.slane %v2695, 2
      %v2793 = vrot.slane %v2696, 2
      %v2794 = vsel %vm2791, %v2792, %v2793
      %v2795 = vrot.slane %v2697, 2
      %v2796 = vsel %vm2791, %v2793, %v2795
      %v2797 = vrot.slane %v2698, 2
      %v2798 = vrot.slane %v2699, 2
      %v2799 = vsel %vm2791, %v2797, %v2798
      %v2800 = vrot.slane %v2700, 2
      %v2801 = vsel %vm2791, %v2798, %v2800
      %v2802 = vrot.slane %v2701, 2
      %v2803 = vrot.slane %v2702, 2
      %v2804 = vsel %vm2791, %v2802, %v2803
      %v2805 = vrot.slane %v2703, 2
      %v2806 = vsel %vm2791, %v2803, %v2805
      %v2807 = vrot.slane %v2704, 2
      %v2808 = vrot.slane %v2705, 2
      %v2809 = vsel %vm2791, %v2807, %v2808
      %v2810 = vrot.slane %v2706, 2
      %v2811 = vsel %vm2791, %v2808, %v2810
      %v2812 = vrot.slane %v2707, 2
      %v2813 = vrot.slane %v2708, 2
      %v2814 = vsel %vm2791, %v2812, %v2813
      %v2815 = vrot.slane %v2709, 2
      %v2816 = vsel %vm2791, %v2813, %v2815
      %v2817 = vrot.slane %v2710, 2
      %v2818 = vrot.slane %v2711, 2
      %v2819 = vsel %vm2791, %v2817, %v2818
      %v2820 = vrot.slane %v2712, 2
      %v2821 = vsel %vm2791, %v2818, %v2820
      %v2822 = vrot.slane %v2713, 2
      %v2823 = vrot.slane %v2714, 2
      %v2824 = vsel %vm2791, %v2822, %v2823
      %v2825 = vrot.slane %v2715, 2
      %v2826 = vsel %vm2791, %v2823, %v2825
      %v2827 = vrot.slane %v2716, 2
      %v2828 = vrot.slane %v2717, 2
      %v2829 = vsel %vm2791, %v2827, %v2828
      %v2830 = vrot.slane %v2718, 2
      %v2831 = vsel %vm2791, %v2828, %v2830
      %v2832 = vrot.slane %v2719, 2
      %v2833 = vrot.slane %v2720, 2
      %v2834 = vsel %vm2791, %v2832, %v2833
      %v2835 = vrot.slane %v2721, 2
      %v2836 = vsel %vm2791, %v2833, %v2835
      %v2837 = vrot.slane %v2722, 2
      %v2838 = vrot.slane %v2723, 2
      %v2839 = vsel %vm2791, %v2837, %v2838
      %v2840 = vrot.slane %v2724, 2
      %v2841 = vsel %vm2791, %v2838, %v2840
      %v2842 = vrot.slane %v2725, 2
      %v2843 = vrot.slane %v2726, 2
      %v2844 = vsel %vm2791, %v2842, %v2843
      %v2845 = vrot.slane %v2727, 2
      %v2846 = vsel %vm2791, %v2843, %v2845
      %v2847 = vrot.slane %v2728, 2
      %v2848 = vrot.slane %v2729, 2
      %v2849 = vsel %vm2791, %v2847, %v2848
      %v2850 = vrot.slane %v2730, 2
      %v2851 = vsel %vm2791, %v2848, %v2850
      %v2852 = vrot.slane %v2731, 2
      %v2853 = vrot.slane %v2732, 2
      %v2854 = vsel %vm2791, %v2852, %v2853
      %v2855 = vrot.slane %v2733, 2
      %v2856 = vsel %vm2791, %v2853, %v2855
      %v2857 = vrot.slane %v2734, 2
      %v2858 = vrot.slane %v2735, 2
      %v2859 = vsel %vm2791, %v2857, %v2858
      %v2860 = vrot.slane %v2736, 2
      %v2861 = vsel %vm2791, %v2858, %v2860
      %v2862 = vrot.slane %v2737, 2
      %v2863 = vrot.slane %v2738, 2
      %v2864 = vsel %vm2791, %v2862, %v2863
      %v2865 = vrot.slane %v2739, 2
      %v2866 = vsel %vm2791, %v2863, %v2865
      %v2867 = vrot.slane %v2740, 2
      %v2868 = vrot.slane %v2741, 2
      %v2869 = vsel %vm2791, %v2867, %v2868
      %v2870 = vrot.slane %v2742, 2
      %v2871 = vsel %vm2791, %v2868, %v2870
      %v2904 = vadd.f32 %v2662, %v2794
      %v2905 = vadd.f32 %v2663, %v2796
      %v2906 = vadd.f32 %v2664, %v2799
      %v2907 = vadd.f32 %v2665, %v2801
      %v2908 = vadd.f32 %v2666, %v2804
      %v2909 = vadd.f32 %v2667, %v2806
      %v2910 = vadd.f32 %v2668, %v2809
      %v2911 = vadd.f32 %v2669, %v2811
      %v2912 = vadd.f32 %v2670, %v2814
      %v2913 = vadd.f32 %v2671, %v2816
      %v2914 = vadd.f32 %v2672, %v2819
      %v2915 = vadd.f32 %v2673, %v2821
      %v2916 = vadd.f32 %v2674, %v2824
      %v2917 = vadd.f32 %v2675, %v2826
      %v2918 = vadd.f32 %v2676, %v2829
      %v2919 = vadd.f32 %v2677, %v2831
      %v2920 = vadd.f32 %v2678, %v2834
      %v2921 = vadd.f32 %v2679, %v2836
      %v2922 = vadd.f32 %v2680, %v2839
      %v2923 = vadd.f32 %v2681, %v2841
      %v2924 = vadd.f32 %v2682, %v2844
      %v2925 = vadd.f32 %v2683, %v2846
      %v2926 = vadd.f32 %v2684, %v2849
      %v2927 = vadd.f32 %v2685, %v2851
      %v2928 = vadd.f32 %v2686, %v2854
      %v2929 = vadd.f32 %v2687, %v2856
      %v2930 = vadd.f32 %v2688, %v2859
      %v2931 = vadd.f32 %v2689, %v2861
      %v2932 = vadd.f32 %v2690, %v2864
      %v2933 = vadd.f32 %v2691, %v2866
      %v2934 = vadd.f32 %v2692, %v2869
      %v2935 = vadd.f32 %v2693, %v2871
      %v2936 = vld [vmem:[%s4] sm:$0x3]
      %2938 = vset.pattern.permute.xlu0 0
      %2939 = vperm.xlu0 %2938, %v2904
      %v2940 = vpop.permute.xlu0 %2939
      %2943 = vset.pattern.permute.xlu0 0
      %2944 = vperm.xlu0 %2943, %v2905
      %v2945 = vpop.permute.xlu0 %2944
      %2948 = vset.pattern.permute.xlu0 0
      %2949 = vperm.xlu0 %2948, %v2906
      %v2950 = vpop.permute.xlu0 %2949
      %2953 = vset.pattern.permute.xlu0 0
      %2954 = vperm.xlu0 %2953, %v2907
      %v2955 = vpop.permute.xlu0 %2954
      %2958 = vset.pattern.permute.xlu0 0
      %2959 = vperm.xlu0 %2958, %v2908
      %v2960 = vpop.permute.xlu0 %2959
      %2963 = vset.pattern.permute.xlu0 0
      %2964 = vperm.xlu0 %2963, %v2909
      %v2965 = vpop.permute.xlu0 %2964
      %2968 = vset.pattern.permute.xlu0 0
      %2969 = vperm.xlu0 %2968, %v2910
      %v2970 = vpop.permute.xlu0 %2969
      %2973 = vset.pattern.permute.xlu0 0
      %2974 = vperm.xlu0 %2973, %v2911
      %v2975 = vpop.permute.xlu0 %2974
      %2978 = vset.pattern.permute.xlu0 0
      %2979 = vperm.xlu0 %2978, %v2912
      %v2980 = vpop.permute.xlu0 %2979
      %2983 = vset.pattern.permute.xlu0 0
      %2984 = vperm.xlu0 %2983, %v2913
      %v2985 = vpop.permute.xlu0 %2984
      %2988 = vset.pattern.permute.xlu0 0
      %2989 = vperm.xlu0 %2988, %v2914
      %v2990 = vpop.permute.xlu0 %2989
      %2993 = vset.pattern.permute.xlu0 0
      %2994 = vperm.xlu0 %2993, %v2915
      %v2995 = vpop.permute.xlu0 %2994
      %2998 = vset.pattern.permute.xlu0 0
      %2999 = vperm.xlu0 %2998, %v2916
      %v3000 = vpop.permute.xlu0 %2999
      %3003 = vset.pattern.permute.xlu0 0
      %3004 = vperm.xlu0 %3003, %v2917
      %v3005 = vpop.permute.xlu0 %3004
      %3008 = vset.pattern.permute.xlu0 0
      %3009 = vperm.xlu0 %3008, %v2918
      %v3010 = vpop.permute.xlu0 %3009
      %3013 = vset.pattern.permute.xlu0 0
      %3014 = vperm.xlu0 %3013, %v2919
      %v3015 = vpop.permute.xlu0 %3014
      %3018 = vset.pattern.permute.xlu0 0
      %3019 = vperm.xlu0 %3018, %v2920
      %v3020 = vpop.permute.xlu0 %3019
      %3023 = vset.pattern.permute.xlu0 0
      %3024 = vperm.xlu0 %3023, %v2921
      %v3025 = vpop.permute.xlu0 %3024
      %3028 = vset.pattern.permute.xlu0 0
      %3029 = vperm.xlu0 %3028, %v2922
      %v3030 = vpop.permute.xlu0 %3029
      %3033 = vset.pattern.permute.xlu0 0
      %3034 = vperm.xlu0 %3033, %v2923
      %v3035 = vpop.permute.xlu0 %3034
      %3038 = vset.pattern.permute.xlu0 0
      %3039 = vperm.xlu0 %3038, %v2924
      %v3040 = vpop.permute.xlu0 %3039
      %3043 = vset.pattern.permute.xlu0 0
      %3044 = vperm.xlu0 %3043, %v2925
      %v3045 = vpop.permute.xlu0 %3044
      %3048 = vset.pattern.permute.xlu0 0
      %3049 = vperm.xlu0 %3048, %v2926
      %v3050 = vpop.permute.xlu0 %3049
      %3053 = vset.pattern.permute.xlu0 0
      %3054 = vperm.xlu0 %3053, %v2927
      %v3055 = vpop.permute.xlu0 %3054
      %3058 = vset.pattern.permute.xlu0 0
      %3059 = vperm.xlu0 %3058, %v2928
      %v3060 = vpop.permute.xlu0 %3059
      %3063 = vset.pattern.permute.xlu0 0
      %3064 = vperm.xlu0 %3063, %v2929
      %v3065 = vpop.permute.xlu0 %3064
      %3068 = vset.pattern.permute.xlu0 0
      %3069 = vperm.xlu0 %3068, %v2930
      %v3070 = vpop.permute.xlu0 %3069
      %3073 = vset.pattern.permute.xlu0 0
      %3074 = vperm.xlu0 %3073, %v2931
      %v3075 = vpop.permute.xlu0 %3074
      %3078 = vset.pattern.permute.xlu0 0
      %3079 = vperm.xlu0 %3078, %v2932
      %v3080 = vpop.permute.xlu0 %3079
      %3083 = vset.pattern.permute.xlu0 0
      %3084 = vperm.xlu0 %3083, %v2933
      %v3085 = vpop.permute.xlu0 %3084
      %3088 = vset.pattern.permute.xlu0 0
      %3089 = vperm.xlu0 %3088, %v2934
      %v3090 = vpop.permute.xlu0 %3089
      %3093 = vset.pattern.permute.xlu0 0
      %3094 = vperm.xlu0 %3093, %v2935
      %v3095 = vpop.permute.xlu0 %3094
      %v3097 = vperm.slane %v2936, 0
      %v3098 = vmul.f32 %v2940, %v3097
      %v3099 = vmul.f32 %v2945, %v3097
      %v3100 = vmul.f32 %v2950, %v3097
      %v3101 = vmul.f32 %v2955, %v3097
      %v3102 = vmul.f32 %v2960, %v3097
      %v3103 = vmul.f32 %v2965, %v3097
      %v3104 = vmul.f32 %v2970, %v3097
      %v3105 = vmul.f32 %v2975, %v3097
      %v3106 = vmul.f32 %v2980, %v3097
      %v3107 = vmul.f32 %v2985, %v3097
      %v3108 = vmul.f32 %v2990, %v3097
      %v3109 = vmul.f32 %v2995, %v3097
      %v3110 = vmul.f32 %v3000, %v3097
      %v3111 = vmul.f32 %v3005, %v3097
      %v3112 = vmul.f32 %v3010, %v3097
      %v3113 = vmul.f32 %v3015, %v3097
      %v3114 = vmul.f32 %v3020, %v3097
      %v3115 = vmul.f32 %v3025, %v3097
      %v3116 = vmul.f32 %v3030, %v3097
      %v3117 = vmul.f32 %v3035, %v3097
      %v3118 = vmul.f32 %v3040, %v3097
      %v3119 = vmul.f32 %v3045, %v3097
      %v3120 = vmul.f32 %v3050, %v3097
      %v3121 = vmul.f32 %v3055, %v3097
      %v3122 = vmul.f32 %v3060, %v3097
      %v3123 = vmul.f32 %v3065, %v3097
      %v3124 = vmul.f32 %v3070, %v3097
      %v3125 = vmul.f32 %v3075, %v3097
      %v3126 = vmul.f32 %v3080, %v3097
      %v3127 = vmul.f32 %v3085, %v3097
      %v3128 = vmul.f32 %v3090, %v3097
      %v3129 = vmul.f32 %v3095, %v3097
      %3130 = vset.pattern.permute.xlu0 1
      %3131 = vperm.xlu0 %3130, %v2904
      %v3132 = vpop.permute.xlu0 %3131
      %3134 = vset.pattern.permute.xlu0 1
      %3135 = vperm.xlu0 %3134, %v2905
      %v3136 = vpop.permute.xlu0 %3135
      %3138 = vset.pattern.permute.xlu0 1
      %3139 = vperm.xlu0 %3138, %v2906
      %v3140 = vpop.permute.xlu0 %3139
      %3142 = vset.pattern.permute.xlu0 1
      %3143 = vperm.xlu0 %3142, %v2907
      %v3144 = vpop.permute.xlu0 %3143
      %3146 = vset.pattern.permute.xlu0 1
      %3147 = vperm.xlu0 %3146, %v2908
      %v3148 = vpop.permute.xlu0 %3147
      %3150 = vset.pattern.permute.xlu0 1
      %3151 = vperm.xlu0 %3150, %v2909
      %v3152 = vpop.permute.xlu0 %3151
      %3154 = vset.pattern.permute.xlu0 1
      %3155 = vperm.xlu0 %3154, %v2910
      %v3156 = vpop.permute.xlu0 %3155
      %3158 = vset.pattern.permute.xlu0 1
      %3159 = vperm.xlu0 %3158, %v2911
      %v3160 = vpop.permute.xlu0 %3159
      %3162 = vset.pattern.permute.xlu0 1
      %3163 = vperm.xlu0 %3162, %v2912
      %v3164 = vpop.permute.xlu0 %3163
      %3166 = vset.pattern.permute.xlu0 1
      %3167 = vperm.xlu0 %3166, %v2913
      %v3168 = vpop.permute.xlu0 %3167
      %3170 = vset.pattern.permute.xlu0 1
      %3171 = vperm.xlu0 %3170, %v2914
      %v3172 = vpop.permute.xlu0 %3171
      %3174 = vset.pattern.permute.xlu0 1
      %3175 = vperm.xlu0 %3174, %v2915
      %v3176 = vpop.permute.xlu0 %3175
      %3178 = vset.pattern.permute.xlu0 1
      %3179 = vperm.xlu0 %3178, %v2916
      %v3180 = vpop.permute.xlu0 %3179
      %3182 = vset.pattern.permute.xlu0 1
      %3183 = vperm.xlu0 %3182, %v2917
      %v3184 = vpop.permute.xlu0 %3183
      %3186 = vset.pattern.permute.xlu0 1
      %3187 = vperm.xlu0 %3186, %v2918
      %v3188 = vpop.permute.xlu0 %3187
      %3190 = vset.pattern.permute.xlu0 1
      %3191 = vperm.xlu0 %3190, %v2919
      %v3192 = vpop.permute.xlu0 %3191
      %3194 = vset.pattern.permute.xlu0 1
      %3195 = vperm.xlu0 %3194, %v2920
      %v3196 = vpop.permute.xlu0 %3195
      %3198 = vset.pattern.permute.xlu0 1
      %3199 = vperm.xlu0 %3198, %v2921
      %v3200 = vpop.permute.xlu0 %3199
      %3202 = vset.pattern.permute.xlu0 1
      %3203 = vperm.xlu0 %3202, %v2922
      %v3204 = vpop.permute.xlu0 %3203
      %3206 = vset.pattern.permute.xlu0 1
      %3207 = vperm.xlu0 %3206, %v2923
      %v3208 = vpop.permute.xlu0 %3207
      %3210 = vset.pattern.permute.xlu0 1
      %3211 = vperm.xlu0 %3210, %v2924
      %v3212 = vpop.permute.xlu0 %3211
      %3214 = vset.pattern.permute.xlu0 1
      %3215 = vperm.xlu0 %3214, %v2925
      %v3216 = vpop.permute.xlu0 %3215
      %3218 = vset.pattern.permute.xlu0 1
      %3219 = vperm.xlu0 %3218, %v2926
      %v3220 = vpop.permute.xlu0 %3219
      %3222 = vset.pattern.permute.xlu0 1
      %3223 = vperm.xlu0 %3222, %v2927
      %v3224 = vpop.permute.xlu0 %3223
      %3226 = vset.pattern.permute.xlu0 1
      %3227 = vperm.xlu0 %3226, %v2928
      %v3228 = vpop.permute.xlu0 %3227
      %3230 = vset.pattern.permute.xlu0 1
      %3231 = vperm.xlu0 %3230, %v2929
      %v3232 = vpop.permute.xlu0 %3231
      %3234 = vset.pattern.permute.xlu0 1
      %3235 = vperm.xlu0 %3234, %v2930
      %v3236 = vpop.permute.xlu0 %3235
      %3238 = vset.pattern.permute.xlu0 1
      %3239 = vperm.xlu0 %3238, %v2931
      %v3240 = vpop.permute.xlu0 %3239
      %3242 = vset.pattern.permute.xlu0 1
      %3243 = vperm.xlu0 %3242, %v2932
      %v3244 = vpop.permute.xlu0 %3243
      %3246 = vset.pattern.permute.xlu0 1
      %3247 = vperm.xlu0 %3246, %v2933
      %v3248 = vpop.permute.xlu0 %3247
      %3250 = vset.pattern.permute.xlu0 1
      %3251 = vperm.xlu0 %3250, %v2934
      %v3252 = vpop.permute.xlu0 %3251
      %3254 = vset.pattern.permute.xlu0 1
      %3255 = vperm.xlu0 %3254, %v2935
      %v3256 = vpop.permute.xlu0 %3255
      %v3258 = vperm.slane %v2936, 1
      %v3259 = vmul.f32 %v3132, %v3258
      %v3260 = vmul.f32 %v3136, %v3258
      %v3261 = vmul.f32 %v3140, %v3258
      %v3262 = vmul.f32 %v3144, %v3258
      %v3263 = vmul.f32 %v3148, %v3258
      %v3264 = vmul.f32 %v3152, %v3258
      %v3265 = vmul.f32 %v3156, %v3258
      %v3266 = vmul.f32 %v3160, %v3258
      %v3267 = vmul.f32 %v3164, %v3258
      %v3268 = vmul.f32 %v3168, %v3258
      %v3269 = vmul.f32 %v3172, %v3258
      %v3270 = vmul.f32 %v3176, %v3258
      %v3271 = vmul.f32 %v3180, %v3258
      %v3272 = vmul.f32 %v3184, %v3258
      %v3273 = vmul.f32 %v3188, %v3258
      %v3274 = vmul.f32 %v3192, %v3258
      %v3275 = vmul.f32 %v3196, %v3258
      %v3276 = vmul.f32 %v3200, %v3258
      %v3277 = vmul.f32 %v3204, %v3258
      %v3278 = vmul.f32 %v3208, %v3258
      %v3279 = vmul.f32 %v3212, %v3258
      %v3280 = vmul.f32 %v3216, %v3258
      %v3281 = vmul.f32 %v3220, %v3258
      %v3282 = vmul.f32 %v3224, %v3258
      %v3283 = vmul.f32 %v3228, %v3258
      %v3284 = vmul.f32 %v3232, %v3258
      %v3285 = vmul.f32 %v3236, %v3258
      %v3286 = vmul.f32 %v3240, %v3258
      %v3287 = vmul.f32 %v3244, %v3258
      %v3288 = vmul.f32 %v3248, %v3258
      %v3289 = vmul.f32 %v3252, %v3258
      %v3290 = vmul.f32 %v3256, %v3258
      %v3291 = vadd.f32 %v3098, %v3259
      %v3292 = vadd.f32 %v3099, %v3260
      %v3293 = vadd.f32 %v3100, %v3261
      %v3294 = vadd.f32 %v3101, %v3262
      %v3295 = vadd.f32 %v3102, %v3263
      %v3296 = vadd.f32 %v3103, %v3264
      %v3297 = vadd.f32 %v3104, %v3265
      %v3298 = vadd.f32 %v3105, %v3266
      %v3299 = vadd.f32 %v3106, %v3267
      %v3300 = vadd.f32 %v3107, %v3268
      %v3301 = vadd.f32 %v3108, %v3269
      %v3302 = vadd.f32 %v3109, %v3270
      %v3303 = vadd.f32 %v3110, %v3271
      %v3304 = vadd.f32 %v3111, %v3272
      %v3305 = vadd.f32 %v3112, %v3273
      %v3306 = vadd.f32 %v3113, %v3274
      %v3307 = vadd.f32 %v3114, %v3275
      %v3308 = vadd.f32 %v3115, %v3276
      %v3309 = vadd.f32 %v3116, %v3277
      %v3310 = vadd.f32 %v3117, %v3278
      %v3311 = vadd.f32 %v3118, %v3279
      %v3312 = vadd.f32 %v3119, %v3280
      %v3313 = vadd.f32 %v3120, %v3281
      %v3314 = vadd.f32 %v3121, %v3282
      %v3315 = vadd.f32 %v3122, %v3283
      %v3316 = vadd.f32 %v3123, %v3284
      %v3317 = vadd.f32 %v3124, %v3285
      %v3318 = vadd.f32 %v3125, %v3286
      %v3319 = vadd.f32 %v3126, %v3287
      %v3320 = vadd.f32 %v3127, %v3288
      %v3321 = vadd.f32 %v3128, %v3289
      %v3322 = vadd.f32 %v3129, %v3290
      %vm3323 = vcmask 64512
      %3324 = vst.msk [vmem:[%s343] sm:$0xff] %vm3323, %v3291
      %3325 = vst.msk [vmem:[%s343 + $0x8] sm:$0xff] %vm3323, %v3292
      %3326 = vst.msk [vmem:[%s343 + $0x10] sm:$0xff] %vm3323, %v3293
      %3327 = vst.msk [vmem:[%s343 + $0x18] sm:$0xff] %vm3323, %v3294
      %3328 = vst.msk [vmem:[%s343 + $0x20] sm:$0xff] %vm3323, %v3295
      %3329 = vst.msk [vmem:[%s343 + $0x28] sm:$0xff] %vm3323, %v3296
      %3330 = vst.msk [vmem:[%s343 + $0x30] sm:$0xff] %vm3323, %v3297
      %3331 = vst.msk [vmem:[%s343 + $0x38] sm:$0xff] %vm3323, %v3298
      %3332 = vst.msk [vmem:[%s343 + $0x40] sm:$0xff] %vm3323, %v3299
      %3333 = vst.msk [vmem:[%s343 + $0x48] sm:$0xff] %vm3323, %v3300
      %3334 = vst.msk [vmem:[%s343 + $0x50] sm:$0xff] %vm3323, %v3301
      %3335 = vst.msk [vmem:[%s343 + $0x58] sm:$0xff] %vm3323, %v3302
      %3336 = vst.msk [vmem:[%s343 + $0x60] sm:$0xff] %vm3323, %v3303
      %3337 = vst.msk [vmem:[%s343 + $0x68] sm:$0xff] %vm3323, %v3304
      %3338 = vst.msk [vmem:[%s343 + $0x70] sm:$0xff] %vm3323, %v3305
      %3339 = vst.msk [vmem:[%s343 + $0x78] sm:$0xff] %vm3323, %v3306
      %3340 = vst.msk [vmem:[%s343 + $0x80] sm:$0xff] %vm3323, %v3307
      %3341 = vst.msk [vmem:[%s343 + $0x88] sm:$0xff] %vm3323, %v3308
      %3342 = vst.msk [vmem:[%s343 + $0x90] sm:$0xff] %vm3323, %v3309
      %3343 = vst.msk [vmem:[%s343 + $0x98] sm:$0xff] %vm3323, %v3310
      %3344 = vst.msk [vmem:[%s343 + $0xa0] sm:$0xff] %vm3323, %v3311
      %3345 = vst.msk [vmem:[%s343 + $0xa8] sm:$0xff] %vm3323, %v3312
      %3346 = vst.msk [vmem:[%s343 + $0xb0] sm:$0xff] %vm3323, %v3313
      %3347 = vst.msk [vmem:[%s343 + $0xb8] sm:$0xff] %vm3323, %v3314
      %3348 = vst.msk [vmem:[%s343 + $0xc0] sm:$0xff] %vm3323, %v3315
      %3349 = vst.msk [vmem:[%s343 + $0xc8] sm:$0xff] %vm3323, %v3316
      %3350 = vst.msk [vmem:[%s343 + $0xd0] sm:$0xff] %vm3323, %v3317
      %3351 = vst.msk [vmem:[%s343 + $0xd8] sm:$0xff] %vm3323, %v3318
      %3352 = vst.msk [vmem:[%s343 + $0xe0] sm:$0xff] %vm3323, %v3319
      %3353 = vst.msk [vmem:[%s343 + $0xe8] sm:$0xff] %vm3323, %v3320
      %3354 = vst.msk [vmem:[%s343 + $0xf0] sm:$0xff] %vm3323, %v3321
      %3355 = vst.msk [vmem:[%s343 + $0xf8] sm:$0xff] %vm3323, %v3322
      %v3356 = vsel %vm3323, %v3291, 0.0
      %v3357 = vsel %vm3323, %v3292, 0.0
      %v3358 = vadd.f32 %v3356, %v3357
      %v3359 = vsel %vm3323, %v3293, 0.0
      %v3360 = vadd.f32 %v3358, %v3359
      %v3361 = vsel %vm3323, %v3294, 0.0
      %v3362 = vadd.f32 %v3360, %v3361
      %v3363 = vsel %vm3323, %v3295, 0.0
      %v3364 = vadd.f32 %v3362, %v3363
      %v3365 = vsel %vm3323, %v3296, 0.0
      %v3366 = vadd.f32 %v3364, %v3365
      %v3367 = vsel %vm3323, %v3297, 0.0
      %v3368 = vadd.f32 %v3366, %v3367
      %v3369 = vsel %vm3323, %v3298, 0.0
      %v3370 = vadd.f32 %v3368, %v3369
      %v3371 = vsel %vm3323, %v3299, 0.0
      %v3372 = vadd.f32 %v3370, %v3371
      %v3373 = vsel %vm3323, %v3300, 0.0
      %v3374 = vadd.f32 %v3372, %v3373
      %v3375 = vsel %vm3323, %v3301, 0.0
      %v3376 = vadd.f32 %v3374, %v3375
      %v3377 = vsel %vm3323, %v3302, 0.0
      %v3378 = vadd.f32 %v3376, %v3377
      %v3379 = vsel %vm3323, %v3303, 0.0
      %v3380 = vadd.f32 %v3378, %v3379
      %v3381 = vsel %vm3323, %v3304, 0.0
      %v3382 = vadd.f32 %v3380, %v3381
      %v3383 = vsel %vm3323, %v3305, 0.0
      %v3384 = vadd.f32 %v3382, %v3383
      %v3385 = vsel %vm3323, %v3306, 0.0
      %v3386 = vadd.f32 %v3384, %v3385
      %v3387 = vsel %vm3323, %v3307, 0.0
      %v3388 = vadd.f32 %v3386, %v3387
      %v3389 = vsel %vm3323, %v3308, 0.0
      %v3390 = vadd.f32 %v3388, %v3389
      %v3391 = vsel %vm3323, %v3309, 0.0
      %v3392 = vadd.f32 %v3390, %v3391
      %v3393 = vsel %vm3323, %v3310, 0.0
      %v3394 = vadd.f32 %v3392, %v3393
      %v3395 = vsel %vm3323, %v3311, 0.0
      %v3396 = vadd.f32 %v3394, %v3395
      %v3397 = vsel %vm3323, %v3312, 0.0
      %v3398 = vadd.f32 %v3396, %v3397
      %v3399 = vsel %vm3323, %v3313, 0.0
      %v3400 = vadd.f32 %v3398, %v3399
      %v3401 = vsel %vm3323, %v3314, 0.0
      %v3402 = vadd.f32 %v3400, %v3401
      %v3403 = vsel %vm3323, %v3315, 0.0
      %v3404 = vadd.f32 %v3402, %v3403
      %v3405 = vsel %vm3323, %v3316, 0.0
      %v3406 = vadd.f32 %v3404, %v3405
      %v3407 = vsel %vm3323, %v3317, 0.0
      %v3408 = vadd.f32 %v3406, %v3407
      %v3409 = vsel %vm3323, %v3318, 0.0
      %v3410 = vadd.f32 %v3408, %v3409
      %v3411 = vsel %vm3323, %v3319, 0.0
      %v3412 = vadd.f32 %v3410, %v3411
      %v3413 = vsel %vm3323, %v3320, 0.0
      %v3414 = vadd.f32 %v3412, %v3413
      %v3415 = vsel %vm3323, %v3321, 0.0
      %v3416 = vadd.f32 %v3414, %v3415
      %v3417 = vsel %vm3323, %v3322, 0.0
      %v3418 = vadd.f32 %v3416, %v3417
      %v3419 = vrot.slane %v3418, 4
      %v3420 = vadd.f32 %v3418, %v3419
      %v3421 = vrot.slane %v3420, 2
      %v3422 = vadd.f32 %v3420, %v3421
      %v3423 = vrot.slane %v3422, 1
      %v3424 = vadd.f32 %v3422, %v3423
      %vm3425 = vcmask 57344
      %3426 = vst.msk [vmem:[%s346] sm:$0x1] %vm3425, %v3424
      %v3427 = vmul.f32 %v3291, %v3291
      %v3428 = vmul.f32 %v3292, %v3292
      %v3429 = vmul.f32 %v3293, %v3293
      %v3430 = vmul.f32 %v3294, %v3294
      %v3431 = vmul.f32 %v3295, %v3295
      %v3432 = vmul.f32 %v3296, %v3296
      %v3433 = vmul.f32 %v3297, %v3297
      %v3434 = vmul.f32 %v3298, %v3298
      %v3435 = vmul.f32 %v3299, %v3299
      %v3436 = vmul.f32 %v3300, %v3300
      %v3437 = vmul.f32 %v3301, %v3301
      %v3438 = vmul.f32 %v3302, %v3302
      %v3439 = vmul.f32 %v3303, %v3303
      %v3440 = vmul.f32 %v3304, %v3304
      %v3441 = vmul.f32 %v3305, %v3305
      %v3442 = vmul.f32 %v3306, %v3306
      %v3443 = vmul.f32 %v3307, %v3307
      %v3444 = vmul.f32 %v3308, %v3308
      %v3445 = vmul.f32 %v3309, %v3309
      %v3446 = vmul.f32 %v3310, %v3310
      %v3447 = vmul.f32 %v3311, %v3311
      %v3448 = vmul.f32 %v3312, %v3312
      %v3449 = vmul.f32 %v3313, %v3313
      %v3450 = vmul.f32 %v3314, %v3314
      %v3451 = vmul.f32 %v3315, %v3315
      %v3452 = vmul.f32 %v3316, %v3316
      %v3453 = vmul.f32 %v3317, %v3317
      %v3454 = vmul.f32 %v3318, %v3318
      %v3455 = vmul.f32 %v3319, %v3319
      %v3456 = vmul.f32 %v3320, %v3320
      %v3457 = vmul.f32 %v3321, %v3321
      %v3458 = vmul.f32 %v3322, %v3322
      %v3459 = vsel %vm3323, %v3427, 0.0
      %v3460 = vsel %vm3323, %v3428, 0.0
      %v3461 = vadd.f32 %v3459, %v3460
      %v3462 = vsel %vm3323, %v3429, 0.0
      %v3463 = vadd.f32 %v3461, %v3462
      %v3464 = vsel %vm3323, %v3430, 0.0
      %v3465 = vadd.f32 %v3463, %v3464
      %v3466 = vsel %vm3323, %v3431, 0.0
      %v3467 = vadd.f32 %v3465, %v3466
      %v3468 = vsel %vm3323, %v3432, 0.0
      %v3469 = vadd.f32 %v3467, %v3468
      %v3470 = vsel %vm3323, %v3433, 0.0
      %v3471 = vadd.f32 %v3469, %v3470
      %v3472 = vsel %vm3323, %v3434, 0.0
      %v3473 = vadd.f32 %v3471, %v3472
      %v3474 = vsel %vm3323, %v3435, 0.0
      %v3475 = vadd.f32 %v3473, %v3474
      %v3476 = vsel %vm3323, %v3436, 0.0
      %v3477 = vadd.f32 %v3475, %v3476
      %v3478 = vsel %vm3323, %v3437, 0.0
      %v3479 = vadd.f32 %v3477, %v3478
      %v3480 = vsel %vm3323, %v3438, 0.0
      %v3481 = vadd.f32 %v3479, %v3480
      %v3482 = vsel %vm3323, %v3439, 0.0
      %v3483 = vadd.f32 %v3481, %v3482
      %v3484 = vsel %vm3323, %v3440, 0.0
      %v3485 = vadd.f32 %v3483, %v3484
      %v3486 = vsel %vm3323, %v3441, 0.0
      %v3487 = vadd.f32 %v3485, %v3486
      %v3488 = vsel %vm3323, %v3442, 0.0
      %v3489 = vadd.f32 %v3487, %v3488
      %v3490 = vsel %vm3323, %v3443, 0.0
      %v3491 = vadd.f32 %v3489, %v3490
      %v3492 = vsel %vm3323, %v3444, 0.0
      %v3493 = vadd.f32 %v3491, %v3492
      %v3494 = vsel %vm3323, %v3445, 0.0
      %v3495 = vadd.f32 %v3493, %v3494
      %v3496 = vsel %vm3323, %v3446, 0.0
      %v3497 = vadd.f32 %v3495, %v3496
      %v3498 = vsel %vm3323, %v3447, 0.0
      %v3499 = vadd.f32 %v3497, %v3498
      %v3500 = vsel %vm3323, %v3448, 0.0
      %v3501 = vadd.f32 %v3499, %v3500
      %v3502 = vsel %vm3323, %v3449, 0.0
      %v3503 = vadd.f32 %v3501, %v3502
      %v3504 = vsel %vm3323, %v3450, 0.0
      %v3505 = vadd.f32 %v3503, %v3504
      %v3506 = vsel %vm3323, %v3451, 0.0
      %v3507 = vadd.f32 %v3505, %v3506
      %v3508 = vsel %vm3323, %v3452, 0.0
      %v3509 = vadd.f32 %v3507, %v3508
      %v3510 = vsel %vm3323, %v3453, 0.0
      %v3511 = vadd.f32 %v3509, %v3510
      %v3512 = vsel %vm3323, %v3454, 0.0
      %v3513 = vadd.f32 %v3511, %v3512
      %v3514 = vsel %vm3323, %v3455, 0.0
      %v3515 = vadd.f32 %v3513, %v3514
      %v3516 = vsel %vm3323, %v3456, 0.0
      %v3517 = vadd.f32 %v3515, %v3516
      %v3518 = vsel %vm3323, %v3457, 0.0
      %v3519 = vadd.f32 %v3517, %v3518
      %v3520 = vsel %vm3323, %v3458, 0.0
      %v3521 = vadd.f32 %v3519, %v3520
      %v3522 = vrot.slane %v3521, 4
      %v3523 = vadd.f32 %v3521, %v3522
      %v3524 = vrot.slane %v3523, 2
      %v3525 = vadd.f32 %v3523, %v3524
      %v3526 = vrot.slane %v3525, 1
      %v3527 = vadd.f32 %v3525, %v3526
      %3528 = vst.msk [vmem:[%s349] sm:$0x1] %vm3425, %v3527
      %p3529 = scmp.lt.s32.totalorder %s21, 1
      %s3530 = scalar_select %p3529, %s21, 1
      %s3531 = smul.addr %s3530, 32
      %s3532 = smul.addr %s3531, 8
      %s3533 = scalar_lea.vmem %s7, %s3532
      %p3534 = scmp.lt.s32.totalorder %s21, 1
      %s3535 = scalar_select %p3534, %s21, 1
      %s3536 = scalar_lea.vmem %s8, %s3535
      %p3537 = scmp.lt.s32.totalorder %s21, 1
      %s3538 = scalar_select %p3537, %s21, 1
      %s3539 = scalar_lea.vmem %s9, %s3538
      // Predicated region
      $region49: #{double_conv_forward.4} parent=47 // pred_check
        %p3540 = pneg %p191
      $region50: #{double_conv_forward.4} parent=47 // pred_check_branch
        %3542 = sbr.rel (%p3540) target = $region52
      $region51: #{double_conv_forward.4} parent=47 // pred_region
        _
      $region52: #{double_conv_forward.4} parent=47 // pred_fallthru
        _
      // Predicated region
      $region53: #{double_conv_forward.4} parent=47 // pred_check
        %p3543 = pneg %p217
      $region54: #{double_conv_forward.4} parent=47 // pred_check_branch
        %3545 = sbr.rel (%p3543) target = $region56
      $region55: #{double_conv_forward.4} parent=47 // pred_region
        _
      $region56: #{double_conv_forward.4} parent=47 // pred_fallthru
        _
      // Predicated region
      $region57: #{double_conv_forward.4} parent=47 // pred_check
        %p3546 = pneg %p243
      $region58: #{double_conv_forward.4} parent=47 // pred_check_branch
        %3548 = sbr.rel (%p3546) target = $region60
      $region59: #{double_conv_forward.4} parent=47 // pred_region
        _
      $region60: #{double_conv_forward.4} parent=47 // pred_fallthru
        _
    $region48: #{double_conv_forward.4} parent=5 // pred_fallthru
      _
    %p3549 = scmp.le.s32.totalorder 2, %s16
    // Predicated region
    $region61: #{double_conv_forward.4} parent=5 // pred_check
      %p3550 = pneg %p3549
    $region62: #{double_conv_forward.4} parent=5 // pred_check_branch
      %3552 = sbr.rel (%p3550) target = $region64
    $region63: #{double_conv_forward.4} parent=5 // pred_region
      %s3553 = ssub.s32 %s16, 2
      // Predicated region
      $region65: #{double_conv_forward.4} parent=63 // pred_check
        %p3554 = pneg %p197
      $region66: #{double_conv_forward.4} parent=63 // pred_check_branch
        %3556 = sbr.rel (%p3554) target = $region68
      $region67: #{double_conv_forward.4} parent=63 // pred_region
        %p3557 = scmp.lt.s32.totalorder %s22, 1
        %s3558 = scalar_select %p3557, %s22, 1
        %s3559 = smul.addr %s3558, 32
        %s3560 = smul.addr %s3559, 8
        %s3561 = scalar_lea.vmem %s7, %s3560
      $region68: #{double_conv_forward.4} parent=63 // pred_fallthru
        _
      // Predicated region
      $region69: #{double_conv_forward.4} parent=63 // pred_check
        %p3562 = pneg %p223
      $region70: #{double_conv_forward.4} parent=63 // pred_check_branch
        %3564 = sbr.rel (%p3562) target = $region72
      $region71: #{double_conv_forward.4} parent=63 // pred_region
        %p3565 = scmp.lt.s32.totalorder %s22, 1
        %s3566 = scalar_select %p3565, %s22, 1
        %s3567 = scalar_lea.vmem %s8, %s3566
      $region72: #{double_conv_forward.4} parent=63 // pred_fallthru
        _
      // Predicated region
      $region73: #{double_conv_forward.4} parent=63 // pred_check
        %p3568 = pneg %p249
      $region74: #{double_conv_forward.4} parent=63 // pred_check_branch
        %3570 = sbr.rel (%p3568) target = $region76
      $region75: #{double_conv_forward.4} parent=63 // pred_region
        %p3571 = scmp.lt.s32.totalorder %s22, 1
        %s3572 = scalar_select %p3571, %s22, 1
        %s3573 = scalar_lea.vmem %s9, %s3572
      $region76: #{double_conv_forward.4} parent=63 // pred_fallthru
        _
    $region64: #{double_conv_forward.4} parent=5 // pred_fallthru
      _
  $region6: #{double_conv_forward.4} parent=0 // loop_footer
    %s20 = sadd.s32 1, %s16
  $region7: #{double_conv_forward.4} parent=0 // loop_footer_branch
    %15 = sbr.rel target = $region3
  $region8: #{double_conv_forward.4} parent=0 // loop_exit
    _

</llo_original>
